<compile_context>
chip_gen: v5e
topology: v5e:2x2
jax: 0.10.0
libtpu: 0.0.40
codegen_flags: <defaults>
</compile_context>

<pallas_src>
import functools

import jax
import jax.numpy as jnp
from jax.experimental import pallas as pl
from jax.experimental.pallas import tpu as pltpu


# Column origin of the valid image interior inside the padded-width (wp) slabs, one per stage.
# Each 3x3 conv in the flat-window scheme shifts the interior origin by -1, so all four are
# derived from a single left pad (_L_U) and stay mutually consistent.
_L_U, _L_A, _L_H, _L_Y = 11, 10, 9, 8
# Row origin of each slab: slab row r of stage X corresponds to output-image row base + r - _R_X.
_R_U, _R_A, _R_H = 3, 2, 1


def _taps(x, out_rows, wp, base_off=0):
    """The 9 im2col taps of a 3x3 conv over a flattened (rows*wp, cin) slab.

    Output flat position p = y*wp + x reads input positions base_off + (y+dy)*wp + (x+dx).
    The only positions whose window wraps across a row boundary are halo columns that are
    zero-masked / cropped downstream, so the wrap never contaminates kept values.
    """
    npos = out_rows * wp
    return [x[base_off + dy * wp + dx: base_off + dy * wp + dx + npos, :]
            for dy in range(3) for dx in range(3)]


def _conv3x3_flat(x, w, out_rows, wp, base_off=0):
    """3x3 conv as one wide-K im2col matmul (bf16 operands, f32 MXU accumulation)."""
    windows = jnp.concatenate(_taps(x, out_rows, wp, base_off), axis=-1)   # (npos, 9*cin)
    return jnp.dot(windows, w, preferred_element_type=jnp.float32)


def _zero_outside_rows(x_flat, lo_row, hi_row, wp):
    """Zero flat positions whose slab row is outside [lo_row, hi_row) (in-kernel iota mask)."""
    pos = jax.lax.broadcasted_iota(jnp.int32, x_flat.shape, 0)
    keep = (pos >= lo_row * wp) & (pos < hi_row * wp)
    return jnp.where(keep, x_flat, 0.0)


def _zero_outside_cols(x3, lo, hi):
    """Zero slab columns outside [lo, hi) on a (rows, wp, c) view (in-kernel iota mask)."""
    col = jax.lax.broadcasted_iota(jnp.int32, x3.shape, 1)
    return jnp.where((col >= lo) & (col < hi), x3, 0.0)


def upsample_block_kernel(u_ref, skip_ref, wu_ref, bu_ref, w1_ref, b1_ref, w2_ref, b2_ref,
                          out_ref, *, th, out_h, out_w, wp):
    c = out_ref.shape[-1]
    base = pl.program_id(1) * th            # first output-image row of this H tile
    rows_a = th + 6                         # a / skip slabs: 2-row halo each side + spare row
    rows_h = th + 3                         # h slab: 1-row halo each side + spare row

    # ---- nearest 2x upsample, row direction (width was pre-replicated in the wrapper) ----
    u_lo = u_ref[...]                                               # (th//2 + 5, wp, 2c) bf16
    r_lo = u_lo.shape[0]
    u_up = jnp.broadcast_to(u_lo[:, None], (r_lo, 2) + u_lo.shape[1:])
    u_flat = u_up.reshape(2 * r_lo * wp, 2 * c)                     # row j <-> image row base-4+j

    # ---- self.up conv: 3x3 + bias, no activation (base_off=wp skips image row base-4) ----
    a = _conv3x3_flat(u_flat, wu_ref[...], rows_a, wp, base_off=wp) + bu_ref[...]
    # zero the halo so `a` behaves exactly like zero-padded input for conv1
    a = _zero_outside_rows(a, _R_A - base, out_h + _R_A - base, wp)
    a3 = _zero_outside_cols(a.reshape(rows_a, wp, c), _L_A, _L_A + out_w)
    a_flat = a3.astype(jnp.bfloat16).reshape(rows_a * wp, c)

    # ---- BasicBlock.conv1: conv(cat([in1_up, skip])) as ONE wide-K (K = 18c) matmul ----
    win1 = jnp.concatenate(_taps(a_flat, rows_h, wp) + _taps(skip_ref[...], rows_h, wp),
                           axis=-1)                                  # (npos_h, 18c)
    h = jnp.dot(win1, w1_ref[...], preferred_element_type=jnp.float32) + b1_ref[...]
    h = jnp.maximum(h, 0.0)
    h = _zero_outside_rows(h, _R_H - base, out_h + _R_H - base, wp)
    h3 = _zero_outside_cols(h.reshape(rows_h, wp, c), _L_H, _L_H + out_w)
    h_flat = h3.astype(jnp.bfloat16).reshape(rows_h * wp, c)

    # ---- BasicBlock.conv2 + ReLU; store only the cropped out_w columns ----
    y = _conv3x3_flat(h_flat, w2_ref[...], th, wp) + b2_ref[...]
    y3 = jnp.maximum(y, 0.0).reshape(th, wp, c)
    out_ref[...] = y3[:, _L_Y:_L_Y + out_w, :].astype(out_ref.dtype)


def upsample_block(x1_nhwc, x2_nhwc, wu_hwio, bu, w1_hwio, b1, w2_hwio, b2, *, tile_h=None):
    """UpsampleBlock forward (upsample_mode='nearest', same_num_filt=False).

    x1_nhwc: (N, H, W, 2*C)   decoder features (num_filt = 2*C channels)
    x2_nhwc: (N, H2, W2, C)   encoder skip features (center-cropped to 2H x 2W)
    wu_hwio: (3, 3, 2*C, C)   self.up conv weight;      bu: (C,)
    w1_hwio: (3, 3, 2*C, C)   BasicBlock.conv1 weight;  b1: (C,)
    w2_hwio: (3, 3, C, C)     BasicBlock.conv2 weight;  b2: (C,)
    returns: (N, 2H, 2W, C) float32
    """
    n, h_in, w_in, c2 = x1_nhwc.shape
    c = wu_hwio.shape[-1]
    assert c2 == 2 * c, "inputs1 must have 2*out_channels channels (same_num_filt=False)"
    assert x2_nhwc.shape[0] == n and x2_nhwc.shape[-1] == c
    out_h, out_w = 2 * h_in, 2 * w_in
    assert x2_nhwc.shape[1] >= out_h and x2_nhwc.shape[2] >= out_w, \
        "center-crop assumes inputs2 spatial size >= upsampled inputs1"

    # ---- H tiling (bounds the per-step im2col windows buffers; keeps v7x 64 MiB VMEM happy)
    if tile_h is None:
        tile_h = next((t for t in (32, 16, 8) if out_h % t == 0), out_h)
    assert tile_h % 2 == 0 and out_h % tile_h == 0
    n_t = out_h // tile_h
    th2 = tile_h // 2

    # padded slab width: >= out_w + _L_U + 1 (one zero column right of the interior for the
    # up conv) and a multiple of 16 so in-kernel (rows, wp, c) <-> (rows*wp, c) reshapes are
    # layout no-ops for both f32 and bf16.
    wp = ((out_w + _L_U + 1) + 15) // 16 * 16
    assert wp >= out_w + _L_U + 1 and wp % 16 == 0

    # ---- decoder features: width-only nearest upsample + halo zero-pad; the row repeat is
    #      done in-kernel, so HBM holds a 2x (not 4x) copy (in bf16: ~same bytes as f32 input)
    x1w = jnp.repeat(x1_nhwc, 2, axis=2)                                   # (n, h_in, out_w, 2c)
    x1w = jnp.pad(x1w, ((0, 0), (2, 3), (_L_U, wp - _L_U - out_w), (0, 0)))
    r_lo = th2 + 5                                                         # low-res rows / tile
    lo_idx = (jnp.arange(n_t) * th2)[:, None] + jnp.arange(r_lo)[None, :]
    u_tiles = x1w[:, lo_idx].astype(jnp.bfloat16)                          # (n, n_t, r_lo, wp, 2c)

    # ---- encoder skip: center crop (as in the PyTorch module) + halo zero-pad + H tiles ----
    dy0 = (x2_nhwc.shape[1] - out_h) // 2
    dx0 = (x2_nhwc.shape[2] - out_w) // 2
    skip = x2_nhwc[:, dy0:dy0 + out_h, dx0:dx0 + out_w, :]
    skip = jnp.pad(skip, ((0, 0), (2, 4), (_L_A, wp - _L_A - out_w), (0, 0)))
    hi_idx = (jnp.arange(n_t) * tile_h)[:, None] + jnp.arange(tile_h + 6)[None, :]
    skip_tiles = skip[:, hi_idx].reshape(n, n_t, (tile_h + 6) * wp, c).astype(jnp.bfloat16)

    # ---- im2col weight layout (contraction axis ordered (ky, kx, cin)); bf16 MXU operands.
    #      conv1's weight is pre-stacked so cat([in1_up, skip]) is never materialised:
    #      rows 0..9c-1 act on the in1_up windows, rows 9c..18c-1 on the skip windows.
    wu_f = wu_hwio.reshape(9 * 2 * c, c).astype(jnp.bfloat16)
    w1_f = jnp.concatenate([w1_hwio[:, :, :c, :].reshape(9 * c, c),
                            w1_hwio[:, :, c:, :].reshape(9 * c, c)],
                           axis=0).astype(jnp.bfloat16)
    w2_f = w2_hwio.reshape(9 * c, c).astype(jnp.bfloat16)
    bu_f = bu.reshape(1, c).astype(jnp.float32)
    b1_f = b1.reshape(1, c).astype(jnp.float32)
    b2_f = b2.reshape(1, c).astype(jnp.float32)

    kernel = functools.partial(upsample_block_kernel, th=tile_h, out_h=out_h, out_w=out_w, wp=wp)

    def tile_spec(arr):    # per-(sample, H-tile) block, pipelined over the (n, n_t) grid
        return pl.BlockSpec((None, None) + arr.shape[2:],
                            lambda b, t: (b, t) + (0,) * (arr.ndim - 2))

    def const_spec(arr):   # constant index_map -> stays resident across all grid steps
        return pl.BlockSpec(arr.shape, lambda b, t: (0,) * arr.ndim)

    # re-derive the VMEM budget per chip generation (v7x: 64 MiB physical, v5e/v6e: 128 MiB)
    try:
        cap = pltpu.get_tpu_info().vmem_capacity_bytes
        vmem_limit = min(int(cap) * 3 // 4, 100 * 1024 * 1024)
    except Exception:
        vmem_limit = 48 * 1024 * 1024

    out = pl.pallas_call(
        kernel,
        out_shape=jax.ShapeDtypeStruct((n, n_t, tile_h, out_w, c), jnp.float32),
        grid=(n, n_t),
        in_specs=[
            tile_spec(u_tiles), tile_spec(skip_tiles),
            const_spec(wu_f), const_spec(bu_f),
            const_spec(w1_f), const_spec(b1_f),
            const_spec(w2_f), const_spec(b2_f),
        ],
        out_specs=pl.BlockSpec((None, None, tile_h, out_w, c),
                               lambda b, t: (b, t, 0, 0, 0)),
        compiler_params=pltpu.CompilerParams(
            dimension_semantics=("parallel", "parallel"),
            vmem_limit_bytes=vmem_limit,
        ),
    )(u_tiles, skip_tiles, wu_f, bu_f, w1_f, b1_f, w2_f, b2_f)

    return out.reshape(n, out_h, out_w, c)


# ---------------------------------------------------------------------------------------------
# Pure-JAX reference (the PyTorch module, NHWC).  round_fn optionally emulates the kernel's
# bf16 MXU operands (cast every conv input / weight to bf16 and back) for a tight comparison.
# ---------------------------------------------------------------------------------------------
def _conv3x3_same(x, w):
    return jax.lax.conv_general_dilated(
        x, w, window_strides=(1, 1), padding=((1, 1), (1, 1)),
        dimension_numbers=("NHWC", "HWIO", "NHWC"),
        precision=jax.lax.Precision.HIGHEST)


def reference_forward(x1, x2, wu, bu, w1, b1, w2, b2, round_fn=None):
    q = (lambda t: t) if round_fn is None else round_fn
    up = jnp.repeat(jnp.repeat(x1, 2, axis=1), 2, axis=2)                 # nearest x2
    a = _conv3x3_same(q(up), q(wu)) + bu.reshape(1, 1, 1, -1)             # self.up conv
    oh, ow = a.shape[1], a.shape[2]
    dy = (x2.shape[1] - oh) // 2
    dx = (x2.shape[2] - ow) // 2
    cat = jnp.concatenate([a, x2[:, dy:dy + oh, dx:dx + ow, :]], axis=-1)
    h = jnp.maximum(_conv3x3_same(q(cat), q(w1)) + b1.reshape(1, 1, 1, -1), 0.0)
    return jnp.maximum(_conv3x3_same(q(h), q(w2)) + b2.reshape(1, 1, 1, -1), 0.0)


if __name__ == "__main__":
    key = jax.random.PRNGKey(0)
    n, c = 2, 4                        # batch, out_channels
    h_lo, w_lo = 8, 8                  # inputs1 (decoder) spatial size -> output is 16x16
    h_hi, w_hi = 2 * h_lo, 2 * w_lo    # inputs2 (skip) spatial size

    keys = jax.random.split(key, 8)
    x1_nchw = jax.random.normal(keys[0], (n, 2 * c, h_lo, w_lo), jnp.float32)  # inputs1
    x2_nchw = jax.random.normal(keys[1], (n, c, h_hi, w_hi), jnp.float32)      # inputs2
    wu = 0.1 * jax.random.normal(keys[2], (3, 3, 2 * c, c), jnp.float32)       # self.up conv
    bu = 0.1 * jax.random.normal(keys[3], (c,), jnp.float32)
    w1 = 0.1 * jax.random.normal(keys[4], (3, 3, 2 * c, c), jnp.float32)       # BasicBlock.conv1
    b1 = 0.1 * jax.random.normal(keys[5], (c,), jnp.float32)
    w2 = 0.1 * jax.random.normal(keys[6], (3, 3, c, c), jnp.float32)           # BasicBlock.conv2
    b2 = 0.1 * jax.random.normal(keys[7], (c,), jnp.float32)

    # NCHW (PyTorch) -> NHWC (kernel layout)
    x1 = jnp.transpose(x1_nchw, (0, 2, 3, 1))
    x2 = jnp.transpose(x2_nchw, (0, 2, 3, 1))

    # tile_h=8 -> two H tiles of the 16-row output, exercising the halo stitching.
    out = jax.block_until_ready(
        upsample_block(x1, x2, wu, bu, w1, b1, w2, b2, tile_h=8))
    assert out.shape == (n, h_hi, w_hi, c)

    # Tight check vs a reference that rounds conv operands to bf16 exactly like the kernel's
    # MXU operands, plus a loose sanity check vs the pure-f32 module semantics.
    rb = lambda t: t.astype(jnp.bfloat16).astype(jnp.float32)
    ref_bf16 = reference_forward(x1, x2, wu, bu, w1, b1, w2, b2, round_fn=rb)
    ref_f32 = reference_forward(x1, x2, wu, bu, w1, b1, w2, b2)
    assert bool(jnp.allclose(out, ref_bf16, rtol=5e-3, atol=5e-3)), "mismatch vs bf16 reference"
    assert bool(jnp.allclose(out, ref_f32, rtol=1e-1, atol=1e-1)), "mismatch vs f32 reference"

    print("KERNEL_OK")
</pallas_src>

<mosaic_0001>
module attributes {stable_mosaic.version = 11 : i64} {
  func.func @upsample_block_kernel(%arg0: i32, %arg1: i32, %arg2: memref<1x1x9x32x8xbf16, #tpu.memory_space<vmem>>, %arg3: memref<1x1x448x4xbf16, #tpu.memory_space<vmem>>, %arg4: memref<72x4xbf16, #tpu.memory_space<vmem>>, %arg5: memref<1x4xf32, #tpu.memory_space<vmem>>, %arg6: memref<72x4xbf16, #tpu.memory_space<vmem>>, %arg7: memref<1x4xf32, #tpu.memory_space<vmem>>, %arg8: memref<36x4xbf16, #tpu.memory_space<vmem>>, %arg9: memref<1x4xf32, #tpu.memory_space<vmem>>, %arg10: memref<1x1x8x16x4xf32, #tpu.memory_space<vmem>>) attributes {dimension_semantics = [#tpu.dimension_semantics<parallel>, #tpu.dimension_semantics<parallel>], iteration_bounds = array<i64: 2, 2>, scalar_prefetch = 0 : i64, scratch_operands = 0 : i64, tpu.core_type = #tpu.core_type<tc>, window_params = [{transform_indices = @transform_0, window_bounds = array<i64: 1, 1, 9, 32, 8>}, {transform_indices = @transform_1, window_bounds = array<i64: 1, 1, 448, 4>}, {pipeline_mode = #tpu.pipeline_mode<synchronous>, transform_indices = @transform_2, window_bounds = array<i64: 72, 4>}, {pipeline_mode = #tpu.pipeline_mode<synchronous>, transform_indices = @transform_3, window_bounds = array<i64: 1, 4>}, {pipeline_mode = #tpu.pipeline_mode<synchronous>, transform_indices = @transform_4, window_bounds = array<i64: 72, 4>}, {pipeline_mode = #tpu.pipeline_mode<synchronous>, transform_indices = @transform_5, window_bounds = array<i64: 1, 4>}, {pipeline_mode = #tpu.pipeline_mode<synchronous>, transform_indices = @transform_6, window_bounds = array<i64: 36, 4>}, {pipeline_mode = #tpu.pipeline_mode<synchronous>, transform_indices = @transform_7, window_bounds = array<i64: 1, 4>}, {transform_indices = @transform_8, window_bounds = array<i64: 1, 1, 8, 16, 4>}]} {
    %c8_i32 = arith.constant 8 : i32
    %0 = arith.muli %arg1, %c8_i32 : i32
    %c0 = arith.constant 0 : index
    %c0_0 = arith.constant 0 : index
    %c0_1 = arith.constant 0 : index
    %c0_2 = arith.constant 0 : index
    %c0_3 = arith.constant 0 : index
    %1 = vector.load %arg2[%c0, %c0_0, %c0_1, %c0_2, %c0_3] : memref<1x1x9x32x8xbf16, #tpu.memory_space<vmem>>, vector<1x1x9x32x8xbf16>
    %2 = vector.shape_cast %1 : vector<1x1x9x32x8xbf16> to vector<9x32x8xbf16>
    %3 = vector.shape_cast %2 : vector<9x32x8xbf16> to vector<9x1x32x8xbf16>
    %4 = vector.shape_cast %3 : vector<9x1x32x8xbf16> to vector<9x1x32x8xbf16>
    %5 = vector.broadcast %4 : vector<9x1x32x8xbf16> to vector<9x2x32x8xbf16>
    %6 = vector.shape_cast %5 : vector<9x2x32x8xbf16> to vector<576x8xbf16>
    %c0_4 = arith.constant 0 : index
    %c0_5 = arith.constant 0 : index
    %7 = vector.load %arg4[%c0_4, %c0_5] : memref<72x4xbf16, #tpu.memory_space<vmem>>, vector<72x4xbf16>
    %8 = vector.extract_strided_slice %6 {offsets = [32, 0], sizes = [448, 8], strides = [1, 1]} : vector<576x8xbf16> to vector<448x8xbf16>
    %9 = vector.extract_strided_slice %6 {offsets = [33, 0], sizes = [448, 8], strides = [1, 1]} : vector<576x8xbf16> to vector<448x8xbf16>
    %10 = vector.extract_strided_slice %6 {offsets = [34, 0], sizes = [448, 8], strides = [1, 1]} : vector<576x8xbf16> to vector<448x8xbf16>
    %11 = vector.extract_strided_slice %6 {offsets = [64, 0], sizes = [448, 8], strides = [1, 1]} : vector<576x8xbf16> to vector<448x8xbf16>
    %12 = vector.extract_strided_slice %6 {offsets = [65, 0], sizes = [448, 8], strides = [1, 1]} : vector<576x8xbf16> to vector<448x8xbf16>
    %13 = vector.extract_strided_slice %6 {offsets = [66, 0], sizes = [448, 8], strides = [1, 1]} : vector<576x8xbf16> to vector<448x8xbf16>
    %14 = vector.extract_strided_slice %6 {offsets = [96, 0], sizes = [448, 8], strides = [1, 1]} : vector<576x8xbf16> to vector<448x8xbf16>
    %15 = vector.extract_strided_slice %6 {offsets = [97, 0], sizes = [448, 8], strides = [1, 1]} : vector<576x8xbf16> to vector<448x8xbf16>
    %16 = vector.extract_strided_slice %6 {offsets = [98, 0], sizes = [448, 8], strides = [1, 1]} : vector<576x8xbf16> to vector<448x8xbf16>
    %17 = tpu.concatenate %8, %9, %10, %11, %12, %13, %14, %15, %16 in 1 : vector<448x8xbf16>, vector<448x8xbf16>, vector<448x8xbf16>, vector<448x8xbf16>, vector<448x8xbf16>, vector<448x8xbf16>, vector<448x8xbf16>, vector<448x8xbf16>, vector<448x8xbf16> -> vector<448x72xbf16>
    %cst = arith.constant dense<0.000000e+00> : vector<448x4xf32>
    %18 = tpu.matmul %17, %7, %cst {dimension_numbers = #tpu.dot_dimension_numbers<[1], [0], [0], [1], [0, 0, 1, 1], [], []>} : vector<448x72xbf16>, vector<72x4xbf16>, vector<448x4xf32> -> vector<448x4xf32>
    %c0_6 = arith.constant 0 : index
    %c0_7 = arith.constant 0 : index
    %19 = vector.load %arg5[%c0_6, %c0_7] : memref<1x4xf32, #tpu.memory_space<vmem>>, vector<1x4xf32>
    %20 = vector.broadcast %19 : vector<1x4xf32> to vector<448x4xf32>
    %21 = arith.addf %18, %20 : vector<448x4xf32>
    %c2_i32 = arith.constant 2 : i32
    %22 = arith.subi %c2_i32, %0 : i32
    %c18_i32 = arith.constant 18 : i32
    %23 = arith.subi %c18_i32, %0 : i32
    %24 = tpu.iota {dimensions = array<i32: 0>} : vector<448x4xi32>
    %c32_i32 = arith.constant 32 : i32
    %25 = arith.muli %22, %c32_i32 : i32
    %26 = vector.broadcast %25 : i32 to vector<448x4xi32>
    %27 = arith.cmpi sge, %24, %26 : vector<448x4xi32>
    %c32_i32_8 = arith.constant 32 : i32
    %28 = arith.muli %23, %c32_i32_8 : i32
    %29 = vector.broadcast %28 : i32 to vector<448x4xi32>
    %30 = arith.cmpi slt, %24, %29 : vector<448x4xi32>
    %31 = arith.andi %27, %30 : vector<448x4xi1>
    %cst_9 = arith.constant 0.000000e+00 : f32
    %32 = vector.broadcast %cst_9 : f32 to vector<448x4xf32>
    %33 = arith.select %31, %21, %32 : vector<448x4xi1>, vector<448x4xf32>
    %34 = vector.shape_cast %33 : vector<448x4xf32> to vector<14x32x4xf32>
    %35 = tpu.iota {dimensions = array<i32: 1>} : vector<14x32x4xi32>
    %c10_i32 = arith.constant 10 : i32
    %36 = vector.broadcast %c10_i32 : i32 to vector<14x32x4xi32>
    %37 = arith.cmpi sge, %35, %36 : vector<14x32x4xi32>
    %c26_i32 = arith.constant 26 : i32
    %38 = vector.broadcast %c26_i32 : i32 to vector<14x32x4xi32>
    %39 = arith.cmpi slt, %35, %38 : vector<14x32x4xi32>
    %40 = arith.andi %37, %39 : vector<14x32x4xi1>
    %cst_10 = arith.constant 0.000000e+00 : f32
    %41 = vector.broadcast %cst_10 : f32 to vector<14x32x4xf32>
    %42 = arith.select %40, %34, %41 : vector<14x32x4xi1>, vector<14x32x4xf32>
    %43 = arith.truncf %42 : vector<14x32x4xf32> to vector<14x32x4xbf16>
    %44 = vector.shape_cast %43 : vector<14x32x4xbf16> to vector<448x4xbf16>
    %45 = vector.extract_strided_slice %44 {offsets = [0, 0], sizes = [352, 4], strides = [1, 1]} : vector<448x4xbf16> to vector<352x4xbf16>
    %46 = vector.extract_strided_slice %44 {offsets = [1, 0], sizes = [352, 4], strides = [1, 1]} : vector<448x4xbf16> to vector<352x4xbf16>
    %47 = vector.extract_strided_slice %44 {offsets = [2, 0], sizes = [352, 4], strides = [1, 1]} : vector<448x4xbf16> to vector<352x4xbf16>
    %48 = vector.extract_strided_slice %44 {offsets = [32, 0], sizes = [352, 4], strides = [1, 1]} : vector<448x4xbf16> to vector<352x4xbf16>
    %49 = vector.extract_strided_slice %44 {offsets = [33, 0], sizes = [352, 4], strides = [1, 1]} : vector<448x4xbf16> to vector<352x4xbf16>
    %50 = vector.extract_strided_slice %44 {offsets = [34, 0], sizes = [352, 4], strides = [1, 1]} : vector<448x4xbf16> to vector<352x4xbf16>
    %51 = vector.extract_strided_slice %44 {offsets = [64, 0], sizes = [352, 4], strides = [1, 1]} : vector<448x4xbf16> to vector<352x4xbf16>
    %52 = vector.extract_strided_slice %44 {offsets = [65, 0], sizes = [352, 4], strides = [1, 1]} : vector<448x4xbf16> to vector<352x4xbf16>
    %53 = vector.extract_strided_slice %44 {offsets = [66, 0], sizes = [352, 4], strides = [1, 1]} : vector<448x4xbf16> to vector<352x4xbf16>
    %c0_11 = arith.constant 0 : index
    %c0_12 = arith.constant 0 : index
    %c0_13 = arith.constant 0 : index
    %c0_14 = arith.constant 0 : index
    %54 = vector.load %arg3[%c0_11, %c0_12, %c0_13, %c0_14] : memref<1x1x448x4xbf16, #tpu.memory_space<vmem>>, vector<1x1x448x4xbf16>
    %55 = vector.shape_cast %54 : vector<1x1x448x4xbf16> to vector<448x4xbf16>
    %56 = vector.extract_strided_slice %55 {offsets = [0, 0], sizes = [352, 4], strides = [1, 1]} : vector<448x4xbf16> to vector<352x4xbf16>
    %57 = vector.extract_strided_slice %55 {offsets = [1, 0], sizes = [352, 4], strides = [1, 1]} : vector<448x4xbf16> to vector<352x4xbf16>
    %58 = vector.extract_strided_slice %55 {offsets = [2, 0], sizes = [352, 4], strides = [1, 1]} : vector<448x4xbf16> to vector<352x4xbf16>
    %59 = vector.extract_strided_slice %55 {offsets = [32, 0], sizes = [352, 4], strides = [1, 1]} : vector<448x4xbf16> to vector<352x4xbf16>
    %60 = vector.extract_strided_slice %55 {offsets = [33, 0], sizes = [352, 4], strides = [1, 1]} : vector<448x4xbf16> to vector<352x4xbf16>
    %61 = vector.extract_strided_slice %55 {offsets = [34, 0], sizes = [352, 4], strides = [1, 1]} : vector<448x4xbf16> to vector<352x4xbf16>
    %62 = vector.extract_strided_slice %55 {offsets = [64, 0], sizes = [352, 4], strides = [1, 1]} : vector<448x4xbf16> to vector<352x4xbf16>
    %63 = vector.extract_strided_slice %55 {offsets = [65, 0], sizes = [352, 4], strides = [1, 1]} : vector<448x4xbf16> to vector<352x4xbf16>
    %64 = vector.extract_strided_slice %55 {offsets = [66, 0], sizes = [352, 4], strides = [1, 1]} : vector<448x4xbf16> to vector<352x4xbf16>
    %65 = tpu.concatenate %45, %46, %47, %48, %49, %50, %51, %52, %53, %56, %57, %58, %59, %60, %61, %62 in 1 : vector<352x4xbf16>, vector<352x4xbf16>, vector<352x4xbf16>, vector<352x4xbf16>, vector<352x4xbf16>, vector<352x4xbf16>, vector<352x4xbf16>, vector<352x4xbf16>, vector<352x4xbf16>, vector<352x4xbf16>, vector<352x4xbf16>, vector<352x4xbf16>, vector<352x4xbf16>, vector<352x4xbf16>, vector<352x4xbf16>, vector<352x4xbf16> -> vector<352x64xbf16>
    %66 = tpu.concatenate %63, %64 in 1 : vector<352x4xbf16>, vector<352x4xbf16> -> vector<352x8xbf16>
    %67 = tpu.concatenate %65, %66 in 1 : vector<352x64xbf16>, vector<352x8xbf16> -> vector<352x72xbf16>
    %c0_15 = arith.constant 0 : index
    %c0_16 = arith.constant 0 : index
    %68 = vector.load %arg6[%c0_15, %c0_16] : memref<72x4xbf16, #tpu.memory_space<vmem>>, vector<72x4xbf16>
    %cst_17 = arith.constant dense<0.000000e+00> : vector<352x4xf32>
    %69 = tpu.matmul %67, %68, %cst_17 {dimension_numbers = #tpu.dot_dimension_numbers<[1], [0], [0], [1], [0, 0, 1, 1], [], []>} : vector<352x72xbf16>, vector<72x4xbf16>, vector<352x4xf32> -> vector<352x4xf32>
    %c0_18 = arith.constant 0 : index
    %c0_19 = arith.constant 0 : index
    %70 = vector.load %arg7[%c0_18, %c0_19] : memref<1x4xf32, #tpu.memory_space<vmem>>, vector<1x4xf32>
    %71 = vector.broadcast %70 : vector<1x4xf32> to vector<352x4xf32>
    %72 = arith.addf %69, %71 : vector<352x4xf32>
    %cst_20 = arith.constant 0.000000e+00 : f32
    %73 = vector.broadcast %cst_20 : f32 to vector<352x4xf32>
    %74 = arith.maximumf %72, %73 : vector<352x4xf32>
    %c1_i32 = arith.constant 1 : i32
    %75 = arith.subi %c1_i32, %0 : i32
    %c17_i32 = arith.constant 17 : i32
    %76 = arith.subi %c17_i32, %0 : i32
    %77 = tpu.iota {dimensions = array<i32: 0>} : vector<352x4xi32>
    %c32_i32_21 = arith.constant 32 : i32
    %78 = arith.muli %75, %c32_i32_21 : i32
    %79 = vector.broadcast %78 : i32 to vector<352x4xi32>
    %80 = arith.cmpi sge, %77, %79 : vector<352x4xi32>
    %c32_i32_22 = arith.constant 32 : i32
    %81 = arith.muli %76, %c32_i32_22 : i32
    %82 = vector.broadcast %81 : i32 to vector<352x4xi32>
    %83 = arith.cmpi slt, %77, %82 : vector<352x4xi32>
    %84 = arith.andi %80, %83 : vector<352x4xi1>
    %cst_23 = arith.constant 0.000000e+00 : f32
    %85 = vector.broadcast %cst_23 : f32 to vector<352x4xf32>
    %86 = arith.select %84, %74, %85 : vector<352x4xi1>, vector<352x4xf32>
    %87 = vector.shape_cast %86 : vector<352x4xf32> to vector<11x32x4xf32>
    %88 = tpu.iota {dimensions = array<i32: 1>} : vector<11x32x4xi32>
    %c9_i32 = arith.constant 9 : i32
    %89 = vector.broadcast %c9_i32 : i32 to vector<11x32x4xi32>
    %90 = arith.cmpi sge, %88, %89 : vector<11x32x4xi32>
    %c25_i32 = arith.constant 25 : i32
    %91 = vector.broadcast %c25_i32 : i32 to vector<11x32x4xi32>
    %92 = arith.cmpi slt, %88, %91 : vector<11x32x4xi32>
    %93 = arith.andi %90, %92 : vector<11x32x4xi1>
    %cst_24 = arith.constant 0.000000e+00 : f32
    %94 = vector.broadcast %cst_24 : f32 to vector<11x32x4xf32>
    %95 = arith.select %93, %87, %94 : vector<11x32x4xi1>, vector<11x32x4xf32>
    %96 = arith.truncf %95 : vector<11x32x4xf32> to vector<11x32x4xbf16>
    %97 = vector.shape_cast %96 : vector<11x32x4xbf16> to vector<352x4xbf16>
    %c0_25 = arith.constant 0 : index
    %c0_26 = arith.constant 0 : index
    %98 = vector.load %arg8[%c0_25, %c0_26] : memref<36x4xbf16, #tpu.memory_space<vmem>>, vector<36x4xbf16>
    %99 = vector.extract_strided_slice %97 {offsets = [0, 0], sizes = [256, 4], strides = [1, 1]} : vector<352x4xbf16> to vector<256x4xbf16>
    %100 = vector.extract_strided_slice %97 {offsets = [1, 0], sizes = [256, 4], strides = [1, 1]} : vector<352x4xbf16> to vector<256x4xbf16>
    %101 = vector.extract_strided_slice %97 {offsets = [2, 0], sizes = [256, 4], strides = [1, 1]} : vector<352x4xbf16> to vector<256x4xbf16>
    %102 = vector.extract_strided_slice %97 {offsets = [32, 0], sizes = [256, 4], strides = [1, 1]} : vector<352x4xbf16> to vector<256x4xbf16>
    %103 = vector.extract_strided_slice %97 {offsets = [33, 0], sizes = [256, 4], strides = [1, 1]} : vector<352x4xbf16> to vector<256x4xbf16>
    %104 = vector.extract_strided_slice %97 {offsets = [34, 0], sizes = [256, 4], strides = [1, 1]} : vector<352x4xbf16> to vector<256x4xbf16>
    %105 = vector.extract_strided_slice %97 {offsets = [64, 0], sizes = [256, 4], strides = [1, 1]} : vector<352x4xbf16> to vector<256x4xbf16>
    %106 = vector.extract_strided_slice %97 {offsets = [65, 0], sizes = [256, 4], strides = [1, 1]} : vector<352x4xbf16> to vector<256x4xbf16>
    %107 = vector.extract_strided_slice %97 {offsets = [66, 0], sizes = [256, 4], strides = [1, 1]} : vector<352x4xbf16> to vector<256x4xbf16>
    %108 = tpu.concatenate %99, %100, %101, %102, %103, %104, %105, %106, %107 in 1 : vector<256x4xbf16>, vector<256x4xbf16>, vector<256x4xbf16>, vector<256x4xbf16>, vector<256x4xbf16>, vector<256x4xbf16>, vector<256x4xbf16>, vector<256x4xbf16>, vector<256x4xbf16> -> vector<256x36xbf16>
    %cst_27 = arith.constant dense<0.000000e+00> : vector<256x4xf32>
    %109 = tpu.matmul %108, %98, %cst_27 {dimension_numbers = #tpu.dot_dimension_numbers<[1], [0], [0], [1], [0, 0, 1, 1], [], []>} : vector<256x36xbf16>, vector<36x4xbf16>, vector<256x4xf32> -> vector<256x4xf32>
    %c0_28 = arith.constant 0 : index
    %c0_29 = arith.constant 0 : index
    %110 = vector.load %arg9[%c0_28, %c0_29] : memref<1x4xf32, #tpu.memory_space<vmem>>, vector<1x4xf32>
    %111 = vector.broadcast %110 : vector<1x4xf32> to vector<256x4xf32>
    %112 = arith.addf %109, %111 : vector<256x4xf32>
    %cst_30 = arith.constant 0.000000e+00 : f32
    %113 = vector.broadcast %cst_30 : f32 to vector<256x4xf32>
    %114 = arith.maximumf %112, %113 : vector<256x4xf32>
    %115 = vector.shape_cast %114 : vector<256x4xf32> to vector<8x32x4xf32>
    %116 = vector.extract_strided_slice %115 {offsets = [0, 8, 0], sizes = [8, 16, 4], strides = [1, 1, 1]} : vector<8x32x4xf32> to vector<8x16x4xf32>
    %c0_31 = arith.constant 0 : index
    %c0_32 = arith.constant 0 : index
    %c0_33 = arith.constant 0 : index
    %c0_34 = arith.constant 0 : index
    %c0_35 = arith.constant 0 : index
    %117 = vector.load %arg10[%c0_31, %c0_32, %c0_33, %c0_34, %c0_35] : memref<1x1x8x16x4xf32, #tpu.memory_space<vmem>>, vector<1x1x8x16x4xf32>
    %118 = vector.shape_cast %117 : vector<1x1x8x16x4xf32> to vector<8x16x4xf32>
    %119 = vector.shape_cast %116 : vector<8x16x4xf32> to vector<1x1x8x16x4xf32>
    tpu.vector_store %arg10[%c0_31, %c0_32, %c0_33, %c0_34, %c0_35], %119 {strides = array<i32>} : memref<1x1x8x16x4xf32, #tpu.memory_space<vmem>>, vector<1x1x8x16x4xf32>,
    return
  }
  func.func @transform_0(%arg0: i32, %arg1: i32) -> (i32, i32, i32, i32, i32) {
    %c0_i32 = arith.constant 0 : i32
    %c0_i32_0 = arith.constant 0 : i32
    %c0_i32_1 = arith.constant 0 : i32
    %c0_i32_2 = arith.constant 0 : i32
    return %arg0, %arg1, %c0_i32, %c0_i32_0, %c0_i32_1 : i32, i32, i32, i32, i32
  }
  func.func @transform_1(%arg0: i32, %arg1: i32) -> (i32, i32, i32, i32) {
    %c0_i32 = arith.constant 0 : i32
    %c0_i32_0 = arith.constant 0 : i32
    %c0_i32_1 = arith.constant 0 : i32
    return %arg0, %arg1, %c0_i32, %c0_i32_0 : i32, i32, i32, i32
  }
  func.func @transform_2(%arg0: i32, %arg1: i32) -> (i32, i32) {
    %c0_i32 = arith.constant 0 : i32
    %c0_i32_0 = arith.constant 0 : i32
    %c0_i32_1 = arith.constant 0 : i32
    return %c0_i32, %c0_i32_0 : i32, i32
  }
  func.func @transform_3(%arg0: i32, %arg1: i32) -> (i32, i32) {
    %c0_i32 = arith.constant 0 : i32
    %c0_i32_0 = arith.constant 0 : i32
    %c0_i32_1 = arith.constant 0 : i32
    return %c0_i32, %c0_i32_0 : i32, i32
  }
  func.func @transform_4(%arg0: i32, %arg1: i32) -> (i32, i32) {
    %c0_i32 = arith.constant 0 : i32
    %c0_i32_0 = arith.constant 0 : i32
    %c0_i32_1 = arith.constant 0 : i32
    return %c0_i32, %c0_i32_0 : i32, i32
  }
  func.func @transform_5(%arg0: i32, %arg1: i32) -> (i32, i32) {
    %c0_i32 = arith.constant 0 : i32
    %c0_i32_0 = arith.constant 0 : i32
    %c0_i32_1 = arith.constant 0 : i32
    return %c0_i32, %c0_i32_0 : i32, i32
  }
  func.func @transform_6(%arg0: i32, %arg1: i32) -> (i32, i32) {
    %c0_i32 = arith.constant 0 : i32
    %c0_i32_0 = arith.constant 0 : i32
    %c0_i32_1 = arith.constant 0 : i32
    return %c0_i32, %c0_i32_0 : i32, i32
  }
  func.func @transform_7(%arg0: i32, %arg1: i32) -> (i32, i32) {
    %c0_i32 = arith.constant 0 : i32
    %c0_i32_0 = arith.constant 0 : i32
    %c0_i32_1 = arith.constant 0 : i32
    return %c0_i32, %c0_i32_0 : i32, i32
  }
  func.func @transform_8(%arg0: i32, %arg1: i32) -> (i32, i32, i32, i32, i32) {
    %c0_i32 = arith.constant 0 : i32
    %c0_i32_0 = arith.constant 0 : i32
    %c0_i32_1 = arith.constant 0 : i32
    %c0_i32_2 = arith.constant 0 : i32
    return %arg0, %arg1, %c0_i32, %c0_i32_0, %c0_i32_1 : i32, i32, i32, i32, i32
  }
}

</mosaic_0001>

<llo_original>
// kernel: tpu_custom_call.1
$region0: #{tpu_custom_call.1}
  #allocation0 [shape = 'u32[]', space=smem, size = 0x4, offset = 0x4, fixed_abs, tag = 'smem constant byte address 0x4 - core index']
  #allocation1 [shape = 'u32[72,128]{1,0:T(1,128)}', space=vmem, size = 0x9000, scoped, tag = 'internal scratch']
  %s0 = inlined_call_operand.vmem [shape: bf16[2,2,9,32,8], index: 0, kind: input, shape index: {}]
  %s1 = inlined_call_operand.vmem [shape: bf16[2,2,448,4], index: 1, kind: input, shape index: {}]
  %s2 = inlined_call_operand.vmem [shape: bf16[72,4], index: 2, kind: input, shape index: {}]
  %s3 = inlined_call_operand.vmem [shape: f32[1,4], index: 3, kind: input, shape index: {}]
  %s4 = inlined_call_operand.vmem [shape: bf16[72,4], index: 4, kind: input, shape index: {}]
  %s5 = inlined_call_operand.vmem [shape: f32[1,4], index: 5, kind: input, shape index: {}]
  %s6 = inlined_call_operand.vmem [shape: bf16[36,4], index: 6, kind: input, shape index: {}]
  %s7 = inlined_call_operand.vmem [shape: f32[1,4], index: 7, kind: input, shape index: {}]
  %s8 = inlined_call_operand.vmem [shape: f32[2,2,8,16,4], index: 8, kind: output, shape index: {}]
  %s9 = sld [smem:[#allocation0]]
  $region65: #{tpu_custom_call.1} parent=0
    _
  %s11 = ssub.s32 1, %s9
  %s12 = scalar_select 0, %s11, %s9
  loop: start=0, step=1, limit=6
  $region2: #{tpu_custom_call.1} parent=0 // loop_pre_header
    _
  $region3: #{tpu_custom_call.1} parent=0 // loop_header
    %s14 = sphi 0, %s18
    %p15 = scmp.ge.s32.totalorder %s14, 6
    %s21 = sphi 0, %s33
    %s22 = sphi 0, %s29
    %s23 = sphi 0, %s21
    %s24 = sphi 0, %s22
    %s25 = sphi 0, %s23
    %s26 = sphi 0, %s24
    %s38 = sphi 0, %s40
    %s41 = sphi 0, %s38
    %s42 = sphi 0, %s41
    %s58 = sphi 0, %s42
    %s66 = sphi 0, %s68
    %s69 = sphi 0, %s66
    %s70 = sphi 0, %s69
    %s86 = sphi 0, %s70
    %s90 = sphi 0, %s90
    %s92 = sphi 0, %s90
    %s93 = sphi 0, %s92
    %s107 = sphi 0, %s93
    %s111 = sphi 0, %s111
    %s113 = sphi 0, %s111
    %s114 = sphi 0, %s113
    %s128 = sphi 0, %s114
    %s132 = sphi 0, %s132
    %s134 = sphi 0, %s132
    %s135 = sphi 0, %s134
    %s149 = sphi 0, %s135
    %s153 = sphi 0, %s153
    %s155 = sphi 0, %s153
    %s156 = sphi 0, %s155
    %s170 = sphi 0, %s156
    %s174 = sphi 0, %s174
    %s176 = sphi 0, %s174
    %s177 = sphi 0, %s176
    %s191 = sphi 0, %s177
    %s195 = sphi 0, %s195
    %s197 = sphi 0, %s195
    %s198 = sphi 0, %s197
    %s212 = sphi 0, %s198
    %s220 = sphi 0, %s222
    %s223 = sphi 0, %s220
    %s224 = sphi 0, %s223
    %s240 = sphi 0, %s224
  $region4: #{tpu_custom_call.1} parent=0 // loop_header_branch
    %17 = sbr.rel (%p15) target = $region8
  $region5: #{tpu_custom_call.1} parent=0 // loop_body
    %s19 = ssub.s32 %s14, 1
    %s20 = ssub.s32 %s14, 2
    %s27 = sadd.s32 1, %s22
    %p28 = scmp.ge.s32.totalorder %s27, 2
    %s29 = scalar_select %p28, 0, %s27
    %s30 = sadd.s32 1, %s21
    %s31 = scalar_select %p28, %s30, %s21
    %p32 = scmp.ge.s32.totalorder %s31, 2
    %s33 = scalar_select %p32, 0, %s31
    %s34 = ssub.s32 %s21, %s33
    %s35 = ssub.s32 %s22, %s29
    %s36 = sor.u32 %s34, %s35
    %p37 = scmp.eq.s32.totalorder %s36, 0
    %s39 = sadd.s32 %s38, 1
    %s40 = scalar_select %p37, %s38, %s39
    %p43 = pneg %p37
    %p44 = scmp.eq.s32.totalorder %s14, 3
    %p45 = por %p43, %p44
    %p46 = scmp.ne.s32.totalorder %s38, %s41
    %p47 = scmp.eq.s32.totalorder %s14, 0
    %p48 = por %p46, %p47
    %p49 = scmp.ne.s32.totalorder %s38, %s41
    %p50 = scmp.eq.s32.totalorder %s19, 3
    %p51 = por %p49, %p50
    %p52 = scmp.ne.s32.totalorder %s41, %s42
    %p53 = scmp.eq.s32.totalorder %s19, 0
    %p54 = por %p52, %p53
    %p55 = scmp.ne.s32.totalorder %s41, %s42
    %p56 = scmp.eq.s32.totalorder %s20, 3
    %p57 = por %p55, %p56
    %p59 = scmp.ne.s32.totalorder %s42, %s58
    %p60 = scmp.eq.s32.totalorder %s20, 0
    %p61 = por %p59, %p60
    %s62 = ssub.s32 %s21, %s33
    %s63 = ssub.s32 %s22, %s29
    %s64 = sor.u32 %s62, %s63
    %p65 = scmp.eq.s32.totalorder %s64, 0
    %s67 = sadd.s32 %s66, 1
    %s68 = scalar_select %p65, %s66, %s67
    %p71 = pneg %p65
    %p72 = scmp.eq.s32.totalorder %s14, 3
    %p73 = por %p71, %p72
    %p74 = scmp.ne.s32.totalorder %s66, %s69
    %p75 = scmp.eq.s32.totalorder %s14, 0
    %p76 = por %p74, %p75
    %p77 = scmp.ne.s32.totalorder %s66, %s69
    %p78 = scmp.eq.s32.totalorder %s19, 3
    %p79 = por %p77, %p78
    %p80 = scmp.ne.s32.totalorder %s69, %s70
    %p81 = scmp.eq.s32.totalorder %s19, 0
    %p82 = por %p80, %p81
    %p83 = scmp.ne.s32.totalorder %s69, %s70
    %p84 = scmp.eq.s32.totalorder %s20, 3
    %p85 = por %p83, %p84
    %p87 = scmp.ne.s32.totalorder %s70, %s86
    %p88 = scmp.eq.s32.totalorder %s20, 0
    %p89 = por %p87, %p88
    %s91 = sadd.s32 %s90, 1
    %p94 = scmp.eq.s32.totalorder %s14, 3
    %p95 = scmp.ne.s32.totalorder %s90, %s92
    %p96 = scmp.eq.s32.totalorder %s14, 0
    %p97 = por %p95, %p96
    %p98 = scmp.ne.s32.totalorder %s90, %s92
    %p99 = scmp.eq.s32.totalorder %s19, 3
    %p100 = por %p98, %p99
    %p101 = scmp.ne.s32.totalorder %s92, %s93
    %p102 = scmp.eq.s32.totalorder %s19, 0
    %p103 = por %p101, %p102
    %p104 = scmp.ne.s32.totalorder %s92, %s93
    %p105 = scmp.eq.s32.totalorder %s20, 3
    %p106 = por %p104, %p105
    %p108 = scmp.ne.s32.totalorder %s93, %s107
    %p109 = scmp.eq.s32.totalorder %s20, 0
    %p110 = por %p108, %p109
    %s112 = sadd.s32 %s111, 1
    %p115 = scmp.eq.s32.totalorder %s14, 3
    %p116 = scmp.ne.s32.totalorder %s111, %s113
    %p117 = scmp.eq.s32.totalorder %s14, 0
    %p118 = por %p116, %p117
    %p119 = scmp.ne.s32.totalorder %s111, %s113
    %p120 = scmp.eq.s32.totalorder %s19, 3
    %p121 = por %p119, %p120
    %p122 = scmp.ne.s32.totalorder %s113, %s114
    %p123 = scmp.eq.s32.totalorder %s19, 0
    %p124 = por %p122, %p123
    %p125 = scmp.ne.s32.totalorder %s113, %s114
    %p126 = scmp.eq.s32.totalorder %s20, 3
    %p127 = por %p125, %p126
    %p129 = scmp.ne.s32.totalorder %s114, %s128
    %p130 = scmp.eq.s32.totalorder %s20, 0
    %p131 = por %p129, %p130
    %s133 = sadd.s32 %s132, 1
    %p136 = scmp.eq.s32.totalorder %s14, 3
    %p137 = scmp.ne.s32.totalorder %s132, %s134
    %p138 = scmp.eq.s32.totalorder %s14, 0
    %p139 = por %p137, %p138
    %p140 = scmp.ne.s32.totalorder %s132, %s134
    %p141 = scmp.eq.s32.totalorder %s19, 3
    %p142 = por %p140, %p141
    %p143 = scmp.ne.s32.totalorder %s134, %s135
    %p144 = scmp.eq.s32.totalorder %s19, 0
    %p145 = por %p143, %p144
    %p146 = scmp.ne.s32.totalorder %s134, %s135
    %p147 = scmp.eq.s32.totalorder %s20, 3
    %p148 = por %p146, %p147
    %p150 = scmp.ne.s32.totalorder %s135, %s149
    %p151 = scmp.eq.s32.totalorder %s20, 0
    %p152 = por %p150, %p151
    %s154 = sadd.s32 %s153, 1
    %p157 = scmp.eq.s32.totalorder %s14, 3
    %p158 = scmp.ne.s32.totalorder %s153, %s155
    %p159 = scmp.eq.s32.totalorder %s14, 0
    %p160 = por %p158, %p159
    %p161 = scmp.ne.s32.totalorder %s153, %s155
    %p162 = scmp.eq.s32.totalorder %s19, 3
    %p163 = por %p161, %p162
    %p164 = scmp.ne.s32.totalorder %s155, %s156
    %p165 = scmp.eq.s32.totalorder %s19, 0
    %p166 = por %p164, %p165
    %p167 = scmp.ne.s32.totalorder %s155, %s156
    %p168 = scmp.eq.s32.totalorder %s20, 3
    %p169 = por %p167, %p168
    %p171 = scmp.ne.s32.totalorder %s156, %s170
    %p172 = scmp.eq.s32.totalorder %s20, 0
    %p173 = por %p171, %p172
    %s175 = sadd.s32 %s174, 1
    %p178 = scmp.eq.s32.totalorder %s14, 3
    %p179 = scmp.ne.s32.totalorder %s174, %s176
    %p180 = scmp.eq.s32.totalorder %s14, 0
    %p181 = por %p179, %p180
    %p182 = scmp.ne.s32.totalorder %s174, %s176
    %p183 = scmp.eq.s32.totalorder %s19, 3
    %p184 = por %p182, %p183
    %p185 = scmp.ne.s32.totalorder %s176, %s177
    %p186 = scmp.eq.s32.totalorder %s19, 0
    %p187 = por %p185, %p186
    %p188 = scmp.ne.s32.totalorder %s176, %s177
    %p189 = scmp.eq.s32.totalorder %s20, 3
    %p190 = por %p188, %p189
    %p192 = scmp.ne.s32.totalorder %s177, %s191
    %p193 = scmp.eq.s32.totalorder %s20, 0
    %p194 = por %p192, %p193
    %s196 = sadd.s32 %s195, 1
    %p199 = scmp.eq.s32.totalorder %s14, 3
    %p200 = scmp.ne.s32.totalorder %s195, %s197
    %p201 = scmp.eq.s32.totalorder %s14, 0
    %p202 = por %p200, %p201
    %p203 = scmp.ne.s32.totalorder %s195, %s197
    %p204 = scmp.eq.s32.totalorder %s19, 3
    %p205 = por %p203, %p204
    %p206 = scmp.ne.s32.totalorder %s197, %s198
    %p207 = scmp.eq.s32.totalorder %s19, 0
    %p208 = por %p206, %p207
    %p209 = scmp.ne.s32.totalorder %s197, %s198
    %p210 = scmp.eq.s32.totalorder %s20, 3
    %p211 = por %p209, %p210
    %p213 = scmp.ne.s32.totalorder %s198, %s212
    %p214 = scmp.eq.s32.totalorder %s20, 0
    %p215 = por %p213, %p214
    %s216 = ssub.s32 %s21, %s33
    %s217 = ssub.s32 %s22, %s29
    %s218 = sor.u32 %s216, %s217
    %p219 = scmp.eq.s32.totalorder %s218, 0
    %s221 = sadd.s32 %s220, 1
    %s222 = scalar_select %p219, %s220, %s221
    %p225 = pneg %p219
    %p226 = scmp.eq.s32.totalorder %s14, 3
    %p227 = por %p225, %p226
    %p228 = scmp.ne.s32.totalorder %s220, %s223
    %p229 = scmp.eq.s32.totalorder %s14, 0
    %p230 = por %p228, %p229
    %p231 = scmp.ne.s32.totalorder %s220, %s223
    %p232 = scmp.eq.s32.totalorder %s19, 3
    %p233 = por %p231, %p232
    %p234 = scmp.ne.s32.totalorder %s223, %s224
    %p235 = scmp.eq.s32.totalorder %s19, 0
    %p236 = por %p234, %p235
    %p237 = scmp.ne.s32.totalorder %s223, %s224
    %p238 = scmp.eq.s32.totalorder %s20, 3
    %p239 = por %p237, %p238
    %p241 = scmp.ne.s32.totalorder %s224, %s240
    %p242 = scmp.eq.s32.totalorder %s20, 0
    %p243 = por %p241, %p242
    %p244 = scmp.le.s32.totalorder 1, %s14
    %p245 = scmp.lt.s32.totalorder %s14, 5
    %p246 = pnand %p244, %p245
    %p247 = pneg %p246
    // Predicated region
    $region9: #{tpu_custom_call.1} parent=5 // pred_check
      _
    $region10: #{tpu_custom_call.1} parent=5 // pred_check_branch
      %249 = sbr.rel (%p246) target = $region12
    $region11: #{tpu_custom_call.1} parent=5 // pred_region
      %s250 = ssub.s32 %s14, 1
      // Predicated region
      $region13: #{tpu_custom_call.1} parent=11 // pred_check
        %p251 = pneg %p103
      $region14: #{tpu_custom_call.1} parent=11 // pred_check_branch
        %253 = sbr.rel (%p251) target = $region16
      $region15: #{tpu_custom_call.1} parent=11 // pred_region
        _
      $region16: #{tpu_custom_call.1} parent=11 // pred_fallthru
        _
      // Predicated region
      $region17: #{tpu_custom_call.1} parent=11 // pred_check
        %p254 = pneg %p124
      $region18: #{tpu_custom_call.1} parent=11 // pred_check_branch
        %256 = sbr.rel (%p254) target = $region20
      $region19: #{tpu_custom_call.1} parent=11 // pred_region
        _
      $region20: #{tpu_custom_call.1} parent=11 // pred_fallthru
        _
      // Predicated region
      $region21: #{tpu_custom_call.1} parent=11 // pred_check
        %p257 = pneg %p145
      $region22: #{tpu_custom_call.1} parent=11 // pred_check_branch
        %259 = sbr.rel (%p257) target = $region24
      $region23: #{tpu_custom_call.1} parent=11 // pred_region
        _
      $region24: #{tpu_custom_call.1} parent=11 // pred_fallthru
        _
      // Predicated region
      $region25: #{tpu_custom_call.1} parent=11 // pred_check
        %p260 = pneg %p166
      $region26: #{tpu_custom_call.1} parent=11 // pred_check_branch
        %262 = sbr.rel (%p260) target = $region28
      $region27: #{tpu_custom_call.1} parent=11 // pred_region
        _
      $region28: #{tpu_custom_call.1} parent=11 // pred_fallthru
        _
      // Predicated region
      $region29: #{tpu_custom_call.1} parent=11 // pred_check
        %p263 = pneg %p187
      $region30: #{tpu_custom_call.1} parent=11 // pred_check_branch
        %265 = sbr.rel (%p263) target = $region32
      $region31: #{tpu_custom_call.1} parent=11 // pred_region
        _
      $region32: #{tpu_custom_call.1} parent=11 // pred_fallthru
        _
      // Predicated region
      $region33: #{tpu_custom_call.1} parent=11 // pred_check
        %p266 = pneg %p208
      $region34: #{tpu_custom_call.1} parent=11 // pred_check_branch
        %268 = sbr.rel (%p266) target = $region36
      $region35: #{tpu_custom_call.1} parent=11 // pred_region
        _
      $region36: #{tpu_custom_call.1} parent=11 // pred_fallthru
        _
    $region12: #{tpu_custom_call.1} parent=5 // pred_fallthru
      _
    %p269 = scmp.lt.s32.totalorder %s14, 4
    // Predicated region
    $region37: #{tpu_custom_call.1} parent=5 // pred_check
      %p270 = pneg %p269
    $region38: #{tpu_custom_call.1} parent=5 // pred_check_branch
      %272 = sbr.rel (%p270) target = $region40
    $region39: #{tpu_custom_call.1} parent=5 // pred_region
      // Predicated region
      $region41: #{tpu_custom_call.1} parent=39 // pred_check
        %p273 = pneg %p48
      $region42: #{tpu_custom_call.1} parent=39 // pred_check_branch
        %275 = sbr.rel (%p273) target = $region44
      $region43: #{tpu_custom_call.1} parent=39 // pred_region
        %p276 = scmp.lt.s32.totalorder %s21, 1
        %s277 = scalar_select %p276, %s21, 1
        %p278 = scmp.lt.s32.totalorder %s22, 1
        %s279 = scalar_select %p278, %s22, 1
        %s280 = smul.addr %s279, 36
        %s281 = smul.addr %s277, 72
        %s282 = sadd.s32 %s280, %s281
        %s283 = smul.addr %s282, 4
        %s284 = scalar_lea.vmem %s0, %s283
      $region44: #{tpu_custom_call.1} parent=39 // pred_fallthru
        _
      // Predicated region
      $region45: #{tpu_custom_call.1} parent=39 // pred_check
        %p285 = pneg %p76
      $region46: #{tpu_custom_call.1} parent=39 // pred_check_branch
        %287 = sbr.rel (%p285) target = $region48
      $region47: #{tpu_custom_call.1} parent=39 // pred_region
        %p288 = scmp.lt.s32.totalorder %s21, 1
        %s289 = scalar_select %p288, %s21, 1
        %p290 = scmp.lt.s32.totalorder %s22, 1
        %s291 = scalar_select %p290, %s22, 1
        %s292 = smul.addr %s291, 56
        %s293 = smul.addr %s289, 112
        %s294 = sadd.s32 %s292, %s293
        %s295 = smul.addr %s294, 4
        %s296 = scalar_lea.vmem %s1, %s295
      $region48: #{tpu_custom_call.1} parent=39 // pred_fallthru
        _
    $region40: #{tpu_custom_call.1} parent=5 // pred_fallthru
      _
    %p297 = scmp.le.s32.totalorder 1, %s14
    %p298 = scmp.lt.s32.totalorder %s14, 5
    %p299 = pnand %p297, %p298
    %p300 = pneg %p299
    // Predicated region
    $region49: #{tpu_custom_call.1} parent=5 // pred_check
      _
    $region50: #{tpu_custom_call.1} parent=5 // pred_check_branch
      %302 = sbr.rel (%p299) target = $region52
    $region51: #{tpu_custom_call.1} parent=5 // pred_region
      %s303 = ssub.s32 %s14, 1
      %p304 = scmp.lt.s32.totalorder %s23, 1
      %s305 = scalar_select %p304, %s23, 1
      %p306 = scmp.lt.s32.totalorder %s24, 1
      %s307 = scalar_select %p306, %s24, 1
      %s308 = smul.addr %s307, 36
      %s309 = smul.addr %s305, 72
      %s310 = sadd.s32 %s308, %s309
      %s311 = smul.addr %s310, 4
      %s312 = scalar_lea.vmem %s0, %s311
      %p313 = pneg %p54
      %p314 = pneg %p51
      %p315 = scmp.lt.s32.totalorder %s23, 1
      %s316 = scalar_select %p315, %s23, 1
      %p317 = scmp.lt.s32.totalorder %s24, 1
      %s318 = scalar_select %p317, %s24, 1
      %s319 = smul.addr %s318, 56
      %s320 = smul.addr %s316, 112
      %s321 = sadd.s32 %s319, %s320
      %s322 = smul.addr %s321, 4
      %s323 = scalar_lea.vmem %s1, %s322
      %p324 = pneg %p82
      %p325 = pneg %p79
      %p326 = pneg %p103
      %p327 = pneg %p100
      %p328 = pneg %p124
      %p329 = pneg %p121
      %p330 = pneg %p145
      %p331 = pneg %p142
      %p332 = pneg %p166
      %p333 = pneg %p163
      %p334 = pneg %p187
      %p335 = pneg %p184
      %p336 = pneg %p208
      %p337 = pneg %p205
      %p338 = pneg %p236
      %p339 = pneg %p233
      %p340 = scmp.lt.s32.totalorder %s23, 1
      %s341 = scalar_select %p340, %s23, 1
      %p342 = scmp.lt.s32.totalorder %s24, 1
      %s343 = scalar_select %p342, %s24, 1
      %s344 = smul.addr %s343, 16
      %s345 = smul.addr %s341, 32
      %s346 = sadd.s32 %s344, %s345
      %s347 = smul.addr %s346, 8
      %s348 = scalar_lea.vmem %s8, %s347
      %p349 = scmp.lt.s32.totalorder %s23, 1
      %s350 = scalar_select %p349, %s23, 1
      %p351 = scmp.lt.s32.totalorder %s24, 1
      %s352 = scalar_select %p351, %s24, 1
      %s353 = smul.addr %s352, 36
      %s354 = smul.addr %s350, 72
      %s355 = sadd.s32 %s353, %s354
      %s356 = smul.addr %s355, 4
      %s357 = scalar_lea.vmem %s0, %s356
      %p358 = scmp.lt.s32.totalorder %s23, 1
      %s359 = scalar_select %p358, %s23, 1
      %p360 = scmp.lt.s32.totalorder %s24, 1
      %s361 = scalar_select %p360, %s24, 1
      %s362 = smul.addr %s361, 56
      %s363 = smul.addr %s359, 112
      %s364 = sadd.s32 %s362, %s363
      %s365 = smul.addr %s364, 4
      %s366 = scalar_lea.vmem %s1, %s365
      %p367 = scmp.lt.s32.totalorder %s23, 1
      %s368 = scalar_select %p367, %s23, 1
      %p369 = scmp.lt.s32.totalorder %s24, 1
      %s370 = scalar_select %p369, %s24, 1
      %s371 = smul.addr %s370, 16
      %s372 = smul.addr %s368, 32
      %s373 = sadd.s32 %s371, %s372
      %s374 = smul.addr %s373, 8
      %s375 = scalar_lea.vmem %s8, %s374
      %s377 = smul.u32 %s24, 8
      %v378 = vld [vmem:[%s357] sm:$0xf]
      %v379 = vld [vmem:[%s357 + $0x4] sm:$0xf]
      %v380 = vld [vmem:[%s357 + $0x8] sm:$0xf]
      %v381 = vld [vmem:[%s357 + $0xc] sm:$0xf]
      %v382 = vld [vmem:[%s357 + $0x10] sm:$0xf]
      %v383 = vld [vmem:[%s357 + $0x14] sm:$0xf]
      %v384 = vld [vmem:[%s357 + $0x18] sm:$0xf]
      %v385 = vld [vmem:[%s357 + $0x1c] sm:$0xf]
      %v386 = vld [vmem:[%s357 + $0x20] sm:$0xf]
      %v387 = vld [vmem:[%s357 + $0x24] sm:$0xf]
      %v388 = vld [vmem:[%s357 + $0x28] sm:$0xf]
      %v389 = vld [vmem:[%s357 + $0x2c] sm:$0xf]
      %v390 = vld [vmem:[%s357 + $0x30] sm:$0xf]
      %v391 = vld [vmem:[%s357 + $0x34] sm:$0xf]
      %v392 = vld [vmem:[%s357 + $0x38] sm:$0xf]
      %v393 = vld [vmem:[%s357 + $0x3c] sm:$0xf]
      %v394 = vld [vmem:[%s357 + $0x40] sm:$0xf]
      %v395 = vld [vmem:[%s357 + $0x44] sm:$0xf]
      %v396 = vld [vmem:[%s357 + $0x48] sm:$0xf]
      %v397 = vld [vmem:[%s357 + $0x4c] sm:$0xf]
      %v398 = vld [vmem:[%s357 + $0x50] sm:$0xf]
      %v399 = vld [vmem:[%s357 + $0x54] sm:$0xf]
      %v400 = vld [vmem:[%s357 + $0x58] sm:$0xf]
      %v401 = vld [vmem:[%s357 + $0x5c] sm:$0xf]
      %v402 = vld [vmem:[%s357 + $0x60] sm:$0xf]
      %v403 = vld [vmem:[%s357 + $0x64] sm:$0xf]
      %v404 = vld [vmem:[%s357 + $0x68] sm:$0xf]
      %v405 = vld [vmem:[%s357 + $0x6c] sm:$0xf]
      %v406 = vld [vmem:[%s357 + $0x70] sm:$0xf]
      %v407 = vld [vmem:[%s357 + $0x74] sm:$0xf]
      %v408 = vld [vmem:[%s357 + $0x78] sm:$0xf]
      %v409 = vld [vmem:[%s357 + $0x7c] sm:$0xf]
      %v410 = vld [vmem:[%s357 + $0x80] sm:$0xf]
      %v411 = vld [vmem:[%s357 + $0x84] sm:$0xf]
      %v412 = vld [vmem:[%s357 + $0x88] sm:$0xf]
      %v413 = vld [vmem:[%s357 + $0x8c] sm:$0xf]
      %v414 = vld [vmem:[%s2] sm:$0xf]
      %v415 = vld [vmem:[%s2 + $0x4] sm:$0xf]
      %v416 = vld [vmem:[%s2 + $0x8] sm:$0xf]
      %v417 = vld [vmem:[%s2 + $0xc] sm:$0xf]
      %v418 = vld [vmem:[%s2 + $0x10] sm:$0xf]
      %v419 = vld [vmem:[%s2 + $0x14] sm:$0xf]
      %v420 = vld [vmem:[%s2 + $0x18] sm:$0xf]
      %v421 = vld [vmem:[%s2 + $0x1c] sm:$0xf]
      %v422 = vld [vmem:[%s2 + $0x20] sm:$0xf]
      %v455 = vunpack.c.l.b16 %v378
      %v456 = vunpack.c.l.b16 %v379
      %v457 = vunpack.c.l.b16 %v380
      %v458 = vunpack.c.l.b16 %v381
      %v459 = vunpack.c.l.b16 %v382
      %v460 = vunpack.c.l.b16 %v383
      %v461 = vunpack.c.l.b16 %v384
      %v462 = vunpack.c.l.b16 %v385
      %v463 = vunpack.c.l.b16 %v386
      %v464 = vunpack.c.l.b16 %v387
      %v465 = vunpack.c.l.b16 %v388
      %v466 = vunpack.c.l.b16 %v389
      %v467 = vunpack.c.l.b16 %v390
      %v468 = vunpack.c.l.b16 %v391
      %v469 = vunpack.c.l.b16 %v392
      %v470 = vunpack.c.l.b16 %v393
      %v471 = vunpack.c.l.b16 %v394
      %v472 = vunpack.c.l.b16 %v395
      %v473 = vunpack.c.l.b16 %v396
      %v474 = vunpack.c.l.b16 %v397
      %v475 = vunpack.c.l.b16 %v398
      %v476 = vunpack.c.l.b16 %v399
      %v477 = vunpack.c.l.b16 %v400
      %v478 = vunpack.c.l.b16 %v401
      %v479 = vunpack.c.l.b16 %v402
      %v480 = vunpack.c.l.b16 %v403
      %v481 = vunpack.c.l.b16 %v404
      %v482 = vunpack.c.l.b16 %v405
      %v483 = vunpack.c.l.b16 %v406
      %v484 = vunpack.c.l.b16 %v407
      %v485 = vunpack.c.l.b16 %v408
      %v486 = vunpack.c.l.b16 %v409
      %v487 = vpack.c.b16 %v456, %v455
      %v488 = vpack.c.b16 %v458, %v457
      %v489 = vpack.c.b16 %v460, %v459
      %v490 = vpack.c.b16 %v462, %v461
      %v491 = vpack.c.b16 %v464, %v463
      %v492 = vpack.c.b16 %v466, %v465
      %v493 = vpack.c.b16 %v468, %v467
      %v494 = vpack.c.b16 %v470, %v469
      %v495 = vpack.c.b16 %v472, %v471
      %v496 = vpack.c.b16 %v474, %v473
      %v497 = vpack.c.b16 %v476, %v475
      %v498 = vpack.c.b16 %v478, %v477
      %v499 = vpack.c.b16 %v480, %v479
      %v500 = vpack.c.b16 %v482, %v481
      %v501 = vpack.c.b16 %v484, %v483
      %v502 = vpack.c.b16 %v486, %v485
      %v503 = vpack.c.b16 %v483, %v483
      %vm504 = vsmask.f32 7424
      %v506 = vshrl.u32 %v487, 16
      %v508 = vshll.u32 %v487, 16
      %v510 = vrot.slane %v508, 1
      %v511 = vor.u32 %v506, %v510
      %v513 = vshll.u32 %v488, 16
      %v515 = vrot.slane %v513, 1
      %v516 = vsel %vm504, %v511, %v515
      %v517 = vshrl.u32 %v488, 16
      %v519 = vor.u32 %v517, %v515
      %v521 = vshll.u32 %v489, 16
      %v523 = vrot.slane %v521, 1
      %v524 = vsel %vm504, %v519, %v523
      %v525 = vshrl.u32 %v489, 16
      %v527 = vor.u32 %v525, %v523
      %v529 = vshll.u32 %v490, 16
      %v531 = vrot.slane %v529, 1
      %v532 = vsel %vm504, %v527, %v531
      %v533 = vshrl.u32 %v490, 16
      %v535 = vor.u32 %v533, %v531
      %v536 = vsel %vm504, %v535, %v523
      %v538 = vshll.u32 %v491, 16
      %v540 = vrot.slane %v538, 1
      %v541 = vsel %vm504, %v535, %v540
      %v542 = vshrl.u32 %v491, 16
      %v544 = vor.u32 %v542, %v540
      %v546 = vshll.u32 %v492, 16
      %v548 = vrot.slane %v546, 1
      %v549 = vsel %vm504, %v544, %v548
      %v550 = vshrl.u32 %v492, 16
      %v552 = vor.u32 %v550, %v548
      %v553 = vsel %vm504, %v552, %v540
      %v555 = vshll.u32 %v493, 16
      %v557 = vrot.slane %v555, 1
      %v558 = vsel %vm504, %v552, %v557
      %v559 = vshrl.u32 %v493, 16
      %v561 = vor.u32 %v559, %v557
      %v563 = vshll.u32 %v494, 16
      %v565 = vrot.slane %v563, 1
      %v566 = vsel %vm504, %v561, %v565
      %v567 = vshrl.u32 %v494, 16
      %v569 = vor.u32 %v567, %v565
      %v570 = vsel %vm504, %v569, %v557
      %v572 = vshll.u32 %v495, 16
      %v574 = vrot.slane %v572, 1
      %v575 = vsel %vm504, %v569, %v574
      %v576 = vshrl.u32 %v495, 16
      %v578 = vor.u32 %v576, %v574
      %v580 = vshll.u32 %v496, 16
      %v582 = vrot.slane %v580, 1
      %v583 = vsel %vm504, %v578, %v582
      %v584 = vshrl.u32 %v496, 16
      %v586 = vor.u32 %v584, %v582
      %v587 = vsel %vm504, %v586, %v574
      %v589 = vshll.u32 %v497, 16
      %v591 = vrot.slane %v589, 1
      %v592 = vsel %vm504, %v586, %v591
      %v593 = vshrl.u32 %v497, 16
      %v595 = vor.u32 %v593, %v591
      %v597 = vshll.u32 %v498, 16
      %v599 = vrot.slane %v597, 1
      %v600 = vsel %vm504, %v595, %v599
      %v601 = vshrl.u32 %v498, 16
      %v603 = vor.u32 %v601, %v599
      %v604 = vsel %vm504, %v603, %v591
      %v606 = vshll.u32 %v499, 16
      %v608 = vrot.slane %v606, 1
      %v609 = vsel %vm504, %v603, %v608
      %v610 = vshrl.u32 %v499, 16
      %v612 = vor.u32 %v610, %v608
      %v614 = vshll.u32 %v500, 16
      %v616 = vrot.slane %v614, 1
      %v617 = vsel %vm504, %v612, %v616
      %v618 = vshrl.u32 %v500, 16
      %v620 = vor.u32 %v618, %v616
      %v621 = vsel %vm504, %v620, %v608
      %v623 = vshll.u32 %v501, 16
      %v625 = vrot.slane %v623, 1
      %v626 = vsel %vm504, %v620, %v625
      %v627 = vshrl.u32 %v501, 16
      %v629 = vor.u32 %v627, %v625
      %v631 = vshll.u32 %v502, 16
      %v633 = vrot.slane %v631, 1
      %v634 = vsel %vm504, %v629, %v633
      %v635 = vshrl.u32 %v502, 16
      %v637 = vor.u32 %v635, %v633
      %v639 = vshll.u32 %v503, 16
      %v641 = vrot.slane %v639, 1
      %v642 = vsel %vm504, %v637, %v641
      %643 = vrot.lane.b32.xlu0 %v516, 8
      %v644 = vpop.permute.xlu0 %643
      %645 = vrot.lane.b32.xlu0 %v524, 8
      %v646 = vpop.permute.xlu0 %645
      %647 = vrot.lane.b32.xlu0 %v532, 8
      %v648 = vpop.permute.xlu0 %647
      %649 = vrot.lane.b32.xlu0 %v536, 8
      %v650 = vpop.permute.xlu0 %649
      %651 = vrot.lane.b32.xlu0 %v541, 8
      %v652 = vpop.permute.xlu0 %651
      %653 = vrot.lane.b32.xlu0 %v549, 8
      %v654 = vpop.permute.xlu0 %653
      %655 = vrot.lane.b32.xlu0 %v553, 8
      %v656 = vpop.permute.xlu0 %655
      %657 = vrot.lane.b32.xlu0 %v558, 8
      %v658 = vpop.permute.xlu0 %657
      %659 = vrot.lane.b32.xlu0 %v566, 8
      %v660 = vpop.permute.xlu0 %659
      %661 = vrot.lane.b32.xlu0 %v570, 8
      %v662 = vpop.permute.xlu0 %661
      %663 = vrot.lane.b32.xlu0 %v575, 8
      %v664 = vpop.permute.xlu0 %663
      %665 = vrot.lane.b32.xlu0 %v583, 8
      %v666 = vpop.permute.xlu0 %665
      %667 = vrot.lane.b32.xlu0 %v587, 8
      %v668 = vpop.permute.xlu0 %667
      %669 = vrot.lane.b32.xlu0 %v592, 8
      %v670 = vpop.permute.xlu0 %669
      %671 = vrot.lane.b32.xlu0 %v600, 8
      %v672 = vpop.permute.xlu0 %671
      %673 = vrot.lane.b32.xlu0 %v604, 8
      %v674 = vpop.permute.xlu0 %673
      %675 = vrot.lane.b32.xlu0 %v609, 8
      %v676 = vpop.permute.xlu0 %675
      %677 = vrot.lane.b32.xlu0 %v617, 8
      %v678 = vpop.permute.xlu0 %677
      %679 = vrot.lane.b32.xlu0 %v621, 8
      %v680 = vpop.permute.xlu0 %679
      %681 = vrot.lane.b32.xlu0 %v626, 8
      %v682 = vpop.permute.xlu0 %681
      %683 = vrot.lane.b32.xlu0 %v634, 8
      %v684 = vpop.permute.xlu0 %683
      %685 = vrot.lane.b32.xlu0 %v642, 8
      %v686 = vpop.permute.xlu0 %685
      %vm687 = vcmask 1046528
      %v688 = vrot.slane %v487, 1
      %v689 = vrot.slane %v488, 1
      %v690 = vsel %vm687, %v688, %v689
      %v691 = vrot.slane %v489, 1
      %v692 = vsel %vm687, %v689, %v691
      %v693 = vrot.slane %v490, 1
      %v694 = vsel %vm687, %v691, %v693
      %v695 = vsel %vm687, %v693, %v691
      %v696 = vrot.slane %v491, 1
      %v697 = vsel %vm687, %v693, %v696
      %v698 = vrot.slane %v492, 1
      %v699 = vsel %vm687, %v696, %v698
      %v700 = vsel %vm687, %v698, %v696
      %v701 = vrot.slane %v493, 1
      %v702 = vsel %vm687, %v698, %v701
      %v703 = vrot.slane %v494, 1
      %v704 = vsel %vm687, %v701, %v703
      %v705 = vsel %vm687, %v703, %v701
      %v706 = vrot.slane %v495, 1
      %v707 = vsel %vm687, %v703, %v706
      %v708 = vrot.slane %v496, 1
      %v709 = vsel %vm687, %v706, %v708
      %v710 = vsel %vm687, %v708, %v706
      %v711 = vrot.slane %v497, 1
      %v712 = vsel %vm687, %v708, %v711
      %v713 = vrot.slane %v498, 1
      %v714 = vsel %vm687, %v711, %v713
      %v715 = vsel %vm687, %v713, %v711
      %v716 = vrot.slane %v499, 1
      %v717 = vsel %vm687, %v713, %v716
      %v718 = vrot.slane %v500, 1
      %v719 = vsel %vm687, %v716, %v718
      %v720 = vsel %vm687, %v718, %v716
      %v721 = vrot.slane %v501, 1
      %v722 = vsel %vm687, %v718, %v721
      %v723 = vrot.slane %v502, 1
      %v724 = vsel %vm687, %v721, %v723
      %v725 = vrot.slane %v503, 1
      %v726 = vsel %vm687, %v723, %v725
      %727 = vrot.lane.b32.xlu0 %v690, 16
      %v728 = vpop.permute.xlu0 %727
      %729 = vrot.lane.b32.xlu0 %v692, 16
      %v730 = vpop.permute.xlu0 %729
      %731 = vrot.lane.b32.xlu0 %v694, 16
      %v732 = vpop.permute.xlu0 %731
      %733 = vrot.lane.b32.xlu0 %v695, 16
      %v734 = vpop.permute.xlu0 %733
      %735 = vrot.lane.b32.xlu0 %v697, 16
      %v736 = vpop.permute.xlu0 %735
      %737 = vrot.lane.b32.xlu0 %v699, 16
      %v738 = vpop.permute.xlu0 %737
      %739 = vrot.lane.b32.xlu0 %v700, 16
      %v740 = vpop.permute.xlu0 %739
      %741 = vrot.lane.b32.xlu0 %v702, 16
      %v742 = vpop.permute.xlu0 %741
      %743 = vrot.lane.b32.xlu0 %v704, 16
      %v744 = vpop.permute.xlu0 %743
      %745 = vrot.lane.b32.xlu0 %v705, 16
      %v746 = vpop.permute.xlu0 %745
      %747 = vrot.lane.b32.xlu0 %v707, 16
      %v748 = vpop.permute.xlu0 %747
      %749 = vrot.lane.b32.xlu0 %v709, 16
      %v750 = vpop.permute.xlu0 %749
      %751 = vrot.lane.b32.xlu0 %v710, 16
      %v752 = vpop.permute.xlu0 %751
      %753 = vrot.lane.b32.xlu0 %v712, 16
      %v754 = vpop.permute.xlu0 %753
      %755 = vrot.lane.b32.xlu0 %v714, 16
      %v756 = vpop.permute.xlu0 %755
      %757 = vrot.lane.b32.xlu0 %v715, 16
      %v758 = vpop.permute.xlu0 %757
      %759 = vrot.lane.b32.xlu0 %v717, 16
      %v760 = vpop.permute.xlu0 %759
      %761 = vrot.lane.b32.xlu0 %v719, 16
      %v762 = vpop.permute.xlu0 %761
      %763 = vrot.lane.b32.xlu0 %v720, 16
      %v764 = vpop.permute.xlu0 %763
      %765 = vrot.lane.b32.xlu0 %v722, 16
      %v766 = vpop.permute.xlu0 %765
      %767 = vrot.lane.b32.xlu0 %v724, 16
      %v768 = vpop.permute.xlu0 %767
      %769 = vrot.lane.b32.xlu0 %v726, 16
      %v770 = vpop.permute.xlu0 %769
      %771 = vrot.lane.b32.xlu0 %v489, 24
      %v772 = vpop.permute.xlu0 %771
      %773 = vrot.lane.b32.xlu0 %v490, 24
      %v774 = vpop.permute.xlu0 %773
      %775 = vrot.lane.b32.xlu0 %v491, 24
      %v776 = vpop.permute.xlu0 %775
      %777 = vrot.lane.b32.xlu0 %v492, 24
      %v778 = vpop.permute.xlu0 %777
      %779 = vrot.lane.b32.xlu0 %v493, 24
      %v780 = vpop.permute.xlu0 %779
      %781 = vrot.lane.b32.xlu0 %v494, 24
      %v782 = vpop.permute.xlu0 %781
      %783 = vrot.lane.b32.xlu0 %v495, 24
      %v784 = vpop.permute.xlu0 %783
      %785 = vrot.lane.b32.xlu0 %v496, 24
      %v786 = vpop.permute.xlu0 %785
      %787 = vrot.lane.b32.xlu0 %v497, 24
      %v788 = vpop.permute.xlu0 %787
      %789 = vrot.lane.b32.xlu0 %v498, 24
      %v790 = vpop.permute.xlu0 %789
      %791 = vrot.lane.b32.xlu0 %v499, 24
      %v792 = vpop.permute.xlu0 %791
      %793 = vrot.lane.b32.xlu0 %v500, 24
      %v794 = vpop.permute.xlu0 %793
      %795 = vrot.lane.b32.xlu0 %v501, 24
      %v796 = vpop.permute.xlu0 %795
      %797 = vrot.lane.b32.xlu0 %v502, 24
      %v798 = vpop.permute.xlu0 %797
      %v800 = vunpack.c.l.b16 %v410
      %v801 = vpack.c.b16 %v800, %v800
      %v802 = vsel %vm504, %v637, %v625
      %v804 = vshll.u32 %v801, 16
      %v806 = vrot.slane %v804, 1
      %v807 = vsel %vm504, %v637, %v806
      %808 = vrot.lane.b32.xlu0 %v532, 32
      %v809 = vpop.permute.xlu0 %808
      %810 = vrot.lane.b32.xlu0 %v536, 32
      %v811 = vpop.permute.xlu0 %810
      %812 = vrot.lane.b32.xlu0 %v541, 32
      %v813 = vpop.permute.xlu0 %812
      %814 = vrot.lane.b32.xlu0 %v549, 32
      %v815 = vpop.permute.xlu0 %814
      %816 = vrot.lane.b32.xlu0 %v553, 32
      %v817 = vpop.permute.xlu0 %816
      %818 = vrot.lane.b32.xlu0 %v558, 32
      %v819 = vpop.permute.xlu0 %818
      %820 = vrot.lane.b32.xlu0 %v566, 32
      %v821 = vpop.permute.xlu0 %820
      %822 = vrot.lane.b32.xlu0 %v570, 32
      %v823 = vpop.permute.xlu0 %822
      %824 = vrot.lane.b32.xlu0 %v575, 32
      %v825 = vpop.permute.xlu0 %824
      %826 = vrot.lane.b32.xlu0 %v583, 32
      %v827 = vpop.permute.xlu0 %826
      %828 = vrot.lane.b32.xlu0 %v587, 32
      %v829 = vpop.permute.xlu0 %828
      %830 = vrot.lane.b32.xlu0 %v592, 32
      %v831 = vpop.permute.xlu0 %830
      %832 = vrot.lane.b32.xlu0 %v600, 32
      %v833 = vpop.permute.xlu0 %832
      %834 = vrot.lane.b32.xlu0 %v604, 32
      %v835 = vpop.permute.xlu0 %834
      %836 = vrot.lane.b32.xlu0 %v609, 32
      %v837 = vpop.permute.xlu0 %836
      %838 = vrot.lane.b32.xlu0 %v617, 32
      %v839 = vpop.permute.xlu0 %838
      %840 = vrot.lane.b32.xlu0 %v621, 32
      %v841 = vpop.permute.xlu0 %840
      %842 = vrot.lane.b32.xlu0 %v626, 32
      %v843 = vpop.permute.xlu0 %842
      %844 = vrot.lane.b32.xlu0 %v634, 32
      %v845 = vpop.permute.xlu0 %844
      %846 = vrot.lane.b32.xlu0 %v802, 32
      %v847 = vpop.permute.xlu0 %846
      %848 = vrot.lane.b32.xlu0 %v807, 32
      %v849 = vpop.permute.xlu0 %848
      %v850 = vsel %vm687, %v723, %v721
      %v851 = vrot.slane %v801, 1
      %v852 = vsel %vm687, %v723, %v851
      %853 = vrot.lane.b32.xlu0 %v694, 40
      %v854 = vpop.permute.xlu0 %853
      %855 = vrot.lane.b32.xlu0 %v695, 40
      %v856 = vpop.permute.xlu0 %855
      %857 = vrot.lane.b32.xlu0 %v697, 40
      %v858 = vpop.permute.xlu0 %857
      %859 = vrot.lane.b32.xlu0 %v699, 40
      %v860 = vpop.permute.xlu0 %859
      %861 = vrot.lane.b32.xlu0 %v700, 40
      %v862 = vpop.permute.xlu0 %861
      %863 = vrot.lane.b32.xlu0 %v702, 40
      %v864 = vpop.permute.xlu0 %863
      %865 = vrot.lane.b32.xlu0 %v704, 40
      %v866 = vpop.permute.xlu0 %865
      %867 = vrot.lane.b32.xlu0 %v705, 40
      %v868 = vpop.permute.xlu0 %867
      %869 = vrot.lane.b32.xlu0 %v707, 40
      %v870 = vpop.permute.xlu0 %869
      %871 = vrot.lane.b32.xlu0 %v709, 40
      %v872 = vpop.permute.xlu0 %871
      %873 = vrot.lane.b32.xlu0 %v710, 40
      %v874 = vpop.permute.xlu0 %873
      %875 = vrot.lane.b32.xlu0 %v712, 40
      %v876 = vpop.permute.xlu0 %875
      %877 = vrot.lane.b32.xlu0 %v714, 40
      %v878 = vpop.permute.xlu0 %877
      %879 = vrot.lane.b32.xlu0 %v715, 40
      %v880 = vpop.permute.xlu0 %879
      %881 = vrot.lane.b32.xlu0 %v717, 40
      %v882 = vpop.permute.xlu0 %881
      %883 = vrot.lane.b32.xlu0 %v719, 40
      %v884 = vpop.permute.xlu0 %883
      %885 = vrot.lane.b32.xlu0 %v720, 40
      %v886 = vpop.permute.xlu0 %885
      %887 = vrot.lane.b32.xlu0 %v722, 40
      %v888 = vpop.permute.xlu0 %887
      %889 = vrot.lane.b32.xlu0 %v724, 40
      %v890 = vpop.permute.xlu0 %889
      %891 = vrot.lane.b32.xlu0 %v850, 40
      %v892 = vpop.permute.xlu0 %891
      %893 = vrot.lane.b32.xlu0 %v852, 40
      %v894 = vpop.permute.xlu0 %893
      %v898 = vunpack.c.l.b16 %v411
      %v899 = vunpack.c.l.b16 %v412
      %v900 = vunpack.c.l.b16 %v413
      %v901 = vpack.c.b16 %v898, %v800
      %v902 = vpack.c.b16 %v900, %v899
      %903 = vrot.lane.b32.xlu0 %v489, 48
      %v904 = vpop.permute.xlu0 %903
      %905 = vrot.lane.b32.xlu0 %v490, 48
      %v906 = vpop.permute.xlu0 %905
      %907 = vrot.lane.b32.xlu0 %v491, 48
      %v908 = vpop.permute.xlu0 %907
      %909 = vrot.lane.b32.xlu0 %v492, 48
      %v910 = vpop.permute.xlu0 %909
      %911 = vrot.lane.b32.xlu0 %v493, 48
      %v912 = vpop.permute.xlu0 %911
      %913 = vrot.lane.b32.xlu0 %v494, 48
      %v914 = vpop.permute.xlu0 %913
      %915 = vrot.lane.b32.xlu0 %v495, 48
      %v916 = vpop.permute.xlu0 %915
      %917 = vrot.lane.b32.xlu0 %v496, 48
      %v918 = vpop.permute.xlu0 %917
      %919 = vrot.lane.b32.xlu0 %v497, 48
      %v920 = vpop.permute.xlu0 %919
      %921 = vrot.lane.b32.xlu0 %v498, 48
      %v922 = vpop.permute.xlu0 %921
      %923 = vrot.lane.b32.xlu0 %v499, 48
      %v924 = vpop.permute.xlu0 %923
      %925 = vrot.lane.b32.xlu0 %v500, 48
      %v926 = vpop.permute.xlu0 %925
      %927 = vrot.lane.b32.xlu0 %v501, 48
      %v928 = vpop.permute.xlu0 %927
      %929 = vrot.lane.b32.xlu0 %v502, 48
      %v930 = vpop.permute.xlu0 %929
      %931 = vrot.lane.b32.xlu0 %v901, 48
      %v932 = vpop.permute.xlu0 %931
      %933 = vrot.lane.b32.xlu0 %v902, 48
      %v934 = vpop.permute.xlu0 %933
      %v936 = vshll.u32 %v901, 16
      %v938 = vrot.slane %v936, 1
      %v939 = vsel %vm504, %v637, %v938
      %v940 = vshrl.u32 %v901, 16
      %v942 = vor.u32 %v940, %v938
      %v944 = vshll.u32 %v902, 16
      %v946 = vrot.slane %v944, 1
      %v947 = vsel %vm504, %v942, %v946
      %v948 = vshrl.u32 %v902, 16
      %v950 = vor.u32 %v948, %v946
      %v951 = vsel %vm504, %v950, %v806
      %952 = vrot.lane.b32.xlu0 %v532, 56
      %v953 = vpop.permute.xlu0 %952
      %954 = vrot.lane.b32.xlu0 %v541, 56
      %v955 = vpop.permute.xlu0 %954
      %956 = vrot.lane.b32.xlu0 %v549, 56
      %v957 = vpop.permute.xlu0 %956
      %958 = vrot.lane.b32.xlu0 %v553, 56
      %v959 = vpop.permute.xlu0 %958
      %960 = vrot.lane.b32.xlu0 %v558, 56
      %v961 = vpop.permute.xlu0 %960
      %962 = vrot.lane.b32.xlu0 %v566, 56
      %v963 = vpop.permute.xlu0 %962
      %964 = vrot.lane.b32.xlu0 %v570, 56
      %v965 = vpop.permute.xlu0 %964
      %966 = vrot.lane.b32.xlu0 %v575, 56
      %v967 = vpop.permute.xlu0 %966
      %968 = vrot.lane.b32.xlu0 %v583, 56
      %v969 = vpop.permute.xlu0 %968
      %970 = vrot.lane.b32.xlu0 %v587, 56
      %v971 = vpop.permute.xlu0 %970
      %972 = vrot.lane.b32.xlu0 %v592, 56
      %v973 = vpop.permute.xlu0 %972
      %974 = vrot.lane.b32.xlu0 %v600, 56
      %v975 = vpop.permute.xlu0 %974
      %976 = vrot.lane.b32.xlu0 %v604, 56
      %v977 = vpop.permute.xlu0 %976
      %978 = vrot.lane.b32.xlu0 %v609, 56
      %v979 = vpop.permute.xlu0 %978
      %980 = vrot.lane.b32.xlu0 %v617, 56
      %v981 = vpop.permute.xlu0 %980
      %982 = vrot.lane.b32.xlu0 %v621, 56
      %v983 = vpop.permute.xlu0 %982
      %984 = vrot.lane.b32.xlu0 %v626, 56
      %v985 = vpop.permute.xlu0 %984
      %986 = vrot.lane.b32.xlu0 %v634, 56
      %v987 = vpop.permute.xlu0 %986
      %988 = vrot.lane.b32.xlu0 %v802, 56
      %v989 = vpop.permute.xlu0 %988
      %990 = vrot.lane.b32.xlu0 %v939, 56
      %v991 = vpop.permute.xlu0 %990
      %992 = vrot.lane.b32.xlu0 %v947, 56
      %v993 = vpop.permute.xlu0 %992
      %994 = vrot.lane.b32.xlu0 %v951, 56
      %v995 = vpop.permute.xlu0 %994
      %v996 = vrot.slane %v901, 1
      %v997 = vsel %vm687, %v723, %v996
      %v998 = vrot.slane %v902, 1
      %v999 = vsel %vm687, %v996, %v998
      %v1000 = vsel %vm687, %v998, %v851
      %1001 = vrot.lane.b32.xlu0 %v694, 64
      %v1002 = vpop.permute.xlu0 %1001
      %1003 = vrot.lane.b32.xlu0 %v697, 64
      %v1004 = vpop.permute.xlu0 %1003
      %1005 = vrot.lane.b32.xlu0 %v699, 64
      %v1006 = vpop.permute.xlu0 %1005
      %1007 = vrot.lane.b32.xlu0 %v700, 64
      %v1008 = vpop.permute.xlu0 %1007
      %1009 = vrot.lane.b32.xlu0 %v702, 64
      %v1010 = vpop.permute.xlu0 %1009
      %1011 = vrot.lane.b32.xlu0 %v704, 64
      %v1012 = vpop.permute.xlu0 %1011
      %1013 = vrot.lane.b32.xlu0 %v705, 64
      %v1014 = vpop.permute.xlu0 %1013
      %1015 = vrot.lane.b32.xlu0 %v707, 64
      %v1016 = vpop.permute.xlu0 %1015
      %1017 = vrot.lane.b32.xlu0 %v709, 64
      %v1018 = vpop.permute.xlu0 %1017
      %1019 = vrot.lane.b32.xlu0 %v710, 64
      %v1020 = vpop.permute.xlu0 %1019
      %1021 = vrot.lane.b32.xlu0 %v712, 64
      %v1022 = vpop.permute.xlu0 %1021
      %1023 = vrot.lane.b32.xlu0 %v714, 64
      %v1024 = vpop.permute.xlu0 %1023
      %1025 = vrot.lane.b32.xlu0 %v715, 64
      %v1026 = vpop.permute.xlu0 %1025
      %1027 = vrot.lane.b32.xlu0 %v717, 64
      %v1028 = vpop.permute.xlu0 %1027
      %1029 = vrot.lane.b32.xlu0 %v719, 64
      %v1030 = vpop.permute.xlu0 %1029
      %1031 = vrot.lane.b32.xlu0 %v720, 64
      %v1032 = vpop.permute.xlu0 %1031
      %1033 = vrot.lane.b32.xlu0 %v722, 64
      %v1034 = vpop.permute.xlu0 %1033
      %1035 = vrot.lane.b32.xlu0 %v724, 64
      %v1036 = vpop.permute.xlu0 %1035
      %1037 = vrot.lane.b32.xlu0 %v850, 64
      %v1038 = vpop.permute.xlu0 %1037
      %1039 = vrot.lane.b32.xlu0 %v997, 64
      %v1040 = vpop.permute.xlu0 %1039
      %1041 = vrot.lane.b32.xlu0 %v999, 64
      %v1042 = vpop.permute.xlu0 %1041
      %1043 = vrot.lane.b32.xlu0 %v1000, 64
      %v1044 = vpop.permute.xlu0 %1043
      %vm1045 = vcmask 64512
      %v1047 = vsel %vm1045, %v487, %v644
      %v1049 = vsel %vm1045, %v488, %v646
      %v1051 = vsel %vm1045, %v489, %v648
      %v1053 = vsel %vm1045, %v490, %v650
      %v1055 = vsel %vm1045, %v490, %v652
      %v1057 = vsel %vm1045, %v491, %v654
      %v1059 = vsel %vm1045, %v492, %v656
      %v1061 = vsel %vm1045, %v492, %v658
      %v1063 = vsel %vm1045, %v493, %v660
      %v1065 = vsel %vm1045, %v494, %v662
      %v1067 = vsel %vm1045, %v494, %v664
      %v1069 = vsel %vm1045, %v495, %v666
      %v1071 = vsel %vm1045, %v496, %v668
      %v1073 = vsel %vm1045, %v496, %v670
      %v1075 = vsel %vm1045, %v497, %v672
      %v1077 = vsel %vm1045, %v498, %v674
      %v1079 = vsel %vm1045, %v498, %v676
      %v1081 = vsel %vm1045, %v499, %v678
      %v1083 = vsel %vm1045, %v500, %v680
      %v1085 = vsel %vm1045, %v500, %v682
      %v1087 = vsel %vm1045, %v501, %v684
      %v1089 = vsel %vm1045, %v502, %v686
      %vm1090 = vcmask 130048
      %v1092 = vsel %vm1090, %v1047, %v728
      %v1094 = vsel %vm1090, %v1049, %v730
      %v1096 = vsel %vm1090, %v1051, %v732
      %v1098 = vsel %vm1090, %v1053, %v734
      %v1100 = vsel %vm1090, %v1055, %v736
      %v1102 = vsel %vm1090, %v1057, %v738
      %v1104 = vsel %vm1090, %v1059, %v740
      %v1106 = vsel %vm1090, %v1061, %v742
      %v1108 = vsel %vm1090, %v1063, %v744
      %v1110 = vsel %vm1090, %v1065, %v746
      %v1112 = vsel %vm1090, %v1067, %v748
      %v1114 = vsel %vm1090, %v1069, %v750
      %v1116 = vsel %vm1090, %v1071, %v752
      %v1118 = vsel %vm1090, %v1073, %v754
      %v1120 = vsel %vm1090, %v1075, %v756
      %v1122 = vsel %vm1090, %v1077, %v758
      %v1124 = vsel %vm1090, %v1079, %v760
      %v1126 = vsel %vm1090, %v1081, %v762
      %v1128 = vsel %vm1090, %v1083, %v764
      %v1130 = vsel %vm1090, %v1085, %v766
      %v1132 = vsel %vm1090, %v1087, %v768
      %v1134 = vsel %vm1090, %v1089, %v770
      %vm1135 = vcmask 195584
      %v1137 = vsel %vm1135, %v1092, %v772
      %v1139 = vsel %vm1135, %v1094, %v774
      %v1140 = vsel %vm1135, %v1096, %v772
      %v1141 = vsel %vm1135, %v1098, %v774
      %v1143 = vsel %vm1135, %v1096, %v776
      %v1145 = vsel %vm1135, %v1100, %v778
      %v1146 = vsel %vm1135, %v1102, %v776
      %v1147 = vsel %vm1135, %v1104, %v778
      %v1149 = vsel %vm1135, %v1102, %v780
      %v1151 = vsel %vm1135, %v1106, %v782
      %v1152 = vsel %vm1135, %v1108, %v780
      %v1153 = vsel %vm1135, %v1110, %v782
      %v1155 = vsel %vm1135, %v1108, %v784
      %v1157 = vsel %vm1135, %v1112, %v786
      %v1158 = vsel %vm1135, %v1114, %v784
      %v1159 = vsel %vm1135, %v1116, %v786
      %v1161 = vsel %vm1135, %v1114, %v788
      %v1163 = vsel %vm1135, %v1118, %v790
      %v1164 = vsel %vm1135, %v1120, %v788
      %v1165 = vsel %vm1135, %v1122, %v790
      %v1167 = vsel %vm1135, %v1120, %v792
      %v1169 = vsel %vm1135, %v1124, %v794
      %v1170 = vsel %vm1135, %v1126, %v792
      %v1171 = vsel %vm1135, %v1128, %v794
      %v1173 = vsel %vm1135, %v1126, %v796
      %v1175 = vsel %vm1135, %v1130, %v798
      %v1176 = vsel %vm1135, %v1132, %v796
      %v1177 = vsel %vm1135, %v1134, %v798
      %vm1178 = vcmask 261120
      %v1180 = vsel %vm1178, %v1137, %v809
      %v1182 = vsel %vm1178, %v1139, %v811
      %v1183 = vsel %vm1178, %v1140, %v809
      %v1185 = vsel %vm1178, %v1141, %v813
      %v1187 = vsel %vm1178, %v1143, %v815
      %v1189 = vsel %vm1178, %v1145, %v817
      %v1190 = vsel %vm1178, %v1146, %v815
      %v1192 = vsel %vm1178, %v1147, %v819
      %v1194 = vsel %vm1178, %v1149, %v821
      %v1196 = vsel %vm1178, %v1151, %v823
      %v1197 = vsel %vm1178, %v1152, %v821
      %v1199 = vsel %vm1178, %v1153, %v825
      %v1201 = vsel %vm1178, %v1155, %v827
      %v1203 = vsel %vm1178, %v1157, %v829
      %v1204 = vsel %vm1178, %v1158, %v827
      %v1206 = vsel %vm1178, %v1159, %v831
      %v1208 = vsel %vm1178, %v1161, %v833
      %v1210 = vsel %vm1178, %v1163, %v835
      %v1211 = vsel %vm1178, %v1164, %v833
      %v1213 = vsel %vm1178, %v1165, %v837
      %v1215 = vsel %vm1178, %v1167, %v839
      %v1217 = vsel %vm1178, %v1169, %v841
      %v1218 = vsel %vm1178, %v1170, %v839
      %v1220 = vsel %vm1178, %v1171, %v843
      %v1222 = vsel %vm1178, %v1173, %v845
      %v1224 = vsel %vm1178, %v1175, %v847
      %v1225 = vsel %vm1178, %v1176, %v845
      %v1227 = vsel %vm1178, %v1177, %v849
      %vm1228 = vcmask 326656
      %v1230 = vsel %vm1228, %v1180, %v854
      %v1232 = vsel %vm1228, %v1182, %v856
      %v1233 = vsel %vm1228, %v1183, %v854
      %v1235 = vsel %vm1228, %v1185, %v858
      %v1237 = vsel %vm1228, %v1187, %v860
      %v1239 = vsel %vm1228, %v1189, %v862
      %v1240 = vsel %vm1228, %v1190, %v860
      %v1242 = vsel %vm1228, %v1192, %v864
      %v1244 = vsel %vm1228, %v1194, %v866
      %v1246 = vsel %vm1228, %v1196, %v868
      %v1247 = vsel %vm1228, %v1197, %v866
      %v1249 = vsel %vm1228, %v1199, %v870
      %v1251 = vsel %vm1228, %v1201, %v872
      %v1253 = vsel %vm1228, %v1203, %v874
      %v1254 = vsel %vm1228, %v1204, %v872
      %v1256 = vsel %vm1228, %v1206, %v876
      %v1258 = vsel %vm1228, %v1208, %v878
      %v1260 = vsel %vm1228, %v1210, %v880
      %v1261 = vsel %vm1228, %v1211, %v878
      %v1263 = vsel %vm1228, %v1213, %v882
      %v1265 = vsel %vm1228, %v1215, %v884
      %v1267 = vsel %vm1228, %v1217, %v886
      %v1268 = vsel %vm1228, %v1218, %v884
      %v1270 = vsel %vm1228, %v1220, %v888
      %v1272 = vsel %vm1228, %v1222, %v890
      %v1274 = vsel %vm1228, %v1224, %v892
      %v1275 = vsel %vm1228, %v1225, %v890
      %v1277 = vsel %vm1228, %v1227, %v894
      %vm1278 = vcmask 392192
      %v1280 = vsel %vm1278, %v1230, %v904
      %v1282 = vsel %vm1278, %v1232, %v906
      %v1284 = vsel %vm1278, %v1233, %v908
      %v1286 = vsel %vm1278, %v1235, %v910
      %v1287 = vsel %vm1278, %v1237, %v908
      %v1288 = vsel %vm1278, %v1239, %v910
      %v1290 = vsel %vm1278, %v1240, %v912
      %v1292 = vsel %vm1278, %v1242, %v914
      %v1293 = vsel %vm1278, %v1244, %v912
      %v1294 = vsel %vm1278, %v1246, %v914
      %v1296 = vsel %vm1278, %v1247, %v916
      %v1298 = vsel %vm1278, %v1249, %v918
      %v1299 = vsel %vm1278, %v1251, %v916
      %v1300 = vsel %vm1278, %v1253, %v918
      %v1302 = vsel %vm1278, %v1254, %v920
      %v1304 = vsel %vm1278, %v1256, %v922
      %v1305 = vsel %vm1278, %v1258, %v920
      %v1306 = vsel %vm1278, %v1260, %v922
      %v1308 = vsel %vm1278, %v1261, %v924
      %v1310 = vsel %vm1278, %v1263, %v926
      %v1311 = vsel %vm1278, %v1265, %v924
      %v1312 = vsel %vm1278, %v1267, %v926
      %v1314 = vsel %vm1278, %v1268, %v928
      %v1316 = vsel %vm1278, %v1270, %v930
      %v1317 = vsel %vm1278, %v1272, %v928
      %v1318 = vsel %vm1278, %v1274, %v930
      %v1320 = vsel %vm1278, %v1275, %v932
      %v1322 = vsel %vm1278, %v1277, %v934
      %vm1323 = vcmask 457728
      %v1325 = vsel %vm1323, %v1280, %v953
      %v1327 = vsel %vm1323, %v1282, %v955
      %v1329 = vsel %vm1323, %v1284, %v957
      %v1331 = vsel %vm1323, %v1286, %v959
      %v1332 = vsel %vm1323, %v1287, %v957
      %v1334 = vsel %vm1323, %v1288, %v961
      %v1336 = vsel %vm1323, %v1290, %v963
      %v1338 = vsel %vm1323, %v1292, %v965
      %v1339 = vsel %vm1323, %v1293, %v963
      %v1341 = vsel %vm1323, %v1294, %v967
      %v1343 = vsel %vm1323, %v1296, %v969
      %v1345 = vsel %vm1323, %v1298, %v971
      %v1346 = vsel %vm1323, %v1299, %v969
      %v1348 = vsel %vm1323, %v1300, %v973
      %v1350 = vsel %vm1323, %v1302, %v975
      %v1352 = vsel %vm1323, %v1304, %v977
      %v1353 = vsel %vm1323, %v1305, %v975
      %v1355 = vsel %vm1323, %v1306, %v979
      %v1357 = vsel %vm1323, %v1308, %v981
      %v1359 = vsel %vm1323, %v1310, %v983
      %v1360 = vsel %vm1323, %v1311, %v981
      %v1362 = vsel %vm1323, %v1312, %v985
      %v1364 = vsel %vm1323, %v1314, %v987
      %v1366 = vsel %vm1323, %v1316, %v989
      %v1367 = vsel %vm1323, %v1317, %v987
      %v1369 = vsel %vm1323, %v1318, %v991
      %v1371 = vsel %vm1323, %v1320, %v993
      %v1373 = vsel %vm1323, %v1322, %v995
      %vm1374 = vcmask 523264
      %v1376 = vsel %vm1374, %v1325, %v1002
      %v1378 = vsel %vm1374, %v1327, %v1004
      %v1380 = vsel %vm1374, %v1329, %v1006
      %v1382 = vsel %vm1374, %v1331, %v1008
      %v1383 = vsel %vm1374, %v1332, %v1006
      %v1385 = vsel %vm1374, %v1334, %v1010
      %v1387 = vsel %vm1374, %v1336, %v1012
      %v1389 = vsel %vm1374, %v1338, %v1014
      %v1390 = vsel %vm1374, %v1339, %v1012
      %v1392 = vsel %vm1374, %v1341, %v1016
      %v1394 = vsel %vm1374, %v1343, %v1018
      %v1396 = vsel %vm1374, %v1345, %v1020
      %v1397 = vsel %vm1374, %v1346, %v1018
      %v1399 = vsel %vm1374, %v1348, %v1022
      %v1401 = vsel %vm1374, %v1350, %v1024
      %v1403 = vsel %vm1374, %v1352, %v1026
      %v1404 = vsel %vm1374, %v1353, %v1024
      %v1406 = vsel %vm1374, %v1355, %v1028
      %v1408 = vsel %vm1374, %v1357, %v1030
      %v1410 = vsel %vm1374, %v1359, %v1032
      %v1411 = vsel %vm1374, %v1360, %v1030
      %v1413 = vsel %vm1374, %v1362, %v1034
      %v1415 = vsel %vm1374, %v1364, %v1036
      %v1417 = vsel %vm1374, %v1366, %v1038
      %v1418 = vsel %vm1374, %v1367, %v1036
      %v1420 = vsel %vm1374, %v1369, %v1040
      %v1422 = vsel %vm1374, %v1371, %v1042
      %v1424 = vsel %vm1374, %v1373, %v1044
      %v1425 = vld [vmem:[%s3] sm:$0x1]
      %v1427 = vperm.slane %v1425, 0
      %v1438 = vunpack.c.l.b16 %v414
      %v1439 = vunpack.c.l.b16 %v415
      %v1440 = vunpack.c.l.b16 %v416
      %v1441 = vunpack.c.l.b16 %v417
      %v1442 = vunpack.c.l.b16 %v418
      %v1443 = vunpack.c.l.b16 %v419
      %v1444 = vunpack.c.l.b16 %v420
      %v1445 = vunpack.c.l.b16 %v421
      %v1446 = vunpack.c.l.b16 %v422
      %v1447 = vpack.c.b16 %v1439, %v1438
      %v1448 = vpack.c.b16 %v1441, %v1440
      %v1449 = vpack.c.b16 %v1443, %v1442
      %v1450 = vpack.c.b16 %v1445, %v1444
      %v1451 = vpack.c.b16 %v1446, %v1446
      %vm1456 = vcmask 588800
      %v1457 = vsel %vm1456, %v1376, 0
      %v1459 = vsel %vm1456, %v1378, 0
      %v1461 = vsel %vm1456, %v1380, 0
      %v1463 = vsel %vm1456, %v1382, 0
      %v1465 = vsel %vm1456, %v1383, 0
      %v1467 = vsel %vm1456, %v1385, 0
      %v1469 = vsel %vm1456, %v1387, 0
      %v1471 = vsel %vm1456, %v1389, 0
      %v1473 = vsel %vm1456, %v1390, 0
      %v1475 = vsel %vm1456, %v1392, 0
      %v1477 = vsel %vm1456, %v1394, 0
      %v1479 = vsel %vm1456, %v1396, 0
      %v1481 = vsel %vm1456, %v1397, 0
      %v1483 = vsel %vm1456, %v1399, 0
      %v1485 = vsel %vm1456, %v1401, 0
      %v1487 = vsel %vm1456, %v1403, 0
      %v1489 = vsel %vm1456, %v1404, 0
      %v1491 = vsel %vm1456, %v1406, 0
      %v1493 = vsel %vm1456, %v1408, 0
      %v1495 = vsel %vm1456, %v1410, 0
      %v1497 = vsel %vm1456, %v1411, 0
      %v1499 = vsel %vm1456, %v1413, 0
      %v1501 = vsel %vm1456, %v1415, 0
      %v1503 = vsel %vm1456, %v1417, 0
      %v1505 = vsel %vm1456, %v1418, 0
      %v1507 = vsel %vm1456, %v1420, 0
      %v1509 = vsel %vm1456, %v1422, 0
      %v1511 = vsel %vm1456, %v1424, 0
      %vm1513 = vcmask 1043456
      %v1515 = vsel %vm1513, %v1451, 0
      %1517 = vmatpush.bf16.msra.mxu0 0
      %1518 = vmatpush.bf16.msra.mxu0 0
      %1519 = vmatpush.bf16.msra.mxu0 0
      %1520 = vmatpush.bf16.msra.mxu0 %v1515
      %1521 = vmatpush.bf16.msra.mxu0 %v1450
      %1522 = vmatpush.bf16.msra.mxu0 %v1449
      %1523 = vmatpush.bf16.msra.mxu0 %v1448
      %1524 = vmatpush.bf16.msra.mxu0 %v1447
      %1525 = vmatmul.bf16.gmra.mxu0 %v1457
      %v1526 = vpop.f32.mrf.mxu0
      %v1527 = vadd.f32 %v1427, %v1526
      %v1528 = vpop.f32.mrf.mxu0
      %v1529 = vadd.f32 %v1427, %v1528
      %1530 = vmatmul.bf16.gmra.mxu0 %v1459
      %v1531 = vpop.f32.mrf.mxu0
      %v1532 = vadd.f32 %v1427, %v1531
      %v1533 = vpop.f32.mrf.mxu0
      %v1534 = vadd.f32 %v1427, %v1533
      %1535 = vmatmul.bf16.gmra.mxu0 %v1461
      %v1536 = vpop.f32.mrf.mxu0
      %v1537 = vadd.f32 %v1427, %v1536
      %v1538 = vpop.f32.mrf.mxu0
      %v1539 = vadd.f32 %v1427, %v1538
      %1540 = vmatmul.bf16.gmra.mxu0 %v1463
      %v1541 = vpop.f32.mrf.mxu0
      %v1542 = vadd.f32 %v1427, %v1541
      %v1543 = vpop.f32.mrf.mxu0
      %v1544 = vadd.f32 %v1427, %v1543
      %1545 = vmatmul.bf16.gmra.mxu0 %v1465
      %v1546 = vpop.f32.mrf.mxu0
      %v1547 = vadd.f32 %v1427, %v1546
      %v1548 = vpop.f32.mrf.mxu0
      %v1549 = vadd.f32 %v1427, %v1548
      %1550 = vmatmul.bf16.gmra.mxu0 %v1467
      %v1551 = vpop.f32.mrf.mxu0
      %v1552 = vadd.f32 %v1427, %v1551
      %v1553 = vpop.f32.mrf.mxu0
      %v1554 = vadd.f32 %v1427, %v1553
      %1555 = vmatmul.bf16.gmra.mxu0 %v1469
      %v1556 = vpop.f32.mrf.mxu0
      %v1557 = vadd.f32 %v1427, %v1556
      %v1558 = vpop.f32.mrf.mxu0
      %v1559 = vadd.f32 %v1427, %v1558
      %1560 = vmatmul.bf16.gmra.mxu0 %v1471
      %v1561 = vpop.f32.mrf.mxu0
      %v1562 = vadd.f32 %v1427, %v1561
      %v1563 = vpop.f32.mrf.mxu0
      %v1564 = vadd.f32 %v1427, %v1563
      %1565 = vmatmul.bf16.gmra.mxu0 %v1473
      %v1566 = vpop.f32.mrf.mxu0
      %v1567 = vadd.f32 %v1427, %v1566
      %v1568 = vpop.f32.mrf.mxu0
      %v1569 = vadd.f32 %v1427, %v1568
      %1570 = vmatmul.bf16.gmra.mxu0 %v1475
      %v1571 = vpop.f32.mrf.mxu0
      %v1572 = vadd.f32 %v1427, %v1571
      %v1573 = vpop.f32.mrf.mxu0
      %v1574 = vadd.f32 %v1427, %v1573
      %1575 = vmatmul.bf16.gmra.mxu0 %v1477
      %v1576 = vpop.f32.mrf.mxu0
      %v1577 = vadd.f32 %v1427, %v1576
      %v1578 = vpop.f32.mrf.mxu0
      %v1579 = vadd.f32 %v1427, %v1578
      %1580 = vmatmul.bf16.gmra.mxu0 %v1479
      %v1581 = vpop.f32.mrf.mxu0
      %v1582 = vadd.f32 %v1427, %v1581
      %v1583 = vpop.f32.mrf.mxu0
      %v1584 = vadd.f32 %v1427, %v1583
      %1585 = vmatmul.bf16.gmra.mxu0 %v1481
      %v1586 = vpop.f32.mrf.mxu0
      %v1587 = vadd.f32 %v1427, %v1586
      %v1588 = vpop.f32.mrf.mxu0
      %v1589 = vadd.f32 %v1427, %v1588
      %1590 = vmatmul.bf16.gmra.mxu0 %v1483
      %v1591 = vpop.f32.mrf.mxu0
      %v1592 = vadd.f32 %v1427, %v1591
      %v1593 = vpop.f32.mrf.mxu0
      %v1594 = vadd.f32 %v1427, %v1593
      %1595 = vmatmul.bf16.gmra.mxu0 %v1485
      %v1596 = vpop.f32.mrf.mxu0
      %v1597 = vadd.f32 %v1427, %v1596
      %v1598 = vpop.f32.mrf.mxu0
      %v1599 = vadd.f32 %v1427, %v1598
      %1600 = vmatmul.bf16.gmra.mxu0 %v1487
      %v1601 = vpop.f32.mrf.mxu0
      %v1602 = vadd.f32 %v1427, %v1601
      %v1603 = vpop.f32.mrf.mxu0
      %v1604 = vadd.f32 %v1427, %v1603
      %1605 = vmatmul.bf16.gmra.mxu0 %v1489
      %v1606 = vpop.f32.mrf.mxu0
      %v1607 = vadd.f32 %v1427, %v1606
      %v1608 = vpop.f32.mrf.mxu0
      %v1609 = vadd.f32 %v1427, %v1608
      %1610 = vmatmul.bf16.gmra.mxu0 %v1491
      %v1611 = vpop.f32.mrf.mxu0
      %v1612 = vadd.f32 %v1427, %v1611
      %v1613 = vpop.f32.mrf.mxu0
      %v1614 = vadd.f32 %v1427, %v1613
      %1615 = vmatmul.bf16.gmra.mxu0 %v1493
      %v1616 = vpop.f32.mrf.mxu0
      %v1617 = vadd.f32 %v1427, %v1616
      %v1618 = vpop.f32.mrf.mxu0
      %v1619 = vadd.f32 %v1427, %v1618
      %1620 = vmatmul.bf16.gmra.mxu0 %v1495
      %v1621 = vpop.f32.mrf.mxu0
      %v1622 = vadd.f32 %v1427, %v1621
      %v1623 = vpop.f32.mrf.mxu0
      %v1624 = vadd.f32 %v1427, %v1623
      %1625 = vmatmul.bf16.gmra.mxu0 %v1497
      %v1626 = vpop.f32.mrf.mxu0
      %v1627 = vadd.f32 %v1427, %v1626
      %v1628 = vpop.f32.mrf.mxu0
      %v1629 = vadd.f32 %v1427, %v1628
      %1630 = vmatmul.bf16.gmra.mxu0 %v1499
      %v1631 = vpop.f32.mrf.mxu0
      %v1632 = vadd.f32 %v1427, %v1631
      %v1633 = vpop.f32.mrf.mxu0
      %v1634 = vadd.f32 %v1427, %v1633
      %1635 = vmatmul.bf16.gmra.mxu0 %v1501
      %v1636 = vpop.f32.mrf.mxu0
      %v1637 = vadd.f32 %v1427, %v1636
      %v1638 = vpop.f32.mrf.mxu0
      %v1639 = vadd.f32 %v1427, %v1638
      %1640 = vmatmul.bf16.gmra.mxu0 %v1503
      %v1641 = vpop.f32.mrf.mxu0
      %v1642 = vadd.f32 %v1427, %v1641
      %v1643 = vpop.f32.mrf.mxu0
      %v1644 = vadd.f32 %v1427, %v1643
      %1645 = vmatmul.bf16.gmra.mxu0 %v1505
      %v1646 = vpop.f32.mrf.mxu0
      %v1647 = vadd.f32 %v1427, %v1646
      %v1648 = vpop.f32.mrf.mxu0
      %v1649 = vadd.f32 %v1427, %v1648
      %1650 = vmatmul.bf16.gmra.mxu0 %v1507
      %v1651 = vpop.f32.mrf.mxu0
      %v1652 = vadd.f32 %v1427, %v1651
      %v1653 = vpop.f32.mrf.mxu0
      %v1654 = vadd.f32 %v1427, %v1653
      %1655 = vmatmul.bf16.gmra.mxu0 %v1509
      %v1656 = vpop.f32.mrf.mxu0
      %v1657 = vadd.f32 %v1427, %v1656
      %v1658 = vpop.f32.mrf.mxu0
      %1659 = vmatmul.bf16.gmra.mxu0 %v1511
      %v1660 = vpop.f32.mrf.mxu0
      %v1661 = vpop.f32.mrf.mxu0
      %1662 = vdwg.mxu0
      %s1663 = ssub.s32 2, %s377
      %s1664 = ssub.s32 18, %s377
      %v1665 = vlaneseq
      %v1666 = vshrl.u32 %v1665, 7
      %v1667 = vadd.s32 %v1666, 8
      %v1668 = vadd.s32 %v1666, 16
      %v1669 = vadd.s32 %v1666, 24
      %v1670 = vadd.s32 %v1666, 32
      %v1671 = vadd.s32 %v1666, 40
      %v1672 = vadd.s32 %v1666, 48
      %v1673 = vadd.s32 %v1666, 56
      %v1674 = vadd.s32 %v1666, 64
      %v1675 = vadd.s32 %v1666, 72
      %v1676 = vadd.s32 %v1666, 80
      %v1677 = vadd.s32 %v1666, 88
      %v1678 = vadd.s32 %v1666, 96
      %v1679 = vadd.s32 %v1666, 104
      %v1680 = vadd.s32 %v1666, 112
      %v1681 = vadd.s32 %v1666, 120
      %v1682 = vadd.s32 %v1666, 128
      %v1683 = vadd.s32 %v1666, 136
      %v1684 = vadd.s32 %v1666, 144
      %v1685 = vadd.s32 %v1666, 152
      %v1686 = vadd.s32 %v1666, 160
      %v1687 = vadd.s32 %v1666, 168
      %v1688 = vadd.s32 %v1666, 176
      %v1689 = vadd.s32 %v1666, 184
      %v1690 = vadd.s32 %v1666, 192
      %v1691 = vadd.s32 %v1666, 200
      %v1692 = vadd.s32 %v1666, 208
      %v1693 = vadd.s32 %v1666, 216
      %v1694 = vadd.s32 %v1666, 224
      %v1695 = vadd.s32 %v1666, 232
      %v1696 = vadd.s32 %v1666, 240
      %v1697 = vadd.s32 %v1666, 248
      %v1698 = vadd.s32 %v1666, 256
      %v1699 = vadd.s32 %v1666, 264
      %v1700 = vadd.s32 %v1666, 272
      %v1701 = vadd.s32 %v1666, 280
      %v1702 = vadd.s32 %v1666, 288
      %v1703 = vadd.s32 %v1666, 296
      %v1704 = vadd.s32 %v1666, 304
      %v1705 = vadd.s32 %v1666, 312
      %v1706 = vadd.s32 %v1666, 320
      %v1707 = vadd.s32 %v1666, 328
      %v1708 = vadd.s32 %v1666, 336
      %v1709 = vadd.s32 %v1666, 344
      %v1710 = vadd.s32 %v1666, 352
      %v1711 = vadd.s32 %v1666, 360
      %v1712 = vadd.s32 %v1666, 368
      %v1713 = vadd.s32 %v1666, 376
      %v1714 = vadd.s32 %v1666, 384
      %v1715 = vadd.s32 %v1666, 392
      %v1716 = vadd.s32 %v1666, 400
      %v1717 = vadd.s32 %v1666, 408
      %v1718 = vadd.s32 %v1666, 416
      %s1719 = smul.u32 %s1663, 32
      %v1720 = vstv %s1719
      %vm1721 = vcmp.ge.s32.totalorder %v1666, %v1720
      %vm1722 = vcmp.ge.s32.totalorder %v1667, %v1720
      %vm1723 = vcmp.ge.s32.totalorder %v1668, %v1720
      %vm1724 = vcmp.ge.s32.totalorder %v1669, %v1720
      %vm1725 = vcmp.ge.s32.totalorder %v1670, %v1720
      %vm1726 = vcmp.ge.s32.totalorder %v1671, %v1720
      %vm1727 = vcmp.ge.s32.totalorder %v1672, %v1720
      %vm1728 = vcmp.ge.s32.totalorder %v1673, %v1720
      %vm1729 = vcmp.ge.s32.totalorder %v1674, %v1720
      %vm1730 = vcmp.ge.s32.totalorder %v1675, %v1720
      %vm1731 = vcmp.ge.s32.totalorder %v1676, %v1720
      %vm1732 = vcmp.ge.s32.totalorder %v1677, %v1720
      %vm1733 = vcmp.ge.s32.totalorder %v1678, %v1720
      %vm1734 = vcmp.ge.s32.totalorder %v1679, %v1720
      %vm1735 = vcmp.ge.s32.totalorder %v1680, %v1720
      %vm1736 = vcmp.ge.s32.totalorder %v1681, %v1720
      %vm1737 = vcmp.ge.s32.totalorder %v1682, %v1720
      %vm1738 = vcmp.ge.s32.totalorder %v1683, %v1720
      %vm1739 = vcmp.ge.s32.totalorder %v1684, %v1720
      %vm1740 = vcmp.ge.s32.totalorder %v1685, %v1720
      %vm1741 = vcmp.ge.s32.totalorder %v1686, %v1720
      %vm1742 = vcmp.ge.s32.totalorder %v1687, %v1720
      %vm1743 = vcmp.ge.s32.totalorder %v1688, %v1720
      %vm1744 = vcmp.ge.s32.totalorder %v1689, %v1720
      %vm1745 = vcmp.ge.s32.totalorder %v1690, %v1720
      %vm1746 = vcmp.ge.s32.totalorder %v1691, %v1720
      %vm1747 = vcmp.ge.s32.totalorder %v1692, %v1720
      %vm1748 = vcmp.ge.s32.totalorder %v1693, %v1720
      %vm1749 = vcmp.ge.s32.totalorder %v1694, %v1720
      %vm1750 = vcmp.ge.s32.totalorder %v1695, %v1720
      %vm1751 = vcmp.ge.s32.totalorder %v1696, %v1720
      %vm1752 = vcmp.ge.s32.totalorder %v1697, %v1720
      %vm1753 = vcmp.ge.s32.totalorder %v1698, %v1720
      %vm1754 = vcmp.ge.s32.totalorder %v1699, %v1720
      %vm1755 = vcmp.ge.s32.totalorder %v1700, %v1720
      %vm1756 = vcmp.ge.s32.totalorder %v1701, %v1720
      %vm1757 = vcmp.ge.s32.totalorder %v1702, %v1720
      %vm1758 = vcmp.ge.s32.totalorder %v1703, %v1720
      %vm1759 = vcmp.ge.s32.totalorder %v1704, %v1720
      %vm1760 = vcmp.ge.s32.totalorder %v1705, %v1720
      %vm1761 = vcmp.ge.s32.totalorder %v1706, %v1720
      %vm1762 = vcmp.ge.s32.totalorder %v1707, %v1720
      %vm1763 = vcmp.ge.s32.totalorder %v1708, %v1720
      %vm1764 = vcmp.ge.s32.totalorder %v1709, %v1720
      %vm1765 = vcmp.ge.s32.totalorder %v1710, %v1720
      %vm1766 = vcmp.ge.s32.totalorder %v1711, %v1720
      %vm1767 = vcmp.ge.s32.totalorder %v1712, %v1720
      %vm1768 = vcmp.ge.s32.totalorder %v1713, %v1720
      %vm1769 = vcmp.ge.s32.totalorder %v1714, %v1720
      %vm1770 = vcmp.ge.s32.totalorder %v1715, %v1720
      %vm1771 = vcmp.ge.s32.totalorder %v1716, %v1720
      %vm1772 = vcmp.ge.s32.totalorder %v1717, %v1720
      %vm1773 = vcmp.ge.s32.totalorder %v1718, %v1720
      %s1774 = smul.u32 %s1664, 32
      %v1775 = vstv %s1774
      %vm1776 = vcmp.lt.s32.totalorder %v1666, %v1775
      %vm1777 = vcmp.lt.s32.totalorder %v1667, %v1775
      %vm1778 = vcmp.lt.s32.totalorder %v1668, %v1775
      %vm1779 = vcmp.lt.s32.totalorder %v1669, %v1775
      %vm1780 = vcmp.lt.s32.totalorder %v1670, %v1775
      %vm1781 = vcmp.lt.s32.totalorder %v1671, %v1775
      %vm1782 = vcmp.lt.s32.totalorder %v1672, %v1775
      %vm1783 = vcmp.lt.s32.totalorder %v1673, %v1775
      %vm1784 = vcmp.lt.s32.totalorder %v1674, %v1775
      %vm1785 = vcmp.lt.s32.totalorder %v1675, %v1775
      %vm1786 = vcmp.lt.s32.totalorder %v1676, %v1775
      %vm1787 = vcmp.lt.s32.totalorder %v1677, %v1775
      %vm1788 = vcmp.lt.s32.totalorder %v1678, %v1775
      %vm1789 = vcmp.lt.s32.totalorder %v1679, %v1775
      %vm1790 = vcmp.lt.s32.totalorder %v1680, %v1775
      %vm1791 = vcmp.lt.s32.totalorder %v1681, %v1775
      %vm1792 = vcmp.lt.s32.totalorder %v1682, %v1775
      %vm1793 = vcmp.lt.s32.totalorder %v1683, %v1775
      %vm1794 = vcmp.lt.s32.totalorder %v1684, %v1775
      %vm1795 = vcmp.lt.s32.totalorder %v1685, %v1775
      %vm1796 = vcmp.lt.s32.totalorder %v1686, %v1775
      %vm1797 = vcmp.lt.s32.totalorder %v1687, %v1775
      %vm1798 = vcmp.lt.s32.totalorder %v1688, %v1775
      %vm1799 = vcmp.lt.s32.totalorder %v1689, %v1775
      %vm1800 = vcmp.lt.s32.totalorder %v1690, %v1775
      %vm1801 = vcmp.lt.s32.totalorder %v1691, %v1775
      %vm1802 = vcmp.lt.s32.totalorder %v1692, %v1775
      %vm1803 = vcmp.lt.s32.totalorder %v1693, %v1775
      %vm1804 = vcmp.lt.s32.totalorder %v1694, %v1775
      %vm1805 = vcmp.lt.s32.totalorder %v1695, %v1775
      %vm1806 = vcmp.lt.s32.totalorder %v1696, %v1775
      %vm1807 = vcmp.lt.s32.totalorder %v1697, %v1775
      %vm1808 = vcmp.lt.s32.totalorder %v1698, %v1775
      %vm1809 = vcmp.lt.s32.totalorder %v1699, %v1775
      %vm1810 = vcmp.lt.s32.totalorder %v1700, %v1775
      %vm1811 = vcmp.lt.s32.totalorder %v1701, %v1775
      %vm1812 = vcmp.lt.s32.totalorder %v1702, %v1775
      %vm1813 = vcmp.lt.s32.totalorder %v1703, %v1775
      %vm1814 = vcmp.lt.s32.totalorder %v1704, %v1775
      %vm1815 = vcmp.lt.s32.totalorder %v1705, %v1775
      %vm1816 = vcmp.lt.s32.totalorder %v1706, %v1775
      %vm1817 = vcmp.lt.s32.totalorder %v1707, %v1775
      %vm1818 = vcmp.lt.s32.totalorder %v1708, %v1775
      %vm1819 = vcmp.lt.s32.totalorder %v1709, %v1775
      %vm1820 = vcmp.lt.s32.totalorder %v1710, %v1775
      %vm1821 = vcmp.lt.s32.totalorder %v1711, %v1775
      %vm1822 = vcmp.lt.s32.totalorder %v1712, %v1775
      %vm1823 = vcmp.lt.s32.totalorder %v1713, %v1775
      %vm1824 = vcmp.lt.s32.totalorder %v1714, %v1775
      %vm1825 = vcmp.lt.s32.totalorder %v1715, %v1775
      %vm1826 = vcmp.lt.s32.totalorder %v1716, %v1775
      %vm1827 = vcmp.lt.s32.totalorder %v1717, %v1775
      %vm1828 = vcmp.lt.s32.totalorder %v1718, %v1775
      %vm1829 = vmand %vm1721, %vm1776
      %vm1830 = vmand %vm1722, %vm1777
      %vm1831 = vmand %vm1723, %vm1778
      %vm1832 = vmand %vm1724, %vm1779
      %vm1833 = vmand %vm1725, %vm1780
      %vm1834 = vmand %vm1726, %vm1781
      %vm1835 = vmand %vm1727, %vm1782
      %vm1836 = vmand %vm1728, %vm1783
      %vm1837 = vmand %vm1729, %vm1784
      %vm1838 = vmand %vm1730, %vm1785
      %vm1839 = vmand %vm1731, %vm1786
      %vm1840 = vmand %vm1732, %vm1787
      %vm1841 = vmand %vm1733, %vm1788
      %vm1842 = vmand %vm1734, %vm1789
      %vm1843 = vmand %vm1735, %vm1790
      %vm1844 = vmand %vm1736, %vm1791
      %vm1845 = vmand %vm1737, %vm1792
      %vm1846 = vmand %vm1738, %vm1793
      %vm1847 = vmand %vm1739, %vm1794
      %vm1848 = vmand %vm1740, %vm1795
      %vm1849 = vmand %vm1741, %vm1796
      %vm1850 = vmand %vm1742, %vm1797
      %vm1851 = vmand %vm1743, %vm1798
      %vm1852 = vmand %vm1744, %vm1799
      %vm1853 = vmand %vm1745, %vm1800
      %vm1854 = vmand %vm1746, %vm1801
      %vm1855 = vmand %vm1747, %vm1802
      %vm1856 = vmand %vm1748, %vm1803
      %vm1857 = vmand %vm1749, %vm1804
      %vm1858 = vmand %vm1750, %vm1805
      %vm1859 = vmand %vm1751, %vm1806
      %vm1860 = vmand %vm1752, %vm1807
      %vm1861 = vmand %vm1753, %vm1808
      %vm1862 = vmand %vm1754, %vm1809
      %vm1863 = vmand %vm1755, %vm1810
      %vm1864 = vmand %vm1756, %vm1811
      %vm1865 = vmand %vm1757, %vm1812
      %vm1866 = vmand %vm1758, %vm1813
      %vm1867 = vmand %vm1759, %vm1814
      %vm1868 = vmand %vm1760, %vm1815
      %vm1869 = vmand %vm1761, %vm1816
      %vm1870 = vmand %vm1762, %vm1817
      %vm1871 = vmand %vm1763, %vm1818
      %vm1872 = vmand %vm1764, %vm1819
      %vm1873 = vmand %vm1765, %vm1820
      %vm1874 = vmand %vm1766, %vm1821
      %vm1875 = vmand %vm1767, %vm1822
      %vm1876 = vmand %vm1768, %vm1823
      %vm1877 = vmand %vm1769, %vm1824
      %vm1878 = vmand %vm1770, %vm1825
      %vm1879 = vmand %vm1771, %vm1826
      %vm1880 = vmand %vm1772, %vm1827
      %vm1881 = vmand %vm1773, %vm1828
      %v1882 = vsel %vm1829, %v1527, 0.0
      %v1883 = vsel %vm1830, %v1529, 0.0
      %v1884 = vsel %vm1831, %v1532, 0.0
      %v1885 = vsel %vm1832, %v1534, 0.0
      %v1886 = vsel %vm1833, %v1537, 0.0
      %v1887 = vsel %vm1834, %v1539, 0.0
      %v1888 = vsel %vm1835, %v1542, 0.0
      %v1889 = vsel %vm1836, %v1544, 0.0
      %v1890 = vsel %vm1837, %v1547, 0.0
      %v1891 = vsel %vm1838, %v1549, 0.0
      %v1892 = vsel %vm1839, %v1552, 0.0
      %v1893 = vsel %vm1840, %v1554, 0.0
      %v1894 = vsel %vm1841, %v1557, 0.0
      %v1895 = vsel %vm1842, %v1559, 0.0
      %v1896 = vsel %vm1843, %v1562, 0.0
      %v1897 = vsel %vm1844, %v1564, 0.0
      %v1898 = vsel %vm1845, %v1567, 0.0
      %v1899 = vsel %vm1846, %v1569, 0.0
      %v1900 = vsel %vm1847, %v1572, 0.0
      %v1901 = vsel %vm1848, %v1574, 0.0
      %v1902 = vsel %vm1849, %v1577, 0.0
      %v1903 = vsel %vm1850, %v1579, 0.0
      %v1904 = vsel %vm1851, %v1582, 0.0
      %v1905 = vsel %vm1852, %v1584, 0.0
      %v1906 = vsel %vm1853, %v1587, 0.0
      %v1907 = vsel %vm1854, %v1589, 0.0
      %v1908 = vsel %vm1855, %v1592, 0.0
      %v1909 = vsel %vm1856, %v1594, 0.0
      %v1910 = vsel %vm1857, %v1597, 0.0
      %v1911 = vsel %vm1858, %v1599, 0.0
      %v1912 = vsel %vm1859, %v1602, 0.0
      %v1913 = vsel %vm1860, %v1604, 0.0
      %v1914 = vsel %vm1861, %v1607, 0.0
      %v1915 = vsel %vm1862, %v1609, 0.0
      %v1916 = vsel %vm1863, %v1612, 0.0
      %v1917 = vsel %vm1864, %v1614, 0.0
      %v1918 = vsel %vm1865, %v1617, 0.0
      %v1919 = vsel %vm1866, %v1619, 0.0
      %v1920 = vsel %vm1867, %v1622, 0.0
      %v1921 = vsel %vm1868, %v1624, 0.0
      %v1922 = vsel %vm1869, %v1627, 0.0
      %v1923 = vsel %vm1870, %v1629, 0.0
      %v1924 = vsel %vm1871, %v1632, 0.0
      %v1925 = vsel %vm1872, %v1634, 0.0
      %v1926 = vsel %vm1873, %v1637, 0.0
      %v1927 = vsel %vm1874, %v1639, 0.0
      %v1928 = vsel %vm1875, %v1642, 0.0
      %v1929 = vsel %vm1876, %v1644, 0.0
      %v1930 = vsel %vm1877, %v1647, 0.0
      %v1931 = vsel %vm1878, %v1649, 0.0
      %v1932 = vsel %vm1879, %v1652, 0.0
      %v1933 = vsel %vm1880, %v1654, 0.0
      %v1934 = vsel %vm1881, %v1657, 0.0
      %vm1935 = vcmp.ge.s32.totalorder %v1666, 10
      %vm1936 = vcmp.ge.s32.totalorder %v1667, 10
      %vm1937 = vcmp.ge.s32.totalorder %v1668, 10
      %vm1938 = vcmp.ge.s32.totalorder %v1669, 10
      %vm1939 = vcmp.lt.s32.totalorder %v1666, 26
      %vm1940 = vcmp.lt.s32.totalorder %v1667, 26
      %vm1941 = vcmp.lt.s32.totalorder %v1668, 26
      %vm1942 = vcmp.lt.s32.totalorder %v1669, 26
      %vm1943 = vmand %vm1935, %vm1939
      %vm1944 = vmand %vm1936, %vm1940
      %vm1945 = vmand %vm1937, %vm1941
      %vm1946 = vmand %vm1938, %vm1942
      %v1947 = vsel %vm1943, %v1882, 0.0
      %v1948 = vsel %vm1944, %v1883, 0.0
      %v1949 = vsel %vm1945, %v1884, 0.0
      %v1950 = vsel %vm1946, %v1885, 0.0
      %v1951 = vsel %vm1943, %v1886, 0.0
      %v1952 = vsel %vm1944, %v1887, 0.0
      %v1953 = vsel %vm1945, %v1888, 0.0
      %v1954 = vsel %vm1946, %v1889, 0.0
      %v1955 = vsel %vm1943, %v1890, 0.0
      %v1956 = vsel %vm1944, %v1891, 0.0
      %v1957 = vsel %vm1945, %v1892, 0.0
      %v1958 = vsel %vm1946, %v1893, 0.0
      %v1959 = vsel %vm1943, %v1894, 0.0
      %v1960 = vsel %vm1944, %v1895, 0.0
      %v1961 = vsel %vm1945, %v1896, 0.0
      %v1962 = vsel %vm1946, %v1897, 0.0
      %v1963 = vsel %vm1943, %v1898, 0.0
      %v1964 = vsel %vm1944, %v1899, 0.0
      %v1965 = vsel %vm1945, %v1900, 0.0
      %v1966 = vsel %vm1946, %v1901, 0.0
      %v1967 = vsel %vm1943, %v1902, 0.0
      %v1968 = vsel %vm1944, %v1903, 0.0
      %v1969 = vsel %vm1945, %v1904, 0.0
      %v1970 = vsel %vm1946, %v1905, 0.0
      %v1971 = vsel %vm1943, %v1906, 0.0
      %v1972 = vsel %vm1944, %v1907, 0.0
      %v1973 = vsel %vm1945, %v1908, 0.0
      %v1974 = vsel %vm1946, %v1909, 0.0
      %v1975 = vsel %vm1943, %v1910, 0.0
      %v1976 = vsel %vm1944, %v1911, 0.0
      %v1977 = vsel %vm1945, %v1912, 0.0
      %v1978 = vsel %vm1946, %v1913, 0.0
      %v1979 = vsel %vm1943, %v1914, 0.0
      %v1980 = vsel %vm1944, %v1915, 0.0
      %v1981 = vsel %vm1945, %v1916, 0.0
      %v1982 = vsel %vm1946, %v1917, 0.0
      %v1983 = vsel %vm1943, %v1918, 0.0
      %v1984 = vsel %vm1944, %v1919, 0.0
      %v1985 = vsel %vm1945, %v1920, 0.0
      %v1986 = vsel %vm1946, %v1921, 0.0
      %v1987 = vsel %vm1943, %v1922, 0.0
      %v1988 = vsel %vm1944, %v1923, 0.0
      %v1989 = vsel %vm1945, %v1924, 0.0
      %v1990 = vsel %vm1946, %v1925, 0.0
      %v1991 = vsel %vm1943, %v1926, 0.0
      %v1992 = vsel %vm1944, %v1927, 0.0
      %v1993 = vsel %vm1945, %v1928, 0.0
      %v1994 = vsel %vm1946, %v1929, 0.0
      %v1995 = vsel %vm1943, %v1930, 0.0
      %v1996 = vsel %vm1944, %v1931, 0.0
      %v1997 = vsel %vm1945, %v1932, 0.0
      %v1998 = vsel %vm1946, %v1933, 0.0
      %v1999 = vsel %vm1943, %v1934, 0.0
      %v2000 = vpack.c.bf16 %v1947, %v1947
      %v2001 = vpack.c.bf16 %v1948, %v1948
      %v2002 = vpack.c.bf16 %v1949, %v1949
      %v2003 = vpack.c.bf16 %v1950, %v1950
      %v2004 = vpack.c.bf16 %v1951, %v1951
      %v2005 = vpack.c.bf16 %v1952, %v1952
      %v2006 = vpack.c.bf16 %v1953, %v1953
      %v2007 = vpack.c.bf16 %v1954, %v1954
      %v2008 = vpack.c.bf16 %v1955, %v1955
      %v2009 = vpack.c.bf16 %v1956, %v1956
      %v2010 = vpack.c.bf16 %v1957, %v1957
      %v2011 = vpack.c.bf16 %v1958, %v1958
      %v2012 = vpack.c.bf16 %v1959, %v1959
      %v2013 = vpack.c.bf16 %v1960, %v1960
      %v2014 = vpack.c.bf16 %v1961, %v1961
      %v2015 = vpack.c.bf16 %v1962, %v1962
      %v2016 = vpack.c.bf16 %v1963, %v1963
      %v2017 = vpack.c.bf16 %v1964, %v1964
      %v2018 = vpack.c.bf16 %v1965, %v1965
      %v2019 = vpack.c.bf16 %v1966, %v1966
      %v2020 = vpack.c.bf16 %v1967, %v1967
      %v2021 = vpack.c.bf16 %v1968, %v1968
      %v2022 = vpack.c.bf16 %v1969, %v1969
      %v2023 = vpack.c.bf16 %v1970, %v1970
      %v2024 = vpack.c.bf16 %v1971, %v1971
      %v2025 = vpack.c.bf16 %v1972, %v1972
      %v2026 = vpack.c.bf16 %v1973, %v1973
      %v2027 = vpack.c.bf16 %v1974, %v1974
      %v2028 = vpack.c.bf16 %v1975, %v1975
      %v2029 = vpack.c.bf16 %v1976, %v1976
      %v2030 = vpack.c.bf16 %v1977, %v1977
      %v2031 = vpack.c.bf16 %v1978, %v1978
      %v2032 = vpack.c.bf16 %v1979, %v1979
      %v2033 = vpack.c.bf16 %v1980, %v1980
      %v2034 = vpack.c.bf16 %v1981, %v1981
      %v2035 = vpack.c.bf16 %v1982, %v1982
      %v2036 = vpack.c.bf16 %v1983, %v1983
      %v2037 = vpack.c.bf16 %v1984, %v1984
      %v2038 = vpack.c.bf16 %v1985, %v1985
      %v2039 = vpack.c.bf16 %v1986, %v1986
      %v2040 = vpack.c.bf16 %v1987, %v1987
      %v2041 = vpack.c.bf16 %v1988, %v1988
      %v2042 = vpack.c.bf16 %v1989, %v1989
      %v2043 = vpack.c.bf16 %v1990, %v1990
      %v2044 = vpack.c.bf16 %v1991, %v1991
      %v2045 = vpack.c.bf16 %v1992, %v1992
      %v2046 = vpack.c.bf16 %v1993, %v1993
      %v2047 = vpack.c.bf16 %v1994, %v1994
      %v2048 = vpack.c.bf16 %v1995, %v1995
      %v2049 = vpack.c.bf16 %v1996, %v1996
      %v2050 = vpack.c.bf16 %v1997, %v1997
      %v2051 = vpack.c.bf16 %v1998, %v1998
      %v2052 = vpack.c.bf16 %v1999, %v1999
      %v2053 = vld [vmem:[%s366] sm:$0xf]
      %v2054 = vld [vmem:[%s366 + $0x4] sm:$0xf]
      %v2055 = vld [vmem:[%s366 + $0x8] sm:$0xf]
      %v2056 = vld [vmem:[%s366 + $0xc] sm:$0xf]
      %v2057 = vld [vmem:[%s366 + $0x10] sm:$0xf]
      %v2058 = vld [vmem:[%s366 + $0x14] sm:$0xf]
      %v2059 = vld [vmem:[%s366 + $0x18] sm:$0xf]
      %v2060 = vld [vmem:[%s366 + $0x1c] sm:$0xf]
      %v2061 = vld [vmem:[%s366 + $0x20] sm:$0xf]
      %v2062 = vld [vmem:[%s366 + $0x24] sm:$0xf]
      %v2063 = vld [vmem:[%s366 + $0x28] sm:$0xf]
      %v2064 = vld [vmem:[%s366 + $0x2c] sm:$0xf]
      %v2065 = vld [vmem:[%s366 + $0x30] sm:$0xf]
      %v2066 = vld [vmem:[%s366 + $0x34] sm:$0xf]
      %v2067 = vld [vmem:[%s366 + $0x38] sm:$0xf]
      %v2068 = vld [vmem:[%s366 + $0x3c] sm:$0xf]
      %v2069 = vld [vmem:[%s366 + $0x40] sm:$0xf]
      %v2070 = vld [vmem:[%s366 + $0x44] sm:$0xf]
      %v2071 = vld [vmem:[%s366 + $0x48] sm:$0xf]
      %v2072 = vld [vmem:[%s366 + $0x4c] sm:$0xf]
      %v2073 = vld [vmem:[%s366 + $0x50] sm:$0xf]
      %v2074 = vld [vmem:[%s366 + $0x54] sm:$0xf]
      %v2075 = vld [vmem:[%s366 + $0x58] sm:$0xf]
      %v2076 = vld [vmem:[%s366 + $0x5c] sm:$0xf]
      %v2077 = vld [vmem:[%s366 + $0x60] sm:$0xf]
      %v2078 = vld [vmem:[%s366 + $0x64] sm:$0xf]
      %v2079 = vld [vmem:[%s366 + $0x68] sm:$0xf]
      %v2080 = vld [vmem:[%s366 + $0x6c] sm:$0xf]
      %v2081 = vld [vmem:[%s366 + $0x70] sm:$0xf]
      %v2082 = vld [vmem:[%s366 + $0x74] sm:$0xf]
      %v2083 = vld [vmem:[%s366 + $0x78] sm:$0xf]
      %v2084 = vld [vmem:[%s366 + $0x7c] sm:$0xf]
      %v2085 = vld [vmem:[%s366 + $0x80] sm:$0xf]
      %v2086 = vld [vmem:[%s366 + $0x84] sm:$0xf]
      %v2087 = vld [vmem:[%s366 + $0x88] sm:$0xf]
      %v2088 = vld [vmem:[%s366 + $0x8c] sm:$0xf]
      %v2089 = vld [vmem:[%s366 + $0x90] sm:$0xf]
      %v2090 = vld [vmem:[%s366 + $0x94] sm:$0xf]
      %v2091 = vld [vmem:[%s366 + $0x98] sm:$0xf]
      %v2092 = vld [vmem:[%s366 + $0x9c] sm:$0xf]
      %v2093 = vld [vmem:[%s366 + $0xa0] sm:$0xf]
      %v2094 = vld [vmem:[%s366 + $0xa4] sm:$0xf]
      %v2095 = vld [vmem:[%s366 + $0xa8] sm:$0xf]
      %v2096 = vld [vmem:[%s366 + $0xac] sm:$0xf]
      %v2097 = vld [vmem:[%s366 + $0xb0] sm:$0xf]
      %v2098 = vld [vmem:[%s366 + $0xb4] sm:$0xf]
      %v2099 = vld [vmem:[%s366 + $0xb8] sm:$0xf]
      %v2100 = vld [vmem:[%s366 + $0xbc] sm:$0xf]
      %v2101 = vld [vmem:[%s366 + $0xc0] sm:$0xf]
      %v2102 = vld [vmem:[%s366 + $0xc4] sm:$0xf]
      %v2103 = vld [vmem:[%s366 + $0xc8] sm:$0xf]
      %v2104 = vld [vmem:[%s366 + $0xcc] sm:$0xf]
      %v2105 = vld [vmem:[%s366 + $0xd0] sm:$0xf]
      %v2150 = vunpack.c.l.b16 %v2000
      %v2151 = vunpack.c.l.b16 %v2001
      %v2152 = vunpack.c.l.b16 %v2002
      %v2153 = vunpack.c.l.b16 %v2003
      %v2154 = vunpack.c.l.b16 %v2004
      %v2155 = vunpack.c.l.b16 %v2005
      %v2156 = vunpack.c.l.b16 %v2006
      %v2157 = vunpack.c.l.b16 %v2007
      %v2158 = vunpack.c.l.b16 %v2008
      %v2159 = vunpack.c.l.b16 %v2009
      %v2160 = vunpack.c.l.b16 %v2010
      %v2161 = vunpack.c.l.b16 %v2011
      %v2162 = vunpack.c.l.b16 %v2012
      %v2163 = vunpack.c.l.b16 %v2013
      %v2164 = vunpack.c.l.b16 %v2014
      %v2165 = vunpack.c.l.b16 %v2015
      %v2166 = vunpack.c.l.b16 %v2016
      %v2167 = vunpack.c.l.b16 %v2017
      %v2168 = vunpack.c.l.b16 %v2018
      %v2169 = vunpack.c.l.b16 %v2019
      %v2170 = vunpack.c.l.b16 %v2020
      %v2171 = vunpack.c.l.b16 %v2021
      %v2172 = vunpack.c.l.b16 %v2022
      %v2173 = vunpack.c.l.b16 %v2023
      %v2174 = vunpack.c.l.b16 %v2024
      %v2175 = vunpack.c.l.b16 %v2025
      %v2176 = vunpack.c.l.b16 %v2026
      %v2177 = vunpack.c.l.b16 %v2027
      %v2178 = vunpack.c.l.b16 %v2028
      %v2179 = vunpack.c.l.b16 %v2029
      %v2180 = vunpack.c.l.b16 %v2030
      %v2181 = vunpack.c.l.b16 %v2031
      %v2182 = vunpack.c.l.b16 %v2032
      %v2183 = vunpack.c.l.b16 %v2033
      %v2184 = vunpack.c.l.b16 %v2034
      %v2185 = vunpack.c.l.b16 %v2035
      %v2186 = vunpack.c.l.b16 %v2036
      %v2187 = vunpack.c.l.b16 %v2037
      %v2188 = vunpack.c.l.b16 %v2038
      %v2189 = vunpack.c.l.b16 %v2039
      %v2190 = vunpack.c.l.b16 %v2040
      %v2191 = vunpack.c.l.b16 %v2041
      %v2192 = vunpack.c.l.b16 %v2042
      %v2193 = vunpack.c.l.b16 %v2043
      %v2194 = vpack.c.b16 %v2151, %v2150
      %v2195 = vpack.c.b16 %v2153, %v2152
      %v2196 = vpack.c.b16 %v2155, %v2154
      %v2197 = vpack.c.b16 %v2157, %v2156
      %v2198 = vpack.c.b16 %v2159, %v2158
      %v2199 = vpack.c.b16 %v2161, %v2160
      %v2200 = vpack.c.b16 %v2163, %v2162
      %v2201 = vpack.c.b16 %v2165, %v2164
      %v2202 = vpack.c.b16 %v2167, %v2166
      %v2203 = vpack.c.b16 %v2169, %v2168
      %v2204 = vpack.c.b16 %v2171, %v2170
      %v2205 = vpack.c.b16 %v2173, %v2172
      %v2206 = vpack.c.b16 %v2175, %v2174
      %v2207 = vpack.c.b16 %v2177, %v2176
      %v2208 = vpack.c.b16 %v2179, %v2178
      %v2209 = vpack.c.b16 %v2181, %v2180
      %v2210 = vpack.c.b16 %v2183, %v2182
      %v2211 = vpack.c.b16 %v2185, %v2184
      %v2212 = vpack.c.b16 %v2187, %v2186
      %v2213 = vpack.c.b16 %v2189, %v2188
      %v2214 = vpack.c.b16 %v2191, %v2190
      %v2215 = vpack.c.b16 %v2193, %v2192
      %v2217 = vunpack.c.l.b16 %v2044
      %v2218 = vpack.c.b16 %v2217, %v2217
      %v2220 = vshrl.u32 %v2194, 16
      %v2222 = vshll.u32 %v2194, 16
      %v2224 = vrot.slane %v2222, 1
      %v2225 = vor.u32 %v2220, %v2224
      %v2227 = vshll.u32 %v2195, 16
      %v2229 = vrot.slane %v2227, 1
      %v2230 = vsel %vm504, %v2225, %v2229
      %v2231 = vshrl.u32 %v2195, 16
      %v2233 = vor.u32 %v2231, %v2229
      %v2235 = vshll.u32 %v2196, 16
      %v2237 = vrot.slane %v2235, 1
      %v2238 = vsel %vm504, %v2233, %v2237
      %v2239 = vshrl.u32 %v2196, 16
      %v2241 = vor.u32 %v2239, %v2237
      %v2243 = vshll.u32 %v2197, 16
      %v2245 = vrot.slane %v2243, 1
      %v2246 = vsel %vm504, %v2241, %v2245
      %v2247 = vshrl.u32 %v2197, 16
      %v2249 = vor.u32 %v2247, %v2245
      %v2251 = vshll.u32 %v2198, 16
      %v2253 = vrot.slane %v2251, 1
      %v2254 = vsel %vm504, %v2249, %v2253
      %v2255 = vshrl.u32 %v2198, 16
      %v2257 = vor.u32 %v2255, %v2253
      %v2259 = vshll.u32 %v2199, 16
      %v2261 = vrot.slane %v2259, 1
      %v2262 = vsel %vm504, %v2257, %v2261
      %v2263 = vshrl.u32 %v2199, 16
      %v2265 = vor.u32 %v2263, %v2261
      %v2267 = vshll.u32 %v2200, 16
      %v2269 = vrot.slane %v2267, 1
      %v2270 = vsel %vm504, %v2265, %v2269
      %v2271 = vshrl.u32 %v2200, 16
      %v2273 = vor.u32 %v2271, %v2269
      %v2275 = vshll.u32 %v2201, 16
      %v2277 = vrot.slane %v2275, 1
      %v2278 = vsel %vm504, %v2273, %v2277
      %v2279 = vshrl.u32 %v2201, 16
      %v2281 = vor.u32 %v2279, %v2277
      %v2283 = vshll.u32 %v2202, 16
      %v2285 = vrot.slane %v2283, 1
      %v2286 = vsel %vm504, %v2281, %v2285
      %v2287 = vshrl.u32 %v2202, 16
      %v2289 = vor.u32 %v2287, %v2285
      %v2291 = vshll.u32 %v2203, 16
      %v2293 = vrot.slane %v2291, 1
      %v2294 = vsel %vm504, %v2289, %v2293
      %v2295 = vshrl.u32 %v2203, 16
      %v2297 = vor.u32 %v2295, %v2293
      %v2299 = vshll.u32 %v2204, 16
      %v2301 = vrot.slane %v2299, 1
      %v2302 = vsel %vm504, %v2297, %v2301
      %v2303 = vshrl.u32 %v2204, 16
      %v2305 = vor.u32 %v2303, %v2301
      %v2307 = vshll.u32 %v2205, 16
      %v2309 = vrot.slane %v2307, 1
      %v2310 = vsel %vm504, %v2305, %v2309
      %v2311 = vshrl.u32 %v2205, 16
      %v2313 = vor.u32 %v2311, %v2309
      %v2315 = vshll.u32 %v2206, 16
      %v2317 = vrot.slane %v2315, 1
      %v2318 = vsel %vm504, %v2313, %v2317
      %v2319 = vshrl.u32 %v2206, 16
      %v2321 = vor.u32 %v2319, %v2317
      %v2323 = vshll.u32 %v2207, 16
      %v2325 = vrot.slane %v2323, 1
      %v2326 = vsel %vm504, %v2321, %v2325
      %v2327 = vshrl.u32 %v2207, 16
      %v2329 = vor.u32 %v2327, %v2325
      %v2331 = vshll.u32 %v2208, 16
      %v2333 = vrot.slane %v2331, 1
      %v2334 = vsel %vm504, %v2329, %v2333
      %v2335 = vshrl.u32 %v2208, 16
      %v2337 = vor.u32 %v2335, %v2333
      %v2339 = vshll.u32 %v2209, 16
      %v2341 = vrot.slane %v2339, 1
      %v2342 = vsel %vm504, %v2337, %v2341
      %v2343 = vshrl.u32 %v2209, 16
      %v2345 = vor.u32 %v2343, %v2341
      %v2347 = vshll.u32 %v2210, 16
      %v2349 = vrot.slane %v2347, 1
      %v2350 = vsel %vm504, %v2345, %v2349
      %v2351 = vshrl.u32 %v2210, 16
      %v2353 = vor.u32 %v2351, %v2349
      %v2355 = vshll.u32 %v2211, 16
      %v2357 = vrot.slane %v2355, 1
      %v2358 = vsel %vm504, %v2353, %v2357
      %v2359 = vshrl.u32 %v2211, 16
      %v2361 = vor.u32 %v2359, %v2357
      %v2363 = vshll.u32 %v2212, 16
      %v2365 = vrot.slane %v2363, 1
      %v2366 = vsel %vm504, %v2361, %v2365
      %v2367 = vshrl.u32 %v2212, 16
      %v2369 = vor.u32 %v2367, %v2365
      %v2371 = vshll.u32 %v2213, 16
      %v2373 = vrot.slane %v2371, 1
      %v2374 = vsel %vm504, %v2369, %v2373
      %v2375 = vshrl.u32 %v2213, 16
      %v2377 = vor.u32 %v2375, %v2373
      %v2379 = vshll.u32 %v2214, 16
      %v2381 = vrot.slane %v2379, 1
      %v2382 = vsel %vm504, %v2377, %v2381
      %v2383 = vshrl.u32 %v2214, 16
      %v2385 = vor.u32 %v2383, %v2381
      %v2387 = vshll.u32 %v2215, 16
      %v2389 = vrot.slane %v2387, 1
      %v2390 = vsel %vm504, %v2385, %v2389
      %v2391 = vshrl.u32 %v2215, 16
      %v2393 = vor.u32 %v2391, %v2389
      %v2395 = vshll.u32 %v2218, 16
      %v2397 = vrot.slane %v2395, 1
      %v2398 = vsel %vm504, %v2393, %v2397
      %2399 = vrot.lane.b32.xlu0 %v2230, 4
      %v2400 = vpop.permute.xlu0 %2399
      %2401 = vrot.lane.b32.xlu0 %v2238, 4
      %v2402 = vpop.permute.xlu0 %2401
      %2403 = vrot.lane.b32.xlu0 %v2246, 4
      %v2404 = vpop.permute.xlu0 %2403
      %2405 = vrot.lane.b32.xlu0 %v2254, 4
      %v2406 = vpop.permute.xlu0 %2405
      %2407 = vrot.lane.b32.xlu0 %v2262, 4
      %v2408 = vpop.permute.xlu0 %2407
      %2409 = vrot.lane.b32.xlu0 %v2270, 4
      %v2410 = vpop.permute.xlu0 %2409
      %2411 = vrot.lane.b32.xlu0 %v2278, 4
      %v2412 = vpop.permute.xlu0 %2411
      %2413 = vrot.lane.b32.xlu0 %v2286, 4
      %v2414 = vpop.permute.xlu0 %2413
      %2415 = vrot.lane.b32.xlu0 %v2294, 4
      %v2416 = vpop.permute.xlu0 %2415
      %2417 = vrot.lane.b32.xlu0 %v2302, 4
      %v2418 = vpop.permute.xlu0 %2417
      %2419 = vrot.lane.b32.xlu0 %v2310, 4
      %v2420 = vpop.permute.xlu0 %2419
      %2421 = vrot.lane.b32.xlu0 %v2318, 4
      %v2422 = vpop.permute.xlu0 %2421
      %2423 = vrot.lane.b32.xlu0 %v2326, 4
      %v2424 = vpop.permute.xlu0 %2423
      %2425 = vrot.lane.b32.xlu0 %v2334, 4
      %v2426 = vpop.permute.xlu0 %2425
      %2427 = vrot.lane.b32.xlu0 %v2342, 4
      %v2428 = vpop.permute.xlu0 %2427
      %2429 = vrot.lane.b32.xlu0 %v2350, 4
      %v2430 = vpop.permute.xlu0 %2429
      %2431 = vrot.lane.b32.xlu0 %v2358, 4
      %v2432 = vpop.permute.xlu0 %2431
      %2433 = vrot.lane.b32.xlu0 %v2366, 4
      %v2434 = vpop.permute.xlu0 %2433
      %2435 = vrot.lane.b32.xlu0 %v2374, 4
      %v2436 = vpop.permute.xlu0 %2435
      %2437 = vrot.lane.b32.xlu0 %v2382, 4
      %v2438 = vpop.permute.xlu0 %2437
      %2439 = vrot.lane.b32.xlu0 %v2390, 4
      %v2440 = vpop.permute.xlu0 %2439
      %2441 = vrot.lane.b32.xlu0 %v2398, 4
      %v2442 = vpop.permute.xlu0 %2441
      %v2443 = vrot.slane %v2194, 1
      %v2444 = vrot.slane %v2195, 1
      %v2445 = vsel %vm687, %v2443, %v2444
      %v2446 = vrot.slane %v2196, 1
      %v2447 = vsel %vm687, %v2444, %v2446
      %v2448 = vrot.slane %v2197, 1
      %v2449 = vsel %vm687, %v2446, %v2448
      %v2450 = vrot.slane %v2198, 1
      %v2451 = vsel %vm687, %v2448, %v2450
      %v2452 = vrot.slane %v2199, 1
      %v2453 = vsel %vm687, %v2450, %v2452
      %v2454 = vrot.slane %v2200, 1
      %v2455 = vsel %vm687, %v2452, %v2454
      %v2456 = vrot.slane %v2201, 1
      %v2457 = vsel %vm687, %v2454, %v2456
      %v2458 = vrot.slane %v2202, 1
      %v2459 = vsel %vm687, %v2456, %v2458
      %v2460 = vrot.slane %v2203, 1
      %v2461 = vsel %vm687, %v2458, %v2460
      %v2462 = vrot.slane %v2204, 1
      %v2463 = vsel %vm687, %v2460, %v2462
      %v2464 = vrot.slane %v2205, 1
      %v2465 = vsel %vm687, %v2462, %v2464
      %v2466 = vrot.slane %v2206, 1
      %v2467 = vsel %vm687, %v2464, %v2466
      %v2468 = vrot.slane %v2207, 1
      %v2469 = vsel %vm687, %v2466, %v2468
      %v2470 = vrot.slane %v2208, 1
      %v2471 = vsel %vm687, %v2468, %v2470
      %v2472 = vrot.slane %v2209, 1
      %v2473 = vsel %vm687, %v2470, %v2472
      %v2474 = vrot.slane %v2210, 1
      %v2475 = vsel %vm687, %v2472, %v2474
      %v2476 = vrot.slane %v2211, 1
      %v2477 = vsel %vm687, %v2474, %v2476
      %v2478 = vrot.slane %v2212, 1
      %v2479 = vsel %vm687, %v2476, %v2478
      %v2480 = vrot.slane %v2213, 1
      %v2481 = vsel %vm687, %v2478, %v2480
      %v2482 = vrot.slane %v2214, 1
      %v2483 = vsel %vm687, %v2480, %v2482
      %v2484 = vrot.slane %v2215, 1
      %v2485 = vsel %vm687, %v2482, %v2484
      %v2486 = vrot.slane %v2218, 1
      %v2487 = vsel %vm687, %v2484, %v2486
      %2488 = vrot.lane.b32.xlu0 %v2445, 8
      %v2489 = vpop.permute.xlu0 %2488
      %2490 = vrot.lane.b32.xlu0 %v2447, 8
      %v2491 = vpop.permute.xlu0 %2490
      %2492 = vrot.lane.b32.xlu0 %v2449, 8
      %v2493 = vpop.permute.xlu0 %2492
      %2494 = vrot.lane.b32.xlu0 %v2451, 8
      %v2495 = vpop.permute.xlu0 %2494
      %2496 = vrot.lane.b32.xlu0 %v2453, 8
      %v2497 = vpop.permute.xlu0 %2496
      %2498 = vrot.lane.b32.xlu0 %v2455, 8
      %v2499 = vpop.permute.xlu0 %2498
      %2500 = vrot.lane.b32.xlu0 %v2457, 8
      %v2501 = vpop.permute.xlu0 %2500
      %2502 = vrot.lane.b32.xlu0 %v2459, 8
      %v2503 = vpop.permute.xlu0 %2502
      %2504 = vrot.lane.b32.xlu0 %v2461, 8
      %v2505 = vpop.permute.xlu0 %2504
      %2506 = vrot.lane.b32.xlu0 %v2463, 8
      %v2507 = vpop.permute.xlu0 %2506
      %2508 = vrot.lane.b32.xlu0 %v2465, 8
      %v2509 = vpop.permute.xlu0 %2508
      %2510 = vrot.lane.b32.xlu0 %v2467, 8
      %v2511 = vpop.permute.xlu0 %2510
      %2512 = vrot.lane.b32.xlu0 %v2469, 8
      %v2513 = vpop.permute.xlu0 %2512
      %2514 = vrot.lane.b32.xlu0 %v2471, 8
      %v2515 = vpop.permute.xlu0 %2514
      %2516 = vrot.lane.b32.xlu0 %v2473, 8
      %v2517 = vpop.permute.xlu0 %2516
      %2518 = vrot.lane.b32.xlu0 %v2475, 8
      %v2519 = vpop.permute.xlu0 %2518
      %2520 = vrot.lane.b32.xlu0 %v2477, 8
      %v2521 = vpop.permute.xlu0 %2520
      %2522 = vrot.lane.b32.xlu0 %v2479, 8
      %v2523 = vpop.permute.xlu0 %2522
      %2524 = vrot.lane.b32.xlu0 %v2481, 8
      %v2525 = vpop.permute.xlu0 %2524
      %2526 = vrot.lane.b32.xlu0 %v2483, 8
      %v2527 = vpop.permute.xlu0 %2526
      %2528 = vrot.lane.b32.xlu0 %v2485, 8
      %v2529 = vpop.permute.xlu0 %2528
      %2530 = vrot.lane.b32.xlu0 %v2487, 8
      %v2531 = vpop.permute.xlu0 %2530
      %v2535 = vunpack.c.l.b16 %v2045
      %v2536 = vunpack.c.l.b16 %v2046
      %v2537 = vunpack.c.l.b16 %v2047
      %v2538 = vpack.c.b16 %v2535, %v2217
      %v2539 = vpack.c.b16 %v2537, %v2536
      %2540 = vrot.lane.b32.xlu0 %v2196, 12
      %v2541 = vpop.permute.xlu0 %2540
      %2542 = vrot.lane.b32.xlu0 %v2197, 12
      %v2543 = vpop.permute.xlu0 %2542
      %2544 = vrot.lane.b32.xlu0 %v2198, 12
      %v2545 = vpop.permute.xlu0 %2544
      %2546 = vrot.lane.b32.xlu0 %v2199, 12
      %v2547 = vpop.permute.xlu0 %2546
      %2548 = vrot.lane.b32.xlu0 %v2200, 12
      %v2549 = vpop.permute.xlu0 %2548
      %2550 = vrot.lane.b32.xlu0 %v2201, 12
      %v2551 = vpop.permute.xlu0 %2550
      %2552 = vrot.lane.b32.xlu0 %v2202, 12
      %v2553 = vpop.permute.xlu0 %2552
      %2554 = vrot.lane.b32.xlu0 %v2203, 12
      %v2555 = vpop.permute.xlu0 %2554
      %2556 = vrot.lane.b32.xlu0 %v2204, 12
      %v2557 = vpop.permute.xlu0 %2556
      %2558 = vrot.lane.b32.xlu0 %v2205, 12
      %v2559 = vpop.permute.xlu0 %2558
      %2560 = vrot.lane.b32.xlu0 %v2206, 12
      %v2561 = vpop.permute.xlu0 %2560
      %2562 = vrot.lane.b32.xlu0 %v2207, 12
      %v2563 = vpop.permute.xlu0 %2562
      %2564 = vrot.lane.b32.xlu0 %v2208, 12
      %v2565 = vpop.permute.xlu0 %2564
      %2566 = vrot.lane.b32.xlu0 %v2209, 12
      %v2567 = vpop.permute.xlu0 %2566
      %2568 = vrot.lane.b32.xlu0 %v2210, 12
      %v2569 = vpop.permute.xlu0 %2568
      %2570 = vrot.lane.b32.xlu0 %v2211, 12
      %v2571 = vpop.permute.xlu0 %2570
      %2572 = vrot.lane.b32.xlu0 %v2212, 12
      %v2573 = vpop.permute.xlu0 %2572
      %2574 = vrot.lane.b32.xlu0 %v2213, 12
      %v2575 = vpop.permute.xlu0 %2574
      %2576 = vrot.lane.b32.xlu0 %v2214, 12
      %v2577 = vpop.permute.xlu0 %2576
      %2578 = vrot.lane.b32.xlu0 %v2215, 12
      %v2579 = vpop.permute.xlu0 %2578
      %2580 = vrot.lane.b32.xlu0 %v2538, 12
      %v2581 = vpop.permute.xlu0 %2580
      %2582 = vrot.lane.b32.xlu0 %v2539, 12
      %v2583 = vpop.permute.xlu0 %2582
      %v2585 = vunpack.c.l.b16 %v2048
      %v2586 = vpack.c.b16 %v2585, %v2585
      %v2588 = vshll.u32 %v2538, 16
      %v2590 = vrot.slane %v2588, 1
      %v2591 = vsel %vm504, %v2393, %v2590
      %v2592 = vshrl.u32 %v2538, 16
      %v2594 = vor.u32 %v2592, %v2590
      %v2596 = vshll.u32 %v2539, 16
      %v2598 = vrot.slane %v2596, 1
      %v2599 = vsel %vm504, %v2594, %v2598
      %v2600 = vshrl.u32 %v2539, 16
      %v2602 = vor.u32 %v2600, %v2598
      %v2604 = vshll.u32 %v2586, 16
      %v2606 = vrot.slane %v2604, 1
      %v2607 = vsel %vm504, %v2602, %v2606
      %2608 = vrot.lane.b32.xlu0 %v2246, 16
      %v2609 = vpop.permute.xlu0 %2608
      %2610 = vrot.lane.b32.xlu0 %v2254, 16
      %v2611 = vpop.permute.xlu0 %2610
      %2612 = vrot.lane.b32.xlu0 %v2262, 16
      %v2613 = vpop.permute.xlu0 %2612
      %2614 = vrot.lane.b32.xlu0 %v2270, 16
      %v2615 = vpop.permute.xlu0 %2614
      %2616 = vrot.lane.b32.xlu0 %v2278, 16
      %v2617 = vpop.permute.xlu0 %2616
      %2618 = vrot.lane.b32.xlu0 %v2286, 16
      %v2619 = vpop.permute.xlu0 %2618
      %2620 = vrot.lane.b32.xlu0 %v2294, 16
      %v2621 = vpop.permute.xlu0 %2620
      %2622 = vrot.lane.b32.xlu0 %v2302, 16
      %v2623 = vpop.permute.xlu0 %2622
      %2624 = vrot.lane.b32.xlu0 %v2310, 16
      %v2625 = vpop.permute.xlu0 %2624
      %2626 = vrot.lane.b32.xlu0 %v2318, 16
      %v2627 = vpop.permute.xlu0 %2626
      %2628 = vrot.lane.b32.xlu0 %v2326, 16
      %v2629 = vpop.permute.xlu0 %2628
      %2630 = vrot.lane.b32.xlu0 %v2334, 16
      %v2631 = vpop.permute.xlu0 %2630
      %2632 = vrot.lane.b32.xlu0 %v2342, 16
      %v2633 = vpop.permute.xlu0 %2632
      %2634 = vrot.lane.b32.xlu0 %v2350, 16
      %v2635 = vpop.permute.xlu0 %2634
      %2636 = vrot.lane.b32.xlu0 %v2358, 16
      %v2637 = vpop.permute.xlu0 %2636
      %2638 = vrot.lane.b32.xlu0 %v2366, 16
      %v2639 = vpop.permute.xlu0 %2638
      %2640 = vrot.lane.b32.xlu0 %v2374, 16
      %v2641 = vpop.permute.xlu0 %2640
      %2642 = vrot.lane.b32.xlu0 %v2382, 16
      %v2643 = vpop.permute.xlu0 %2642
      %2644 = vrot.lane.b32.xlu0 %v2390, 16
      %v2645 = vpop.permute.xlu0 %2644
      %2646 = vrot.lane.b32.xlu0 %v2591, 16
      %v2647 = vpop.permute.xlu0 %2646
      %2648 = vrot.lane.b32.xlu0 %v2599, 16
      %v2649 = vpop.permute.xlu0 %2648
      %2650 = vrot.lane.b32.xlu0 %v2607, 16
      %v2651 = vpop.permute.xlu0 %2650
      %v2652 = vrot.slane %v2538, 1
      %v2653 = vsel %vm687, %v2484, %v2652
      %v2654 = vrot.slane %v2539, 1
      %v2655 = vsel %vm687, %v2652, %v2654
      %v2656 = vrot.slane %v2586, 1
      %v2657 = vsel %vm687, %v2654, %v2656
      %2658 = vrot.lane.b32.xlu0 %v2449, 20
      %v2659 = vpop.permute.xlu0 %2658
      %2660 = vrot.lane.b32.xlu0 %v2451, 20
      %v2661 = vpop.permute.xlu0 %2660
      %2662 = vrot.lane.b32.xlu0 %v2453, 20
      %v2663 = vpop.permute.xlu0 %2662
      %2664 = vrot.lane.b32.xlu0 %v2455, 20
      %v2665 = vpop.permute.xlu0 %2664
      %2666 = vrot.lane.b32.xlu0 %v2457, 20
      %v2667 = vpop.permute.xlu0 %2666
      %2668 = vrot.lane.b32.xlu0 %v2459, 20
      %v2669 = vpop.permute.xlu0 %2668
      %2670 = vrot.lane.b32.xlu0 %v2461, 20
      %v2671 = vpop.permute.xlu0 %2670
      %2672 = vrot.lane.b32.xlu0 %v2463, 20
      %v2673 = vpop.permute.xlu0 %2672
      %2674 = vrot.lane.b32.xlu0 %v2465, 20
      %v2675 = vpop.permute.xlu0 %2674
      %2676 = vrot.lane.b32.xlu0 %v2467, 20
      %v2677 = vpop.permute.xlu0 %2676
      %2678 = vrot.lane.b32.xlu0 %v2469, 20
      %v2679 = vpop.permute.xlu0 %2678
      %2680 = vrot.lane.b32.xlu0 %v2471, 20
      %v2681 = vpop.permute.xlu0 %2680
      %2682 = vrot.lane.b32.xlu0 %v2473, 20
      %v2683 = vpop.permute.xlu0 %2682
      %2684 = vrot.lane.b32.xlu0 %v2475, 20
      %v2685 = vpop.permute.xlu0 %2684
      %2686 = vrot.lane.b32.xlu0 %v2477, 20
      %v2687 = vpop.permute.xlu0 %2686
      %2688 = vrot.lane.b32.xlu0 %v2479, 20
      %v2689 = vpop.permute.xlu0 %2688
      %2690 = vrot.lane.b32.xlu0 %v2481, 20
      %v2691 = vpop.permute.xlu0 %2690
      %2692 = vrot.lane.b32.xlu0 %v2483, 20
      %v2693 = vpop.permute.xlu0 %2692
      %2694 = vrot.lane.b32.xlu0 %v2485, 20
      %v2695 = vpop.permute.xlu0 %2694
      %2696 = vrot.lane.b32.xlu0 %v2653, 20
      %v2697 = vpop.permute.xlu0 %2696
      %2698 = vrot.lane.b32.xlu0 %v2655, 20
      %v2699 = vpop.permute.xlu0 %2698
      %2700 = vrot.lane.b32.xlu0 %v2657, 20
      %v2701 = vpop.permute.xlu0 %2700
      %v2705 = vunpack.c.l.b16 %v2049
      %v2706 = vunpack.c.l.b16 %v2050
      %v2707 = vunpack.c.l.b16 %v2051
      %v2708 = vpack.c.b16 %v2705, %v2585
      %v2709 = vpack.c.b16 %v2707, %v2706
      %2710 = vrot.lane.b32.xlu0 %v2198, 24
      %v2711 = vpop.permute.xlu0 %2710
      %2712 = vrot.lane.b32.xlu0 %v2199, 24
      %v2713 = vpop.permute.xlu0 %2712
      %2714 = vrot.lane.b32.xlu0 %v2200, 24
      %v2715 = vpop.permute.xlu0 %2714
      %2716 = vrot.lane.b32.xlu0 %v2201, 24
      %v2717 = vpop.permute.xlu0 %2716
      %2718 = vrot.lane.b32.xlu0 %v2202, 24
      %v2719 = vpop.permute.xlu0 %2718
      %2720 = vrot.lane.b32.xlu0 %v2203, 24
      %v2721 = vpop.permute.xlu0 %2720
      %2722 = vrot.lane.b32.xlu0 %v2204, 24
      %v2723 = vpop.permute.xlu0 %2722
      %2724 = vrot.lane.b32.xlu0 %v2205, 24
      %v2725 = vpop.permute.xlu0 %2724
      %2726 = vrot.lane.b32.xlu0 %v2206, 24
      %v2727 = vpop.permute.xlu0 %2726
      %2728 = vrot.lane.b32.xlu0 %v2207, 24
      %v2729 = vpop.permute.xlu0 %2728
      %2730 = vrot.lane.b32.xlu0 %v2208, 24
      %v2731 = vpop.permute.xlu0 %2730
      %2732 = vrot.lane.b32.xlu0 %v2209, 24
      %v2733 = vpop.permute.xlu0 %2732
      %2734 = vrot.lane.b32.xlu0 %v2210, 24
      %v2735 = vpop.permute.xlu0 %2734
      %2736 = vrot.lane.b32.xlu0 %v2211, 24
      %v2737 = vpop.permute.xlu0 %2736
      %2738 = vrot.lane.b32.xlu0 %v2212, 24
      %v2739 = vpop.permute.xlu0 %2738
      %2740 = vrot.lane.b32.xlu0 %v2213, 24
      %v2741 = vpop.permute.xlu0 %2740
      %2742 = vrot.lane.b32.xlu0 %v2214, 24
      %v2743 = vpop.permute.xlu0 %2742
      %2744 = vrot.lane.b32.xlu0 %v2215, 24
      %v2745 = vpop.permute.xlu0 %2744
      %2746 = vrot.lane.b32.xlu0 %v2538, 24
      %v2747 = vpop.permute.xlu0 %2746
      %2748 = vrot.lane.b32.xlu0 %v2539, 24
      %v2749 = vpop.permute.xlu0 %2748
      %2750 = vrot.lane.b32.xlu0 %v2708, 24
      %v2751 = vpop.permute.xlu0 %2750
      %2752 = vrot.lane.b32.xlu0 %v2709, 24
      %v2753 = vpop.permute.xlu0 %2752
      %v2755 = vunpack.c.l.b16 %v2052
      %v2756 = vpack.c.b16 %v2755, %v2755
      %v2758 = vshll.u32 %v2708, 16
      %v2760 = vrot.slane %v2758, 1
      %v2761 = vsel %vm504, %v2602, %v2760
      %v2762 = vshrl.u32 %v2708, 16
      %v2764 = vor.u32 %v2762, %v2760
      %v2766 = vshll.u32 %v2709, 16
      %v2768 = vrot.slane %v2766, 1
      %v2769 = vsel %vm504, %v2764, %v2768
      %v2770 = vshrl.u32 %v2709, 16
      %v2772 = vor.u32 %v2770, %v2768
      %v2774 = vshll.u32 %v2756, 16
      %v2776 = vrot.slane %v2774, 1
      %v2777 = vsel %vm504, %v2772, %v2776
      %2778 = vrot.lane.b32.xlu0 %v2262, 28
      %v2779 = vpop.permute.xlu0 %2778
      %2780 = vrot.lane.b32.xlu0 %v2270, 28
      %v2781 = vpop.permute.xlu0 %2780
      %2782 = vrot.lane.b32.xlu0 %v2278, 28
      %v2783 = vpop.permute.xlu0 %2782
      %2784 = vrot.lane.b32.xlu0 %v2286, 28
      %v2785 = vpop.permute.xlu0 %2784
      %2786 = vrot.lane.b32.xlu0 %v2294, 28
      %v2787 = vpop.permute.xlu0 %2786
      %2788 = vrot.lane.b32.xlu0 %v2302, 28
      %v2789 = vpop.permute.xlu0 %2788
      %2790 = vrot.lane.b32.xlu0 %v2310, 28
      %v2791 = vpop.permute.xlu0 %2790
      %2792 = vrot.lane.b32.xlu0 %v2318, 28
      %v2793 = vpop.permute.xlu0 %2792
      %2794 = vrot.lane.b32.xlu0 %v2326, 28
      %v2795 = vpop.permute.xlu0 %2794
      %2796 = vrot.lane.b32.xlu0 %v2334, 28
      %v2797 = vpop.permute.xlu0 %2796
      %2798 = vrot.lane.b32.xlu0 %v2342, 28
      %v2799 = vpop.permute.xlu0 %2798
      %2800 = vrot.lane.b32.xlu0 %v2350, 28
      %v2801 = vpop.permute.xlu0 %2800
      %2802 = vrot.lane.b32.xlu0 %v2358, 28
      %v2803 = vpop.permute.xlu0 %2802
      %2804 = vrot.lane.b32.xlu0 %v2366, 28
      %v2805 = vpop.permute.xlu0 %2804
      %2806 = vrot.lane.b32.xlu0 %v2374, 28
      %v2807 = vpop.permute.xlu0 %2806
      %2808 = vrot.lane.b32.xlu0 %v2382, 28
      %v2809 = vpop.permute.xlu0 %2808
      %2810 = vrot.lane.b32.xlu0 %v2390, 28
      %v2811 = vpop.permute.xlu0 %2810
      %2812 = vrot.lane.b32.xlu0 %v2591, 28
      %v2813 = vpop.permute.xlu0 %2812
      %2814 = vrot.lane.b32.xlu0 %v2599, 28
      %v2815 = vpop.permute.xlu0 %2814
      %2816 = vrot.lane.b32.xlu0 %v2761, 28
      %v2817 = vpop.permute.xlu0 %2816
      %2818 = vrot.lane.b32.xlu0 %v2769, 28
      %v2819 = vpop.permute.xlu0 %2818
      %2820 = vrot.lane.b32.xlu0 %v2777, 28
      %v2821 = vpop.permute.xlu0 %2820
      %v2822 = vrot.slane %v2708, 1
      %v2823 = vsel %vm687, %v2654, %v2822
      %v2824 = vrot.slane %v2709, 1
      %v2825 = vsel %vm687, %v2822, %v2824
      %v2826 = vrot.slane %v2756, 1
      %v2827 = vsel %vm687, %v2824, %v2826
      %2828 = vrot.lane.b32.xlu0 %v2453, 32
      %v2829 = vpop.permute.xlu0 %2828
      %2830 = vrot.lane.b32.xlu0 %v2455, 32
      %v2831 = vpop.permute.xlu0 %2830
      %2832 = vrot.lane.b32.xlu0 %v2457, 32
      %v2833 = vpop.permute.xlu0 %2832
      %2834 = vrot.lane.b32.xlu0 %v2459, 32
      %v2835 = vpop.permute.xlu0 %2834
      %2836 = vrot.lane.b32.xlu0 %v2461, 32
      %v2837 = vpop.permute.xlu0 %2836
      %2838 = vrot.lane.b32.xlu0 %v2463, 32
      %v2839 = vpop.permute.xlu0 %2838
      %2840 = vrot.lane.b32.xlu0 %v2465, 32
      %v2841 = vpop.permute.xlu0 %2840
      %2842 = vrot.lane.b32.xlu0 %v2467, 32
      %v2843 = vpop.permute.xlu0 %2842
      %2844 = vrot.lane.b32.xlu0 %v2469, 32
      %v2845 = vpop.permute.xlu0 %2844
      %2846 = vrot.lane.b32.xlu0 %v2471, 32
      %v2847 = vpop.permute.xlu0 %2846
      %2848 = vrot.lane.b32.xlu0 %v2473, 32
      %v2849 = vpop.permute.xlu0 %2848
      %2850 = vrot.lane.b32.xlu0 %v2475, 32
      %v2851 = vpop.permute.xlu0 %2850
      %2852 = vrot.lane.b32.xlu0 %v2477, 32
      %v2853 = vpop.permute.xlu0 %2852
      %2854 = vrot.lane.b32.xlu0 %v2479, 32
      %v2855 = vpop.permute.xlu0 %2854
      %2856 = vrot.lane.b32.xlu0 %v2481, 32
      %v2857 = vpop.permute.xlu0 %2856
      %2858 = vrot.lane.b32.xlu0 %v2483, 32
      %v2859 = vpop.permute.xlu0 %2858
      %2860 = vrot.lane.b32.xlu0 %v2485, 32
      %v2861 = vpop.permute.xlu0 %2860
      %2862 = vrot.lane.b32.xlu0 %v2653, 32
      %v2863 = vpop.permute.xlu0 %2862
      %2864 = vrot.lane.b32.xlu0 %v2655, 32
      %v2865 = vpop.permute.xlu0 %2864
      %2866 = vrot.lane.b32.xlu0 %v2823, 32
      %v2867 = vpop.permute.xlu0 %2866
      %2868 = vrot.lane.b32.xlu0 %v2825, 32
      %v2869 = vpop.permute.xlu0 %2868
      %2870 = vrot.lane.b32.xlu0 %v2827, 32
      %v2871 = vpop.permute.xlu0 %2870
      %v2916 = vunpack.c.l.b16 %v2053
      %v2917 = vunpack.c.l.b16 %v2054
      %v2918 = vunpack.c.l.b16 %v2055
      %v2919 = vunpack.c.l.b16 %v2056
      %v2920 = vunpack.c.l.b16 %v2057
      %v2921 = vunpack.c.l.b16 %v2058
      %v2922 = vunpack.c.l.b16 %v2059
      %v2923 = vunpack.c.l.b16 %v2060
      %v2924 = vunpack.c.l.b16 %v2061
      %v2925 = vunpack.c.l.b16 %v2062
      %v2926 = vunpack.c.l.b16 %v2063
      %v2927 = vunpack.c.l.b16 %v2064
      %v2928 = vunpack.c.l.b16 %v2065
      %v2929 = vunpack.c.l.b16 %v2066
      %v2930 = vunpack.c.l.b16 %v2067
      %v2931 = vunpack.c.l.b16 %v2068
      %v2932 = vunpack.c.l.b16 %v2069
      %v2933 = vunpack.c.l.b16 %v2070
      %v2934 = vunpack.c.l.b16 %v2071
      %v2935 = vunpack.c.l.b16 %v2072
      %v2936 = vunpack.c.l.b16 %v2073
      %v2937 = vunpack.c.l.b16 %v2074
      %v2938 = vunpack.c.l.b16 %v2075
      %v2939 = vunpack.c.l.b16 %v2076
      %v2940 = vunpack.c.l.b16 %v2077
      %v2941 = vunpack.c.l.b16 %v2078
      %v2942 = vunpack.c.l.b16 %v2079
      %v2943 = vunpack.c.l.b16 %v2080
      %v2944 = vunpack.c.l.b16 %v2081
      %v2945 = vunpack.c.l.b16 %v2082
      %v2946 = vunpack.c.l.b16 %v2083
      %v2947 = vunpack.c.l.b16 %v2084
      %v2948 = vunpack.c.l.b16 %v2085
      %v2949 = vunpack.c.l.b16 %v2086
      %v2950 = vunpack.c.l.b16 %v2087
      %v2951 = vunpack.c.l.b16 %v2088
      %v2952 = vunpack.c.l.b16 %v2089
      %v2953 = vunpack.c.l.b16 %v2090
      %v2954 = vunpack.c.l.b16 %v2091
      %v2955 = vunpack.c.l.b16 %v2092
      %v2956 = vunpack.c.l.b16 %v2093
      %v2957 = vunpack.c.l.b16 %v2094
      %v2958 = vunpack.c.l.b16 %v2095
      %v2959 = vunpack.c.l.b16 %v2096
      %v2960 = vpack.c.b16 %v2917, %v2916
      %v2961 = vpack.c.b16 %v2919, %v2918
      %v2962 = vpack.c.b16 %v2921, %v2920
      %v2963 = vpack.c.b16 %v2923, %v2922
      %v2964 = vpack.c.b16 %v2925, %v2924
      %v2965 = vpack.c.b16 %v2927, %v2926
      %v2966 = vpack.c.b16 %v2929, %v2928
      %v2967 = vpack.c.b16 %v2931, %v2930
      %v2968 = vpack.c.b16 %v2933, %v2932
      %v2969 = vpack.c.b16 %v2935, %v2934
      %v2970 = vpack.c.b16 %v2937, %v2936
      %v2971 = vpack.c.b16 %v2939, %v2938
      %v2972 = vpack.c.b16 %v2941, %v2940
      %v2973 = vpack.c.b16 %v2943, %v2942
      %v2974 = vpack.c.b16 %v2945, %v2944
      %v2975 = vpack.c.b16 %v2947, %v2946
      %v2976 = vpack.c.b16 %v2949, %v2948
      %v2977 = vpack.c.b16 %v2951, %v2950
      %v2978 = vpack.c.b16 %v2953, %v2952
      %v2979 = vpack.c.b16 %v2955, %v2954
      %v2980 = vpack.c.b16 %v2957, %v2956
      %v2981 = vpack.c.b16 %v2959, %v2958
      %2982 = vrot.lane.b32.xlu0 %v2960, 36
      %v2983 = vpop.permute.xlu0 %2982
      %2984 = vrot.lane.b32.xlu0 %v2961, 36
      %v2985 = vpop.permute.xlu0 %2984
      %2986 = vrot.lane.b32.xlu0 %v2962, 36
      %v2987 = vpop.permute.xlu0 %2986
      %2988 = vrot.lane.b32.xlu0 %v2963, 36
      %v2989 = vpop.permute.xlu0 %2988
      %2990 = vrot.lane.b32.xlu0 %v2964, 36
      %v2991 = vpop.permute.xlu0 %2990
      %2992 = vrot.lane.b32.xlu0 %v2965, 36
      %v2993 = vpop.permute.xlu0 %2992
      %2994 = vrot.lane.b32.xlu0 %v2966, 36
      %v2995 = vpop.permute.xlu0 %2994
      %2996 = vrot.lane.b32.xlu0 %v2967, 36
      %v2997 = vpop.permute.xlu0 %2996
      %2998 = vrot.lane.b32.xlu0 %v2968, 36
      %v2999 = vpop.permute.xlu0 %2998
      %3000 = vrot.lane.b32.xlu0 %v2969, 36
      %v3001 = vpop.permute.xlu0 %3000
      %3002 = vrot.lane.b32.xlu0 %v2970, 36
      %v3003 = vpop.permute.xlu0 %3002
      %3004 = vrot.lane.b32.xlu0 %v2971, 36
      %v3005 = vpop.permute.xlu0 %3004
      %3006 = vrot.lane.b32.xlu0 %v2972, 36
      %v3007 = vpop.permute.xlu0 %3006
      %3008 = vrot.lane.b32.xlu0 %v2973, 36
      %v3009 = vpop.permute.xlu0 %3008
      %3010 = vrot.lane.b32.xlu0 %v2974, 36
      %v3011 = vpop.permute.xlu0 %3010
      %3012 = vrot.lane.b32.xlu0 %v2975, 36
      %v3013 = vpop.permute.xlu0 %3012
      %3014 = vrot.lane.b32.xlu0 %v2976, 36
      %v3015 = vpop.permute.xlu0 %3014
      %3016 = vrot.lane.b32.xlu0 %v2977, 36
      %v3017 = vpop.permute.xlu0 %3016
      %3018 = vrot.lane.b32.xlu0 %v2978, 36
      %v3019 = vpop.permute.xlu0 %3018
      %3020 = vrot.lane.b32.xlu0 %v2979, 36
      %v3021 = vpop.permute.xlu0 %3020
      %3022 = vrot.lane.b32.xlu0 %v2980, 36
      %v3023 = vpop.permute.xlu0 %3022
      %3024 = vrot.lane.b32.xlu0 %v2981, 36
      %v3025 = vpop.permute.xlu0 %3024
      %v3027 = vunpack.c.l.b16 %v2097
      %v3028 = vpack.c.b16 %v3027, %v3027
      %v3030 = vshrl.u32 %v2960, 16
      %v3032 = vshll.u32 %v2960, 16
      %v3034 = vrot.slane %v3032, 1
      %v3035 = vor.u32 %v3030, %v3034
      %v3037 = vshll.u32 %v2961, 16
      %v3039 = vrot.slane %v3037, 1
      %v3040 = vsel %vm504, %v3035, %v3039
      %v3041 = vshrl.u32 %v2961, 16
      %v3043 = vor.u32 %v3041, %v3039
      %v3045 = vshll.u32 %v2962, 16
      %v3047 = vrot.slane %v3045, 1
      %v3048 = vsel %vm504, %v3043, %v3047
      %v3049 = vshrl.u32 %v2962, 16
      %v3051 = vor.u32 %v3049, %v3047
      %v3053 = vshll.u32 %v2963, 16
      %v3055 = vrot.slane %v3053, 1
      %v3056 = vsel %vm504, %v3051, %v3055
      %v3057 = vshrl.u32 %v2963, 16
      %v3059 = vor.u32 %v3057, %v3055
      %v3061 = vshll.u32 %v2964, 16
      %v3063 = vrot.slane %v3061, 1
      %v3064 = vsel %vm504, %v3059, %v3063
      %v3065 = vshrl.u32 %v2964, 16
      %v3067 = vor.u32 %v3065, %v3063
      %v3069 = vshll.u32 %v2965, 16
      %v3071 = vrot.slane %v3069, 1
      %v3072 = vsel %vm504, %v3067, %v3071
      %v3073 = vshrl.u32 %v2965, 16
      %v3075 = vor.u32 %v3073, %v3071
      %v3077 = vshll.u32 %v2966, 16
      %v3079 = vrot.slane %v3077, 1
      %v3080 = vsel %vm504, %v3075, %v3079
      %v3081 = vshrl.u32 %v2966, 16
      %v3083 = vor.u32 %v3081, %v3079
      %v3085 = vshll.u32 %v2967, 16
      %v3087 = vrot.slane %v3085, 1
      %v3088 = vsel %vm504, %v3083, %v3087
      %v3089 = vshrl.u32 %v2967, 16
      %v3091 = vor.u32 %v3089, %v3087
      %v3093 = vshll.u32 %v2968, 16
      %v3095 = vrot.slane %v3093, 1
      %v3096 = vsel %vm504, %v3091, %v3095
      %v3097 = vshrl.u32 %v2968, 16
      %v3099 = vor.u32 %v3097, %v3095
      %v3101 = vshll.u32 %v2969, 16
      %v3103 = vrot.slane %v3101, 1
      %v3104 = vsel %vm504, %v3099, %v3103
      %v3105 = vshrl.u32 %v2969, 16
      %v3107 = vor.u32 %v3105, %v3103
      %v3109 = vshll.u32 %v2970, 16
      %v3111 = vrot.slane %v3109, 1
      %v3112 = vsel %vm504, %v3107, %v3111
      %v3113 = vshrl.u32 %v2970, 16
      %v3115 = vor.u32 %v3113, %v3111
      %v3117 = vshll.u32 %v2971, 16
      %v3119 = vrot.slane %v3117, 1
      %v3120 = vsel %vm504, %v3115, %v3119
      %v3121 = vshrl.u32 %v2971, 16
      %v3123 = vor.u32 %v3121, %v3119
      %v3125 = vshll.u32 %v2972, 16
      %v3127 = vrot.slane %v3125, 1
      %v3128 = vsel %vm504, %v3123, %v3127
      %v3129 = vshrl.u32 %v2972, 16
      %v3131 = vor.u32 %v3129, %v3127
      %v3133 = vshll.u32 %v2973, 16
      %v3135 = vrot.slane %v3133, 1
      %v3136 = vsel %vm504, %v3131, %v3135
      %v3137 = vshrl.u32 %v2973, 16
      %v3139 = vor.u32 %v3137, %v3135
      %v3141 = vshll.u32 %v2974, 16
      %v3143 = vrot.slane %v3141, 1
      %v3144 = vsel %vm504, %v3139, %v3143
      %v3145 = vshrl.u32 %v2974, 16
      %v3147 = vor.u32 %v3145, %v3143
      %v3149 = vshll.u32 %v2975, 16
      %v3151 = vrot.slane %v3149, 1
      %v3152 = vsel %vm504, %v3147, %v3151
      %v3153 = vshrl.u32 %v2975, 16
      %v3155 = vor.u32 %v3153, %v3151
      %v3157 = vshll.u32 %v2976, 16
      %v3159 = vrot.slane %v3157, 1
      %v3160 = vsel %vm504, %v3155, %v3159
      %v3161 = vshrl.u32 %v2976, 16
      %v3163 = vor.u32 %v3161, %v3159
      %v3165 = vshll.u32 %v2977, 16
      %v3167 = vrot.slane %v3165, 1
      %v3168 = vsel %vm504, %v3163, %v3167
      %v3169 = vshrl.u32 %v2977, 16
      %v3171 = vor.u32 %v3169, %v3167
      %v3173 = vshll.u32 %v2978, 16
      %v3175 = vrot.slane %v3173, 1
      %v3176 = vsel %vm504, %v3171, %v3175
      %v3177 = vshrl.u32 %v2978, 16
      %v3179 = vor.u32 %v3177, %v3175
      %v3181 = vshll.u32 %v2979, 16
      %v3183 = vrot.slane %v3181, 1
      %v3184 = vsel %vm504, %v3179, %v3183
      %v3185 = vshrl.u32 %v2979, 16
      %v3187 = vor.u32 %v3185, %v3183
      %v3189 = vshll.u32 %v2980, 16
      %v3191 = vrot.slane %v3189, 1
      %v3192 = vsel %vm504, %v3187, %v3191
      %v3193 = vshrl.u32 %v2980, 16
      %v3195 = vor.u32 %v3193, %v3191
      %v3197 = vshll.u32 %v2981, 16
      %v3199 = vrot.slane %v3197, 1
      %v3200 = vsel %vm504, %v3195, %v3199
      %v3201 = vshrl.u32 %v2981, 16
      %v3203 = vor.u32 %v3201, %v3199
      %v3205 = vshll.u32 %v3028, 16
      %v3207 = vrot.slane %v3205, 1
      %v3208 = vsel %vm504, %v3203, %v3207
      %3209 = vrot.lane.b32.xlu0 %v3040, 40
      %v3210 = vpop.permute.xlu0 %3209
      %3211 = vrot.lane.b32.xlu0 %v3048, 40
      %v3212 = vpop.permute.xlu0 %3211
      %3213 = vrot.lane.b32.xlu0 %v3056, 40
      %v3214 = vpop.permute.xlu0 %3213
      %3215 = vrot.lane.b32.xlu0 %v3064, 40
      %v3216 = vpop.permute.xlu0 %3215
      %3217 = vrot.lane.b32.xlu0 %v3072, 40
      %v3218 = vpop.permute.xlu0 %3217
      %3219 = vrot.lane.b32.xlu0 %v3080, 40
      %v3220 = vpop.permute.xlu0 %3219
      %3221 = vrot.lane.b32.xlu0 %v3088, 40
      %v3222 = vpop.permute.xlu0 %3221
      %3223 = vrot.lane.b32.xlu0 %v3096, 40
      %v3224 = vpop.permute.xlu0 %3223
      %3225 = vrot.lane.b32.xlu0 %v3104, 40
      %v3226 = vpop.permute.xlu0 %3225
      %3227 = vrot.lane.b32.xlu0 %v3112, 40
      %v3228 = vpop.permute.xlu0 %3227
      %3229 = vrot.lane.b32.xlu0 %v3120, 40
      %v3230 = vpop.permute.xlu0 %3229
      %3231 = vrot.lane.b32.xlu0 %v3128, 40
      %v3232 = vpop.permute.xlu0 %3231
      %3233 = vrot.lane.b32.xlu0 %v3136, 40
      %v3234 = vpop.permute.xlu0 %3233
      %3235 = vrot.lane.b32.xlu0 %v3144, 40
      %v3236 = vpop.permute.xlu0 %3235
      %3237 = vrot.lane.b32.xlu0 %v3152, 40
      %v3238 = vpop.permute.xlu0 %3237
      %3239 = vrot.lane.b32.xlu0 %v3160, 40
      %v3240 = vpop.permute.xlu0 %3239
      %3241 = vrot.lane.b32.xlu0 %v3168, 40
      %v3242 = vpop.permute.xlu0 %3241
      %3243 = vrot.lane.b32.xlu0 %v3176, 40
      %v3244 = vpop.permute.xlu0 %3243
      %3245 = vrot.lane.b32.xlu0 %v3184, 40
      %v3246 = vpop.permute.xlu0 %3245
      %3247 = vrot.lane.b32.xlu0 %v3192, 40
      %v3248 = vpop.permute.xlu0 %3247
      %3249 = vrot.lane.b32.xlu0 %v3200, 40
      %v3250 = vpop.permute.xlu0 %3249
      %3251 = vrot.lane.b32.xlu0 %v3208, 40
      %v3252 = vpop.permute.xlu0 %3251
      %v3253 = vrot.slane %v2960, 1
      %v3254 = vrot.slane %v2961, 1
      %v3255 = vsel %vm687, %v3253, %v3254
      %v3256 = vrot.slane %v2962, 1
      %v3257 = vsel %vm687, %v3254, %v3256
      %v3258 = vrot.slane %v2963, 1
      %v3259 = vsel %vm687, %v3256, %v3258
      %v3260 = vrot.slane %v2964, 1
      %v3261 = vsel %vm687, %v3258, %v3260
      %v3262 = vrot.slane %v2965, 1
      %v3263 = vsel %vm687, %v3260, %v3262
      %v3264 = vrot.slane %v2966, 1
      %v3265 = vsel %vm687, %v3262, %v3264
      %v3266 = vrot.slane %v2967, 1
      %v3267 = vsel %vm687, %v3264, %v3266
      %v3268 = vrot.slane %v2968, 1
      %v3269 = vsel %vm687, %v3266, %v3268
      %v3270 = vrot.slane %v2969, 1
      %v3271 = vsel %vm687, %v3268, %v3270
      %v3272 = vrot.slane %v2970, 1
      %v3273 = vsel %vm687, %v3270, %v3272
      %v3274 = vrot.slane %v2971, 1
      %v3275 = vsel %vm687, %v3272, %v3274
      %v3276 = vrot.slane %v2972, 1
      %v3277 = vsel %vm687, %v3274, %v3276
      %v3278 = vrot.slane %v2973, 1
      %v3279 = vsel %vm687, %v3276, %v3278
      %v3280 = vrot.slane %v2974, 1
      %v3281 = vsel %vm687, %v3278, %v3280
      %v3282 = vrot.slane %v2975, 1
      %v3283 = vsel %vm687, %v3280, %v3282
      %v3284 = vrot.slane %v2976, 1
      %v3285 = vsel %vm687, %v3282, %v3284
      %v3286 = vrot.slane %v2977, 1
      %v3287 = vsel %vm687, %v3284, %v3286
      %v3288 = vrot.slane %v2978, 1
      %v3289 = vsel %vm687, %v3286, %v3288
      %v3290 = vrot.slane %v2979, 1
      %v3291 = vsel %vm687, %v3288, %v3290
      %v3292 = vrot.slane %v2980, 1
      %v3293 = vsel %vm687, %v3290, %v3292
      %v3294 = vrot.slane %v2981, 1
      %v3295 = vsel %vm687, %v3292, %v3294
      %v3296 = vrot.slane %v3028, 1
      %v3297 = vsel %vm687, %v3294, %v3296
      %3298 = vrot.lane.b32.xlu0 %v3255, 44
      %v3299 = vpop.permute.xlu0 %3298
      %3300 = vrot.lane.b32.xlu0 %v3257, 44
      %v3301 = vpop.permute.xlu0 %3300
      %3302 = vrot.lane.b32.xlu0 %v3259, 44
      %v3303 = vpop.permute.xlu0 %3302
      %3304 = vrot.lane.b32.xlu0 %v3261, 44
      %v3305 = vpop.permute.xlu0 %3304
      %3306 = vrot.lane.b32.xlu0 %v3263, 44
      %v3307 = vpop.permute.xlu0 %3306
      %3308 = vrot.lane.b32.xlu0 %v3265, 44
      %v3309 = vpop.permute.xlu0 %3308
      %3310 = vrot.lane.b32.xlu0 %v3267, 44
      %v3311 = vpop.permute.xlu0 %3310
      %3312 = vrot.lane.b32.xlu0 %v3269, 44
      %v3313 = vpop.permute.xlu0 %3312
      %3314 = vrot.lane.b32.xlu0 %v3271, 44
      %v3315 = vpop.permute.xlu0 %3314
      %3316 = vrot.lane.b32.xlu0 %v3273, 44
      %v3317 = vpop.permute.xlu0 %3316
      %3318 = vrot.lane.b32.xlu0 %v3275, 44
      %v3319 = vpop.permute.xlu0 %3318
      %3320 = vrot.lane.b32.xlu0 %v3277, 44
      %v3321 = vpop.permute.xlu0 %3320
      %3322 = vrot.lane.b32.xlu0 %v3279, 44
      %v3323 = vpop.permute.xlu0 %3322
      %3324 = vrot.lane.b32.xlu0 %v3281, 44
      %v3325 = vpop.permute.xlu0 %3324
      %3326 = vrot.lane.b32.xlu0 %v3283, 44
      %v3327 = vpop.permute.xlu0 %3326
      %3328 = vrot.lane.b32.xlu0 %v3285, 44
      %v3329 = vpop.permute.xlu0 %3328
      %3330 = vrot.lane.b32.xlu0 %v3287, 44
      %v3331 = vpop.permute.xlu0 %3330
      %3332 = vrot.lane.b32.xlu0 %v3289, 44
      %v3333 = vpop.permute.xlu0 %3332
      %3334 = vrot.lane.b32.xlu0 %v3291, 44
      %v3335 = vpop.permute.xlu0 %3334
      %3336 = vrot.lane.b32.xlu0 %v3293, 44
      %v3337 = vpop.permute.xlu0 %3336
      %3338 = vrot.lane.b32.xlu0 %v3295, 44
      %v3339 = vpop.permute.xlu0 %3338
      %3340 = vrot.lane.b32.xlu0 %v3297, 44
      %v3341 = vpop.permute.xlu0 %3340
      %v3345 = vunpack.c.l.b16 %v2098
      %v3346 = vunpack.c.l.b16 %v2099
      %v3347 = vunpack.c.l.b16 %v2100
      %v3348 = vpack.c.b16 %v3345, %v3027
      %v3349 = vpack.c.b16 %v3347, %v3346
      %3350 = vrot.lane.b32.xlu0 %v2962, 48
      %v3351 = vpop.permute.xlu0 %3350
      %3352 = vrot.lane.b32.xlu0 %v2963, 48
      %v3353 = vpop.permute.xlu0 %3352
      %3354 = vrot.lane.b32.xlu0 %v2964, 48
      %v3355 = vpop.permute.xlu0 %3354
      %3356 = vrot.lane.b32.xlu0 %v2965, 48
      %v3357 = vpop.permute.xlu0 %3356
      %3358 = vrot.lane.b32.xlu0 %v2966, 48
      %v3359 = vpop.permute.xlu0 %3358
      %3360 = vrot.lane.b32.xlu0 %v2967, 48
      %v3361 = vpop.permute.xlu0 %3360
      %3362 = vrot.lane.b32.xlu0 %v2968, 48
      %v3363 = vpop.permute.xlu0 %3362
      %3364 = vrot.lane.b32.xlu0 %v2969, 48
      %v3365 = vpop.permute.xlu0 %3364
      %3366 = vrot.lane.b32.xlu0 %v2970, 48
      %v3367 = vpop.permute.xlu0 %3366
      %3368 = vrot.lane.b32.xlu0 %v2971, 48
      %v3369 = vpop.permute.xlu0 %3368
      %3370 = vrot.lane.b32.xlu0 %v2972, 48
      %v3371 = vpop.permute.xlu0 %3370
      %3372 = vrot.lane.b32.xlu0 %v2973, 48
      %v3373 = vpop.permute.xlu0 %3372
      %3374 = vrot.lane.b32.xlu0 %v2974, 48
      %v3375 = vpop.permute.xlu0 %3374
      %3376 = vrot.lane.b32.xlu0 %v2975, 48
      %v3377 = vpop.permute.xlu0 %3376
      %3378 = vrot.lane.b32.xlu0 %v2976, 48
      %v3379 = vpop.permute.xlu0 %3378
      %3380 = vrot.lane.b32.xlu0 %v2977, 48
      %v3381 = vpop.permute.xlu0 %3380
      %3382 = vrot.lane.b32.xlu0 %v2978, 48
      %v3383 = vpop.permute.xlu0 %3382
      %3384 = vrot.lane.b32.xlu0 %v2979, 48
      %v3385 = vpop.permute.xlu0 %3384
      %3386 = vrot.lane.b32.xlu0 %v2980, 48
      %v3387 = vpop.permute.xlu0 %3386
      %3388 = vrot.lane.b32.xlu0 %v2981, 48
      %v3389 = vpop.permute.xlu0 %3388
      %3390 = vrot.lane.b32.xlu0 %v3348, 48
      %v3391 = vpop.permute.xlu0 %3390
      %3392 = vrot.lane.b32.xlu0 %v3349, 48
      %v3393 = vpop.permute.xlu0 %3392
      %v3395 = vunpack.c.l.b16 %v2101
      %v3396 = vpack.c.b16 %v3395, %v3395
      %v3398 = vshll.u32 %v3348, 16
      %v3400 = vrot.slane %v3398, 1
      %v3401 = vsel %vm504, %v3203, %v3400
      %v3402 = vshrl.u32 %v3348, 16
      %v3404 = vor.u32 %v3402, %v3400
      %v3406 = vshll.u32 %v3349, 16
      %v3408 = vrot.slane %v3406, 1
      %v3409 = vsel %vm504, %v3404, %v3408
      %v3410 = vshrl.u32 %v3349, 16
      %v3412 = vor.u32 %v3410, %v3408
      %v3414 = vshll.u32 %v3396, 16
      %v3416 = vrot.slane %v3414, 1
      %v3417 = vsel %vm504, %v3412, %v3416
      %3418 = vrot.lane.b32.xlu0 %v3056, 52
      %v3419 = vpop.permute.xlu0 %3418
      %3420 = vrot.lane.b32.xlu0 %v3064, 52
      %v3421 = vpop.permute.xlu0 %3420
      %3422 = vrot.lane.b32.xlu0 %v3072, 52
      %v3423 = vpop.permute.xlu0 %3422
      %3424 = vrot.lane.b32.xlu0 %v3080, 52
      %v3425 = vpop.permute.xlu0 %3424
      %3426 = vrot.lane.b32.xlu0 %v3088, 52
      %v3427 = vpop.permute.xlu0 %3426
      %3428 = vrot.lane.b32.xlu0 %v3096, 52
      %v3429 = vpop.permute.xlu0 %3428
      %3430 = vrot.lane.b32.xlu0 %v3104, 52
      %v3431 = vpop.permute.xlu0 %3430
      %3432 = vrot.lane.b32.xlu0 %v3112, 52
      %v3433 = vpop.permute.xlu0 %3432
      %3434 = vrot.lane.b32.xlu0 %v3120, 52
      %v3435 = vpop.permute.xlu0 %3434
      %3436 = vrot.lane.b32.xlu0 %v3128, 52
      %v3437 = vpop.permute.xlu0 %3436
      %3438 = vrot.lane.b32.xlu0 %v3136, 52
      %v3439 = vpop.permute.xlu0 %3438
      %3440 = vrot.lane.b32.xlu0 %v3144, 52
      %v3441 = vpop.permute.xlu0 %3440
      %3442 = vrot.lane.b32.xlu0 %v3152, 52
      %v3443 = vpop.permute.xlu0 %3442
      %3444 = vrot.lane.b32.xlu0 %v3160, 52
      %v3445 = vpop.permute.xlu0 %3444
      %3446 = vrot.lane.b32.xlu0 %v3168, 52
      %v3447 = vpop.permute.xlu0 %3446
      %3448 = vrot.lane.b32.xlu0 %v3176, 52
      %v3449 = vpop.permute.xlu0 %3448
      %3450 = vrot.lane.b32.xlu0 %v3184, 52
      %v3451 = vpop.permute.xlu0 %3450
      %3452 = vrot.lane.b32.xlu0 %v3192, 52
      %v3453 = vpop.permute.xlu0 %3452
      %3454 = vrot.lane.b32.xlu0 %v3200, 52
      %v3455 = vpop.permute.xlu0 %3454
      %3456 = vrot.lane.b32.xlu0 %v3401, 52
      %v3457 = vpop.permute.xlu0 %3456
      %3458 = vrot.lane.b32.xlu0 %v3409, 52
      %v3459 = vpop.permute.xlu0 %3458
      %3460 = vrot.lane.b32.xlu0 %v3417, 52
      %v3461 = vpop.permute.xlu0 %3460
      %v3462 = vrot.slane %v3348, 1
      %v3463 = vsel %vm687, %v3294, %v3462
      %v3464 = vrot.slane %v3349, 1
      %v3465 = vsel %vm687, %v3462, %v3464
      %v3466 = vrot.slane %v3396, 1
      %v3467 = vsel %vm687, %v3464, %v3466
      %3468 = vrot.lane.b32.xlu0 %v3259, 56
      %v3469 = vpop.permute.xlu0 %3468
      %3470 = vrot.lane.b32.xlu0 %v3261, 56
      %v3471 = vpop.permute.xlu0 %3470
      %3472 = vrot.lane.b32.xlu0 %v3263, 56
      %v3473 = vpop.permute.xlu0 %3472
      %3474 = vrot.lane.b32.xlu0 %v3265, 56
      %v3475 = vpop.permute.xlu0 %3474
      %3476 = vrot.lane.b32.xlu0 %v3267, 56
      %v3477 = vpop.permute.xlu0 %3476
      %3478 = vrot.lane.b32.xlu0 %v3269, 56
      %v3479 = vpop.permute.xlu0 %3478
      %3480 = vrot.lane.b32.xlu0 %v3271, 56
      %v3481 = vpop.permute.xlu0 %3480
      %3482 = vrot.lane.b32.xlu0 %v3273, 56
      %v3483 = vpop.permute.xlu0 %3482
      %3484 = vrot.lane.b32.xlu0 %v3275, 56
      %v3485 = vpop.permute.xlu0 %3484
      %3486 = vrot.lane.b32.xlu0 %v3277, 56
      %v3487 = vpop.permute.xlu0 %3486
      %3488 = vrot.lane.b32.xlu0 %v3279, 56
      %v3489 = vpop.permute.xlu0 %3488
      %3490 = vrot.lane.b32.xlu0 %v3281, 56
      %v3491 = vpop.permute.xlu0 %3490
      %3492 = vrot.lane.b32.xlu0 %v3283, 56
      %v3493 = vpop.permute.xlu0 %3492
      %3494 = vrot.lane.b32.xlu0 %v3285, 56
      %v3495 = vpop.permute.xlu0 %3494
      %3496 = vrot.lane.b32.xlu0 %v3287, 56
      %v3497 = vpop.permute.xlu0 %3496
      %3498 = vrot.lane.b32.xlu0 %v3289, 56
      %v3499 = vpop.permute.xlu0 %3498
      %3500 = vrot.lane.b32.xlu0 %v3291, 56
      %v3501 = vpop.permute.xlu0 %3500
      %3502 = vrot.lane.b32.xlu0 %v3293, 56
      %v3503 = vpop.permute.xlu0 %3502
      %3504 = vrot.lane.b32.xlu0 %v3295, 56
      %v3505 = vpop.permute.xlu0 %3504
      %3506 = vrot.lane.b32.xlu0 %v3463, 56
      %v3507 = vpop.permute.xlu0 %3506
      %3508 = vrot.lane.b32.xlu0 %v3465, 56
      %v3509 = vpop.permute.xlu0 %3508
      %3510 = vrot.lane.b32.xlu0 %v3467, 56
      %v3511 = vpop.permute.xlu0 %3510
      %v3515 = vunpack.c.l.b16 %v2102
      %v3516 = vunpack.c.l.b16 %v2103
      %v3517 = vunpack.c.l.b16 %v2104
      %v3518 = vpack.c.b16 %v3515, %v3395
      %v3519 = vpack.c.b16 %v3517, %v3516
      %3520 = vrot.lane.b32.xlu0 %v2964, 60
      %v3521 = vpop.permute.xlu0 %3520
      %3522 = vrot.lane.b32.xlu0 %v2965, 60
      %v3523 = vpop.permute.xlu0 %3522
      %3524 = vrot.lane.b32.xlu0 %v2966, 60
      %v3525 = vpop.permute.xlu0 %3524
      %3526 = vrot.lane.b32.xlu0 %v2967, 60
      %v3527 = vpop.permute.xlu0 %3526
      %3528 = vrot.lane.b32.xlu0 %v2968, 60
      %v3529 = vpop.permute.xlu0 %3528
      %3530 = vrot.lane.b32.xlu0 %v2969, 60
      %v3531 = vpop.permute.xlu0 %3530
      %3532 = vrot.lane.b32.xlu0 %v2970, 60
      %v3533 = vpop.permute.xlu0 %3532
      %3534 = vrot.lane.b32.xlu0 %v2971, 60
      %v3535 = vpop.permute.xlu0 %3534
      %3536 = vrot.lane.b32.xlu0 %v2972, 60
      %v3537 = vpop.permute.xlu0 %3536
      %3538 = vrot.lane.b32.xlu0 %v2973, 60
      %v3539 = vpop.permute.xlu0 %3538
      %3540 = vrot.lane.b32.xlu0 %v2974, 60
      %v3541 = vpop.permute.xlu0 %3540
      %3542 = vrot.lane.b32.xlu0 %v2975, 60
      %v3543 = vpop.permute.xlu0 %3542
      %3544 = vrot.lane.b32.xlu0 %v2976, 60
      %v3545 = vpop.permute.xlu0 %3544
      %3546 = vrot.lane.b32.xlu0 %v2977, 60
      %v3547 = vpop.permute.xlu0 %3546
      %3548 = vrot.lane.b32.xlu0 %v2978, 60
      %v3549 = vpop.permute.xlu0 %3548
      %3550 = vrot.lane.b32.xlu0 %v2979, 60
      %v3551 = vpop.permute.xlu0 %3550
      %3552 = vrot.lane.b32.xlu0 %v2980, 60
      %v3553 = vpop.permute.xlu0 %3552
      %3554 = vrot.lane.b32.xlu0 %v2981, 60
      %v3555 = vpop.permute.xlu0 %3554
      %3556 = vrot.lane.b32.xlu0 %v3348, 60
      %v3557 = vpop.permute.xlu0 %3556
      %3558 = vrot.lane.b32.xlu0 %v3349, 60
      %v3559 = vpop.permute.xlu0 %3558
      %3560 = vrot.lane.b32.xlu0 %v3518, 60
      %v3561 = vpop.permute.xlu0 %3560
      %3562 = vrot.lane.b32.xlu0 %v3519, 60
      %v3563 = vpop.permute.xlu0 %3562
      %vm3564 = vcmask 31744
      %v3566 = vsel %vm3564, %v2194, %v2400
      %v3568 = vsel %vm3564, %v2195, %v2402
      %v3570 = vsel %vm3564, %v2196, %v2404
      %v3572 = vsel %vm3564, %v2197, %v2406
      %v3574 = vsel %vm3564, %v2198, %v2408
      %v3576 = vsel %vm3564, %v2199, %v2410
      %v3578 = vsel %vm3564, %v2200, %v2412
      %v3580 = vsel %vm3564, %v2201, %v2414
      %v3582 = vsel %vm3564, %v2202, %v2416
      %v3584 = vsel %vm3564, %v2203, %v2418
      %v3586 = vsel %vm3564, %v2204, %v2420
      %v3588 = vsel %vm3564, %v2205, %v2422
      %v3590 = vsel %vm3564, %v2206, %v2424
      %v3592 = vsel %vm3564, %v2207, %v2426
      %v3594 = vsel %vm3564, %v2208, %v2428
      %v3596 = vsel %vm3564, %v2209, %v2430
      %v3598 = vsel %vm3564, %v2210, %v2432
      %v3600 = vsel %vm3564, %v2211, %v2434
      %v3602 = vsel %vm3564, %v2212, %v2436
      %v3604 = vsel %vm3564, %v2213, %v2438
      %v3606 = vsel %vm3564, %v2214, %v2440
      %v3608 = vsel %vm3564, %v2215, %v2442
      %v3610 = vsel %vm1045, %v3566, %v2489
      %v3612 = vsel %vm1045, %v3568, %v2491
      %v3614 = vsel %vm1045, %v3570, %v2493
      %v3616 = vsel %vm1045, %v3572, %v2495
      %v3618 = vsel %vm1045, %v3574, %v2497
      %v3620 = vsel %vm1045, %v3576, %v2499
      %v3622 = vsel %vm1045, %v3578, %v2501
      %v3624 = vsel %vm1045, %v3580, %v2503
      %v3626 = vsel %vm1045, %v3582, %v2505
      %v3628 = vsel %vm1045, %v3584, %v2507
      %v3630 = vsel %vm1045, %v3586, %v2509
      %v3632 = vsel %vm1045, %v3588, %v2511
      %v3634 = vsel %vm1045, %v3590, %v2513
      %v3636 = vsel %vm1045, %v3592, %v2515
      %v3638 = vsel %vm1045, %v3594, %v2517
      %v3640 = vsel %vm1045, %v3596, %v2519
      %v3642 = vsel %vm1045, %v3598, %v2521
      %v3644 = vsel %vm1045, %v3600, %v2523
      %v3646 = vsel %vm1045, %v3602, %v2525
      %v3648 = vsel %vm1045, %v3604, %v2527
      %v3650 = vsel %vm1045, %v3606, %v2529
      %v3652 = vsel %vm1045, %v3608, %v2531
      %vm3653 = vcmask 97280
      %v3655 = vsel %vm3653, %v3610, %v2541
      %v3657 = vsel %vm3653, %v3612, %v2543
      %v3659 = vsel %vm3653, %v3614, %v2545
      %v3661 = vsel %vm3653, %v3616, %v2547
      %v3663 = vsel %vm3653, %v3618, %v2549
      %v3665 = vsel %vm3653, %v3620, %v2551
      %v3667 = vsel %vm3653, %v3622, %v2553
      %v3669 = vsel %vm3653, %v3624, %v2555
      %v3671 = vsel %vm3653, %v3626, %v2557
      %v3673 = vsel %vm3653, %v3628, %v2559
      %v3675 = vsel %vm3653, %v3630, %v2561
      %v3677 = vsel %vm3653, %v3632, %v2563
      %v3679 = vsel %vm3653, %v3634, %v2565
      %v3681 = vsel %vm3653, %v3636, %v2567
      %v3683 = vsel %vm3653, %v3638, %v2569
      %v3685 = vsel %vm3653, %v3640, %v2571
      %v3687 = vsel %vm3653, %v3642, %v2573
      %v3689 = vsel %vm3653, %v3644, %v2575
      %v3691 = vsel %vm3653, %v3646, %v2577
      %v3693 = vsel %vm3653, %v3648, %v2579
      %v3695 = vsel %vm3653, %v3650, %v2581
      %v3697 = vsel %vm3653, %v3652, %v2583
      %v3699 = vsel %vm1090, %v3655, %v2609
      %v3701 = vsel %vm1090, %v3657, %v2611
      %v3703 = vsel %vm1090, %v3659, %v2613
      %v3705 = vsel %vm1090, %v3661, %v2615
      %v3707 = vsel %vm1090, %v3663, %v2617
      %v3709 = vsel %vm1090, %v3665, %v2619
      %v3711 = vsel %vm1090, %v3667, %v2621
      %v3713 = vsel %vm1090, %v3669, %v2623
      %v3715 = vsel %vm1090, %v3671, %v2625
      %v3717 = vsel %vm1090, %v3673, %v2627
      %v3719 = vsel %vm1090, %v3675, %v2629
      %v3721 = vsel %vm1090, %v3677, %v2631
      %v3723 = vsel %vm1090, %v3679, %v2633
      %v3725 = vsel %vm1090, %v3681, %v2635
      %v3727 = vsel %vm1090, %v3683, %v2637
      %v3729 = vsel %vm1090, %v3685, %v2639
      %v3731 = vsel %vm1090, %v3687, %v2641
      %v3733 = vsel %vm1090, %v3689, %v2643
      %v3735 = vsel %vm1090, %v3691, %v2645
      %v3737 = vsel %vm1090, %v3693, %v2647
      %v3739 = vsel %vm1090, %v3695, %v2649
      %v3741 = vsel %vm1090, %v3697, %v2651
      %vm3742 = vcmask 162816
      %v3744 = vsel %vm3742, %v3699, %v2659
      %v3746 = vsel %vm3742, %v3701, %v2661
      %v3748 = vsel %vm3742, %v3703, %v2663
      %v3750 = vsel %vm3742, %v3705, %v2665
      %v3752 = vsel %vm3742, %v3707, %v2667
      %v3754 = vsel %vm3742, %v3709, %v2669
      %v3756 = vsel %vm3742, %v3711, %v2671
      %v3758 = vsel %vm3742, %v3713, %v2673
      %v3760 = vsel %vm3742, %v3715, %v2675
      %v3762 = vsel %vm3742, %v3717, %v2677
      %v3764 = vsel %vm3742, %v3719, %v2679
      %v3766 = vsel %vm3742, %v3721, %v2681
      %v3768 = vsel %vm3742, %v3723, %v2683
      %v3770 = vsel %vm3742, %v3725, %v2685
      %v3772 = vsel %vm3742, %v3727, %v2687
      %v3774 = vsel %vm3742, %v3729, %v2689
      %v3776 = vsel %vm3742, %v3731, %v2691
      %v3778 = vsel %vm3742, %v3733, %v2693
      %v3780 = vsel %vm3742, %v3735, %v2695
      %v3782 = vsel %vm3742, %v3737, %v2697
      %v3784 = vsel %vm3742, %v3739, %v2699
      %v3786 = vsel %vm3742, %v3741, %v2701
      %v3788 = vsel %vm1135, %v3744, %v2711
      %v3790 = vsel %vm1135, %v3746, %v2713
      %v3792 = vsel %vm1135, %v3748, %v2715
      %v3794 = vsel %vm1135, %v3750, %v2717
      %v3796 = vsel %vm1135, %v3752, %v2719
      %v3798 = vsel %vm1135, %v3754, %v2721
      %v3800 = vsel %vm1135, %v3756, %v2723
      %v3802 = vsel %vm1135, %v3758, %v2725
      %v3804 = vsel %vm1135, %v3760, %v2727
      %v3806 = vsel %vm1135, %v3762, %v2729
      %v3808 = vsel %vm1135, %v3764, %v2731
      %v3810 = vsel %vm1135, %v3766, %v2733
      %v3812 = vsel %vm1135, %v3768, %v2735
      %v3814 = vsel %vm1135, %v3770, %v2737
      %v3816 = vsel %vm1135, %v3772, %v2739
      %v3818 = vsel %vm1135, %v3774, %v2741
      %v3820 = vsel %vm1135, %v3776, %v2743
      %v3822 = vsel %vm1135, %v3778, %v2745
      %v3824 = vsel %vm1135, %v3780, %v2747
      %v3826 = vsel %vm1135, %v3782, %v2749
      %v3828 = vsel %vm1135, %v3784, %v2751
      %v3830 = vsel %vm1135, %v3786, %v2753
      %vm3831 = vcmask 228352
      %v3833 = vsel %vm3831, %v3788, %v2779
      %v3835 = vsel %vm3831, %v3790, %v2781
      %v3837 = vsel %vm3831, %v3792, %v2783
      %v3839 = vsel %vm3831, %v3794, %v2785
      %v3841 = vsel %vm3831, %v3796, %v2787
      %v3843 = vsel %vm3831, %v3798, %v2789
      %v3845 = vsel %vm3831, %v3800, %v2791
      %v3847 = vsel %vm3831, %v3802, %v2793
      %v3849 = vsel %vm3831, %v3804, %v2795
      %v3851 = vsel %vm3831, %v3806, %v2797
      %v3853 = vsel %vm3831, %v3808, %v2799
      %v3855 = vsel %vm3831, %v3810, %v2801
      %v3857 = vsel %vm3831, %v3812, %v2803
      %v3859 = vsel %vm3831, %v3814, %v2805
      %v3861 = vsel %vm3831, %v3816, %v2807
      %v3863 = vsel %vm3831, %v3818, %v2809
      %v3865 = vsel %vm3831, %v3820, %v2811
      %v3867 = vsel %vm3831, %v3822, %v2813
      %v3869 = vsel %vm3831, %v3824, %v2815
      %v3871 = vsel %vm3831, %v3826, %v2817
      %v3873 = vsel %vm3831, %v3828, %v2819
      %v3875 = vsel %vm3831, %v3830, %v2821
      %v3877 = vsel %vm1178, %v3833, %v2829
      %v3879 = vsel %vm1178, %v3835, %v2831
      %v3881 = vsel %vm1178, %v3837, %v2833
      %v3883 = vsel %vm1178, %v3839, %v2835
      %v3885 = vsel %vm1178, %v3841, %v2837
      %v3887 = vsel %vm1178, %v3843, %v2839
      %v3889 = vsel %vm1178, %v3845, %v2841
      %v3891 = vsel %vm1178, %v3847, %v2843
      %v3893 = vsel %vm1178, %v3849, %v2845
      %v3895 = vsel %vm1178, %v3851, %v2847
      %v3897 = vsel %vm1178, %v3853, %v2849
      %v3899 = vsel %vm1178, %v3855, %v2851
      %v3901 = vsel %vm1178, %v3857, %v2853
      %v3903 = vsel %vm1178, %v3859, %v2855
      %v3905 = vsel %vm1178, %v3861, %v2857
      %v3907 = vsel %vm1178, %v3863, %v2859
      %v3909 = vsel %vm1178, %v3865, %v2861
      %v3911 = vsel %vm1178, %v3867, %v2863
      %v3913 = vsel %vm1178, %v3869, %v2865
      %v3915 = vsel %vm1178, %v3871, %v2867
      %v3917 = vsel %vm1178, %v3873, %v2869
      %v3919 = vsel %vm1178, %v3875, %v2871
      %vm3920 = vcmask 293888
      %v3922 = vsel %vm3920, %v3877, %v2983
      %v3924 = vsel %vm3920, %v3879, %v2985
      %v3926 = vsel %vm3920, %v3881, %v2987
      %v3928 = vsel %vm3920, %v3883, %v2989
      %v3930 = vsel %vm3920, %v3885, %v2991
      %v3932 = vsel %vm3920, %v3887, %v2993
      %v3934 = vsel %vm3920, %v3889, %v2995
      %v3936 = vsel %vm3920, %v3891, %v2997
      %v3938 = vsel %vm3920, %v3893, %v2999
      %v3940 = vsel %vm3920, %v3895, %v3001
      %v3942 = vsel %vm3920, %v3897, %v3003
      %v3944 = vsel %vm3920, %v3899, %v3005
      %v3946 = vsel %vm3920, %v3901, %v3007
      %v3948 = vsel %vm3920, %v3903, %v3009
      %v3950 = vsel %vm3920, %v3905, %v3011
      %v3952 = vsel %vm3920, %v3907, %v3013
      %v3954 = vsel %vm3920, %v3909, %v3015
      %v3956 = vsel %vm3920, %v3911, %v3017
      %v3958 = vsel %vm3920, %v3913, %v3019
      %v3960 = vsel %vm3920, %v3915, %v3021
      %v3962 = vsel %vm3920, %v3917, %v3023
      %v3964 = vsel %vm3920, %v3919, %v3025
      %v3966 = vsel %vm1228, %v3922, %v3210
      %v3968 = vsel %vm1228, %v3924, %v3212
      %v3970 = vsel %vm1228, %v3926, %v3214
      %v3972 = vsel %vm1228, %v3928, %v3216
      %v3974 = vsel %vm1228, %v3930, %v3218
      %v3976 = vsel %vm1228, %v3932, %v3220
      %v3978 = vsel %vm1228, %v3934, %v3222
      %v3980 = vsel %vm1228, %v3936, %v3224
      %v3982 = vsel %vm1228, %v3938, %v3226
      %v3984 = vsel %vm1228, %v3940, %v3228
      %v3986 = vsel %vm1228, %v3942, %v3230
      %v3988 = vsel %vm1228, %v3944, %v3232
      %v3990 = vsel %vm1228, %v3946, %v3234
      %v3992 = vsel %vm1228, %v3948, %v3236
      %v3994 = vsel %vm1228, %v3950, %v3238
      %v3996 = vsel %vm1228, %v3952, %v3240
      %v3998 = vsel %vm1228, %v3954, %v3242
      %v4000 = vsel %vm1228, %v3956, %v3244
      %v4002 = vsel %vm1228, %v3958, %v3246
      %v4004 = vsel %vm1228, %v3960, %v3248
      %v4006 = vsel %vm1228, %v3962, %v3250
      %v4008 = vsel %vm1228, %v3964, %v3252
      %vm4009 = vcmask 359424
      %v4011 = vsel %vm4009, %v3966, %v3299
      %v4013 = vsel %vm4009, %v3968, %v3301
      %v4015 = vsel %vm4009, %v3970, %v3303
      %v4017 = vsel %vm4009, %v3972, %v3305
      %v4019 = vsel %vm4009, %v3974, %v3307
      %v4021 = vsel %vm4009, %v3976, %v3309
      %v4023 = vsel %vm4009, %v3978, %v3311
      %v4025 = vsel %vm4009, %v3980, %v3313
      %v4027 = vsel %vm4009, %v3982, %v3315
      %v4029 = vsel %vm4009, %v3984, %v3317
      %v4031 = vsel %vm4009, %v3986, %v3319
      %v4033 = vsel %vm4009, %v3988, %v3321
      %v4035 = vsel %vm4009, %v3990, %v3323
      %v4037 = vsel %vm4009, %v3992, %v3325
      %v4039 = vsel %vm4009, %v3994, %v3327
      %v4041 = vsel %vm4009, %v3996, %v3329
      %v4043 = vsel %vm4009, %v3998, %v3331
      %v4045 = vsel %vm4009, %v4000, %v3333
      %v4047 = vsel %vm4009, %v4002, %v3335
      %v4049 = vsel %vm4009, %v4004, %v3337
      %v4051 = vsel %vm4009, %v4006, %v3339
      %v4053 = vsel %vm4009, %v4008, %v3341
      %v4055 = vsel %vm1278, %v4011, %v3351
      %v4057 = vsel %vm1278, %v4013, %v3353
      %v4059 = vsel %vm1278, %v4015, %v3355
      %v4061 = vsel %vm1278, %v4017, %v3357
      %v4063 = vsel %vm1278, %v4019, %v3359
      %v4065 = vsel %vm1278, %v4021, %v3361
      %v4067 = vsel %vm1278, %v4023, %v3363
      %v4069 = vsel %vm1278, %v4025, %v3365
      %v4071 = vsel %vm1278, %v4027, %v3367
      %v4073 = vsel %vm1278, %v4029, %v3369
      %v4075 = vsel %vm1278, %v4031, %v3371
      %v4077 = vsel %vm1278, %v4033, %v3373
      %v4079 = vsel %vm1278, %v4035, %v3375
      %v4081 = vsel %vm1278, %v4037, %v3377
      %v4083 = vsel %vm1278, %v4039, %v3379
      %v4085 = vsel %vm1278, %v4041, %v3381
      %v4087 = vsel %vm1278, %v4043, %v3383
      %v4089 = vsel %vm1278, %v4045, %v3385
      %v4091 = vsel %vm1278, %v4047, %v3387
      %v4093 = vsel %vm1278, %v4049, %v3389
      %v4095 = vsel %vm1278, %v4051, %v3391
      %v4097 = vsel %vm1278, %v4053, %v3393
      %vm4098 = vcmask 424960
      %v4100 = vsel %vm4098, %v4055, %v3419
      %v4102 = vsel %vm4098, %v4057, %v3421
      %v4104 = vsel %vm4098, %v4059, %v3423
      %v4106 = vsel %vm4098, %v4061, %v3425
      %v4108 = vsel %vm4098, %v4063, %v3427
      %v4110 = vsel %vm4098, %v4065, %v3429
      %v4112 = vsel %vm4098, %v4067, %v3431
      %v4114 = vsel %vm4098, %v4069, %v3433
      %v4116 = vsel %vm4098, %v4071, %v3435
      %v4118 = vsel %vm4098, %v4073, %v3437
      %v4120 = vsel %vm4098, %v4075, %v3439
      %v4122 = vsel %vm4098, %v4077, %v3441
      %v4124 = vsel %vm4098, %v4079, %v3443
      %v4126 = vsel %vm4098, %v4081, %v3445
      %v4128 = vsel %vm4098, %v4083, %v3447
      %v4130 = vsel %vm4098, %v4085, %v3449
      %v4132 = vsel %vm4098, %v4087, %v3451
      %v4134 = vsel %vm4098, %v4089, %v3453
      %v4136 = vsel %vm4098, %v4091, %v3455
      %v4138 = vsel %vm4098, %v4093, %v3457
      %v4140 = vsel %vm4098, %v4095, %v3459
      %v4142 = vsel %vm4098, %v4097, %v3461
      %v4144 = vsel %vm1323, %v4100, %v3469
      %v4146 = vsel %vm1323, %v4102, %v3471
      %v4148 = vsel %vm1323, %v4104, %v3473
      %v4150 = vsel %vm1323, %v4106, %v3475
      %v4152 = vsel %vm1323, %v4108, %v3477
      %v4154 = vsel %vm1323, %v4110, %v3479
      %v4156 = vsel %vm1323, %v4112, %v3481
      %v4158 = vsel %vm1323, %v4114, %v3483
      %v4160 = vsel %vm1323, %v4116, %v3485
      %v4162 = vsel %vm1323, %v4118, %v3487
      %v4164 = vsel %vm1323, %v4120, %v3489
      %v4166 = vsel %vm1323, %v4122, %v3491
      %v4168 = vsel %vm1323, %v4124, %v3493
      %v4170 = vsel %vm1323, %v4126, %v3495
      %v4172 = vsel %vm1323, %v4128, %v3497
      %v4174 = vsel %vm1323, %v4130, %v3499
      %v4176 = vsel %vm1323, %v4132, %v3501
      %v4178 = vsel %vm1323, %v4134, %v3503
      %v4180 = vsel %vm1323, %v4136, %v3505
      %v4182 = vsel %vm1323, %v4138, %v3507
      %v4184 = vsel %vm1323, %v4140, %v3509
      %v4186 = vsel %vm1323, %v4142, %v3511
      %vm4187 = vcmask 490496
      %v4189 = vsel %vm4187, %v4144, %v3521
      %v4191 = vsel %vm4187, %v4146, %v3523
      %v4193 = vsel %vm4187, %v4148, %v3525
      %v4195 = vsel %vm4187, %v4150, %v3527
      %v4197 = vsel %vm4187, %v4152, %v3529
      %v4199 = vsel %vm4187, %v4154, %v3531
      %v4201 = vsel %vm4187, %v4156, %v3533
      %v4203 = vsel %vm4187, %v4158, %v3535
      %v4205 = vsel %vm4187, %v4160, %v3537
      %v4207 = vsel %vm4187, %v4162, %v3539
      %v4209 = vsel %vm4187, %v4164, %v3541
      %v4211 = vsel %vm4187, %v4166, %v3543
      %v4213 = vsel %vm4187, %v4168, %v3545
      %v4215 = vsel %vm4187, %v4170, %v3547
      %v4217 = vsel %vm4187, %v4172, %v3549
      %v4219 = vsel %vm4187, %v4174, %v3551
      %v4221 = vsel %vm4187, %v4176, %v3553
      %v4223 = vsel %vm4187, %v4178, %v3555
      %v4225 = vsel %vm4187, %v4180, %v3557
      %v4227 = vsel %vm4187, %v4182, %v3559
      %v4229 = vsel %vm4187, %v4184, %v3561
      %v4231 = vsel %vm4187, %v4186, %v3563
      %v4233 = vunpack.c.l.b16 %v2105
      %v4234 = vpack.c.b16 %v4233, %v4233
      %v4236 = vshll.u32 %v3518, 16
      %v4238 = vrot.slane %v4236, 1
      %v4239 = vsel %vm504, %v3412, %v4238
      %v4240 = vshrl.u32 %v3518, 16
      %v4242 = vor.u32 %v4240, %v4238
      %v4244 = vshll.u32 %v3519, 16
      %v4246 = vrot.slane %v4244, 1
      %v4247 = vsel %vm504, %v4242, %v4246
      %v4248 = vshrl.u32 %v3519, 16
      %v4250 = vor.u32 %v4248, %v4246
      %v4252 = vshll.u32 %v4234, 16
      %v4254 = vrot.slane %v4252, 1
      %v4255 = vsel %vm504, %v4250, %v4254
      %v4256 = vshrl.u32 %v4234, 16
      %4258 = vrot.lane.b32.xlu0 %v3072, 4
      %v4259 = vpop.permute.xlu0 %4258
      %4260 = vrot.lane.b32.xlu0 %v3080, 4
      %v4261 = vpop.permute.xlu0 %4260
      %4262 = vrot.lane.b32.xlu0 %v3088, 4
      %v4263 = vpop.permute.xlu0 %4262
      %4264 = vrot.lane.b32.xlu0 %v3096, 4
      %v4265 = vpop.permute.xlu0 %4264
      %4266 = vrot.lane.b32.xlu0 %v3104, 4
      %v4267 = vpop.permute.xlu0 %4266
      %4268 = vrot.lane.b32.xlu0 %v3112, 4
      %v4269 = vpop.permute.xlu0 %4268
      %4270 = vrot.lane.b32.xlu0 %v3120, 4
      %v4271 = vpop.permute.xlu0 %4270
      %4272 = vrot.lane.b32.xlu0 %v3128, 4
      %v4273 = vpop.permute.xlu0 %4272
      %4274 = vrot.lane.b32.xlu0 %v3136, 4
      %v4275 = vpop.permute.xlu0 %4274
      %4276 = vrot.lane.b32.xlu0 %v3144, 4
      %v4277 = vpop.permute.xlu0 %4276
      %4278 = vrot.lane.b32.xlu0 %v3152, 4
      %v4279 = vpop.permute.xlu0 %4278
      %4280 = vrot.lane.b32.xlu0 %v3160, 4
      %v4281 = vpop.permute.xlu0 %4280
      %4282 = vrot.lane.b32.xlu0 %v3168, 4
      %v4283 = vpop.permute.xlu0 %4282
      %4284 = vrot.lane.b32.xlu0 %v3176, 4
      %v4285 = vpop.permute.xlu0 %4284
      %4286 = vrot.lane.b32.xlu0 %v3184, 4
      %v4287 = vpop.permute.xlu0 %4286
      %4288 = vrot.lane.b32.xlu0 %v3192, 4
      %v4289 = vpop.permute.xlu0 %4288
      %4290 = vrot.lane.b32.xlu0 %v3200, 4
      %v4291 = vpop.permute.xlu0 %4290
      %4292 = vrot.lane.b32.xlu0 %v3401, 4
      %v4293 = vpop.permute.xlu0 %4292
      %4294 = vrot.lane.b32.xlu0 %v3409, 4
      %v4295 = vpop.permute.xlu0 %4294
      %4296 = vrot.lane.b32.xlu0 %v4239, 4
      %v4297 = vpop.permute.xlu0 %4296
      %4298 = vrot.lane.b32.xlu0 %v4247, 4
      %v4299 = vpop.permute.xlu0 %4298
      %4300 = vrot.lane.b32.xlu0 %v4255, 4
      %v4301 = vpop.permute.xlu0 %4300
      %4302 = vrot.lane.b32.xlu0 %v4256, 4
      %v4303 = vpop.permute.xlu0 %4302
      %v4305 = vsel %vm3564, %v2964, %v4259
      %v4307 = vsel %vm3564, %v2965, %v4261
      %v4309 = vsel %vm3564, %v2966, %v4263
      %v4311 = vsel %vm3564, %v2967, %v4265
      %v4313 = vsel %vm3564, %v2968, %v4267
      %v4315 = vsel %vm3564, %v2969, %v4269
      %v4317 = vsel %vm3564, %v2970, %v4271
      %v4319 = vsel %vm3564, %v2971, %v4273
      %v4321 = vsel %vm3564, %v2972, %v4275
      %v4323 = vsel %vm3564, %v2973, %v4277
      %v4325 = vsel %vm3564, %v2974, %v4279
      %v4327 = vsel %vm3564, %v2975, %v4281
      %v4329 = vsel %vm3564, %v2976, %v4283
      %v4331 = vsel %vm3564, %v2977, %v4285
      %v4333 = vsel %vm3564, %v2978, %v4287
      %v4335 = vsel %vm3564, %v2979, %v4289
      %v4337 = vsel %vm3564, %v2980, %v4291
      %v4339 = vsel %vm3564, %v2981, %v4293
      %v4341 = vsel %vm3564, %v3348, %v4295
      %v4343 = vsel %vm3564, %v3349, %v4297
      %v4345 = vsel %vm3564, %v3518, %v4299
      %v4347 = vsel %vm3564, %v3519, %v4301
      %v4349 = vsel %vm3564, %v4234, %v4303
      %v4350 = vshrl.u32 %v4305, 16
      %v4352 = vshll.u32 %v4305, 16
      %v4354 = vrot.slane %v4352, 1
      %v4355 = vor.u32 %v4350, %v4354
      %v4356 = vshll.u32 %v4307, 16
      %v4358 = vrot.slane %v4356, 1
      %v4359 = vsel %vm504, %v4355, %v4358
      %v4360 = vshrl.u32 %v4307, 16
      %v4362 = vor.u32 %v4360, %v4358
      %v4363 = vshll.u32 %v4309, 16
      %v4365 = vrot.slane %v4363, 1
      %v4366 = vsel %vm504, %v4362, %v4365
      %v4367 = vshrl.u32 %v4309, 16
      %v4369 = vor.u32 %v4367, %v4365
      %v4370 = vshll.u32 %v4311, 16
      %v4372 = vrot.slane %v4370, 1
      %v4373 = vsel %vm504, %v4369, %v4372
      %v4374 = vshrl.u32 %v4311, 16
      %v4376 = vor.u32 %v4374, %v4372
      %v4377 = vshll.u32 %v4313, 16
      %v4379 = vrot.slane %v4377, 1
      %v4380 = vsel %vm504, %v4376, %v4379
      %v4381 = vshrl.u32 %v4313, 16
      %v4383 = vor.u32 %v4381, %v4379
      %v4384 = vshll.u32 %v4315, 16
      %v4386 = vrot.slane %v4384, 1
      %v4387 = vsel %vm504, %v4383, %v4386
      %v4388 = vshrl.u32 %v4315, 16
      %v4390 = vor.u32 %v4388, %v4386
      %v4391 = vshll.u32 %v4317, 16
      %v4393 = vrot.slane %v4391, 1
      %v4394 = vsel %vm504, %v4390, %v4393
      %v4395 = vshrl.u32 %v4317, 16
      %v4397 = vor.u32 %v4395, %v4393
      %v4398 = vshll.u32 %v4319, 16
      %v4400 = vrot.slane %v4398, 1
      %v4401 = vsel %vm504, %v4397, %v4400
      %v4402 = vshrl.u32 %v4319, 16
      %v4404 = vor.u32 %v4402, %v4400
      %v4405 = vshll.u32 %v4321, 16
      %v4407 = vrot.slane %v4405, 1
      %v4408 = vsel %vm504, %v4404, %v4407
      %v4409 = vshrl.u32 %v4321, 16
      %v4411 = vor.u32 %v4409, %v4407
      %v4412 = vshll.u32 %v4323, 16
      %v4414 = vrot.slane %v4412, 1
      %v4415 = vsel %vm504, %v4411, %v4414
      %v4416 = vshrl.u32 %v4323, 16
      %v4418 = vor.u32 %v4416, %v4414
      %v4419 = vshll.u32 %v4325, 16
      %v4421 = vrot.slane %v4419, 1
      %v4422 = vsel %vm504, %v4418, %v4421
      %v4423 = vshrl.u32 %v4325, 16
      %v4425 = vor.u32 %v4423, %v4421
      %v4426 = vshll.u32 %v4327, 16
      %v4428 = vrot.slane %v4426, 1
      %v4429 = vsel %vm504, %v4425, %v4428
      %v4430 = vshrl.u32 %v4327, 16
      %v4432 = vor.u32 %v4430, %v4428
      %v4433 = vshll.u32 %v4329, 16
      %v4435 = vrot.slane %v4433, 1
      %v4436 = vsel %vm504, %v4432, %v4435
      %v4437 = vshrl.u32 %v4329, 16
      %v4439 = vor.u32 %v4437, %v4435
      %v4440 = vshll.u32 %v4331, 16
      %v4442 = vrot.slane %v4440, 1
      %v4443 = vsel %vm504, %v4439, %v4442
      %v4444 = vshrl.u32 %v4331, 16
      %v4446 = vor.u32 %v4444, %v4442
      %v4447 = vshll.u32 %v4333, 16
      %v4449 = vrot.slane %v4447, 1
      %v4450 = vsel %vm504, %v4446, %v4449
      %v4451 = vshrl.u32 %v4333, 16
      %v4453 = vor.u32 %v4451, %v4449
      %v4454 = vshll.u32 %v4335, 16
      %v4456 = vrot.slane %v4454, 1
      %v4457 = vsel %vm504, %v4453, %v4456
      %v4458 = vshrl.u32 %v4335, 16
      %v4460 = vor.u32 %v4458, %v4456
      %v4461 = vshll.u32 %v4337, 16
      %v4463 = vrot.slane %v4461, 1
      %v4464 = vsel %vm504, %v4460, %v4463
      %v4465 = vshrl.u32 %v4337, 16
      %v4467 = vor.u32 %v4465, %v4463
      %v4468 = vshll.u32 %v4339, 16
      %v4470 = vrot.slane %v4468, 1
      %v4471 = vsel %vm504, %v4467, %v4470
      %v4472 = vshrl.u32 %v4339, 16
      %v4474 = vor.u32 %v4472, %v4470
      %v4475 = vshll.u32 %v4341, 16
      %v4477 = vrot.slane %v4475, 1
      %v4478 = vsel %vm504, %v4474, %v4477
      %v4479 = vshrl.u32 %v4341, 16
      %v4481 = vor.u32 %v4479, %v4477
      %v4482 = vshll.u32 %v4343, 16
      %v4484 = vrot.slane %v4482, 1
      %v4485 = vsel %vm504, %v4481, %v4484
      %v4486 = vshrl.u32 %v4343, 16
      %v4488 = vor.u32 %v4486, %v4484
      %v4489 = vshll.u32 %v4345, 16
      %v4491 = vrot.slane %v4489, 1
      %v4492 = vsel %vm504, %v4488, %v4491
      %v4493 = vshrl.u32 %v4345, 16
      %v4495 = vor.u32 %v4493, %v4491
      %v4496 = vshll.u32 %v4347, 16
      %v4498 = vrot.slane %v4496, 1
      %v4499 = vsel %vm504, %v4495, %v4498
      %v4500 = vshrl.u32 %v4347, 16
      %v4502 = vor.u32 %v4500, %v4498
      %v4503 = vshll.u32 %v4349, 16
      %v4505 = vrot.slane %v4503, 1
      %v4506 = vsel %vm504, %v4502, %v4505
      %4507 = vrot.lane.b32.xlu0 %v4359, 64
      %v4508 = vpop.permute.xlu0 %4507
      %4509 = vrot.lane.b32.xlu0 %v4366, 64
      %v4510 = vpop.permute.xlu0 %4509
      %4511 = vrot.lane.b32.xlu0 %v4373, 64
      %v4512 = vpop.permute.xlu0 %4511
      %4513 = vrot.lane.b32.xlu0 %v4380, 64
      %v4514 = vpop.permute.xlu0 %4513
      %4515 = vrot.lane.b32.xlu0 %v4387, 64
      %v4516 = vpop.permute.xlu0 %4515
      %4517 = vrot.lane.b32.xlu0 %v4394, 64
      %v4518 = vpop.permute.xlu0 %4517
      %4519 = vrot.lane.b32.xlu0 %v4401, 64
      %v4520 = vpop.permute.xlu0 %4519
      %4521 = vrot.lane.b32.xlu0 %v4408, 64
      %v4522 = vpop.permute.xlu0 %4521
      %4523 = vrot.lane.b32.xlu0 %v4415, 64
      %v4524 = vpop.permute.xlu0 %4523
      %4525 = vrot.lane.b32.xlu0 %v4422, 64
      %v4526 = vpop.permute.xlu0 %4525
      %4527 = vrot.lane.b32.xlu0 %v4429, 64
      %v4528 = vpop.permute.xlu0 %4527
      %4529 = vrot.lane.b32.xlu0 %v4436, 64
      %v4530 = vpop.permute.xlu0 %4529
      %4531 = vrot.lane.b32.xlu0 %v4443, 64
      %v4532 = vpop.permute.xlu0 %4531
      %4533 = vrot.lane.b32.xlu0 %v4450, 64
      %v4534 = vpop.permute.xlu0 %4533
      %4535 = vrot.lane.b32.xlu0 %v4457, 64
      %v4536 = vpop.permute.xlu0 %4535
      %4537 = vrot.lane.b32.xlu0 %v4464, 64
      %v4538 = vpop.permute.xlu0 %4537
      %4539 = vrot.lane.b32.xlu0 %v4471, 64
      %v4540 = vpop.permute.xlu0 %4539
      %4541 = vrot.lane.b32.xlu0 %v4478, 64
      %v4542 = vpop.permute.xlu0 %4541
      %4543 = vrot.lane.b32.xlu0 %v4485, 64
      %v4544 = vpop.permute.xlu0 %4543
      %4545 = vrot.lane.b32.xlu0 %v4492, 64
      %v4546 = vpop.permute.xlu0 %4545
      %4547 = vrot.lane.b32.xlu0 %v4499, 64
      %v4548 = vpop.permute.xlu0 %4547
      %4549 = vrot.lane.b32.xlu0 %v4506, 64
      %v4550 = vpop.permute.xlu0 %4549
      %v4552 = vsel %vm1374, %v4189, %v4508
      %v4554 = vsel %vm1374, %v4191, %v4510
      %v4556 = vsel %vm1374, %v4193, %v4512
      %v4558 = vsel %vm1374, %v4195, %v4514
      %v4560 = vsel %vm1374, %v4197, %v4516
      %v4562 = vsel %vm1374, %v4199, %v4518
      %v4564 = vsel %vm1374, %v4201, %v4520
      %v4566 = vsel %vm1374, %v4203, %v4522
      %v4568 = vsel %vm1374, %v4205, %v4524
      %v4570 = vsel %vm1374, %v4207, %v4526
      %v4572 = vsel %vm1374, %v4209, %v4528
      %v4574 = vsel %vm1374, %v4211, %v4530
      %v4576 = vsel %vm1374, %v4213, %v4532
      %v4578 = vsel %vm1374, %v4215, %v4534
      %v4580 = vsel %vm1374, %v4217, %v4536
      %v4582 = vsel %vm1374, %v4219, %v4538
      %v4584 = vsel %vm1374, %v4221, %v4540
      %v4586 = vsel %vm1374, %v4223, %v4542
      %v4588 = vsel %vm1374, %v4225, %v4544
      %v4590 = vsel %vm1374, %v4227, %v4546
      %v4592 = vsel %vm1374, %v4229, %v4548
      %v4594 = vsel %vm1374, %v4231, %v4550
      %v4595 = vld [vmem:[%s4] sm:$0xf]
      %v4596 = vld [vmem:[%s4 + $0x4] sm:$0xf]
      %v4597 = vld [vmem:[%s4 + $0x8] sm:$0xf]
      %v4598 = vld [vmem:[%s4 + $0xc] sm:$0xf]
      %v4599 = vld [vmem:[%s4 + $0x10] sm:$0xf]
      %v4600 = vld [vmem:[%s4 + $0x14] sm:$0xf]
      %v4601 = vld [vmem:[%s4 + $0x18] sm:$0xf]
      %v4602 = vld [vmem:[%s4 + $0x1c] sm:$0xf]
      %v4603 = vld [vmem:[%s4 + $0x20] sm:$0xf]
      %v4604 = vld [vmem:[%s5] sm:$0x1]
      %v4606 = vperm.slane %v4604, 0
      %v4617 = vunpack.c.l.b16 %v4595
      %v4618 = vunpack.c.l.b16 %v4596
      %v4619 = vunpack.c.l.b16 %v4597
      %v4620 = vunpack.c.l.b16 %v4598
      %v4621 = vunpack.c.l.b16 %v4599
      %v4622 = vunpack.c.l.b16 %v4600
      %v4623 = vunpack.c.l.b16 %v4601
      %v4624 = vunpack.c.l.b16 %v4602
      %v4625 = vunpack.c.l.b16 %v4603
      %v4626 = vpack.c.b16 %v4618, %v4617
      %v4627 = vpack.c.b16 %v4620, %v4619
      %v4628 = vpack.c.b16 %v4622, %v4621
      %v4629 = vpack.c.b16 %v4624, %v4623
      %v4630 = vpack.c.b16 %v4625, %v4625
      %v4635 = vsel %vm1456, %v4552, 0
      %v4637 = vsel %vm1456, %v4554, 0
      %v4639 = vsel %vm1456, %v4556, 0
      %v4641 = vsel %vm1456, %v4558, 0
      %v4643 = vsel %vm1456, %v4560, 0
      %v4645 = vsel %vm1456, %v4562, 0
      %v4647 = vsel %vm1456, %v4564, 0
      %v4649 = vsel %vm1456, %v4566, 0
      %v4651 = vsel %vm1456, %v4568, 0
      %v4653 = vsel %vm1456, %v4570, 0
      %v4655 = vsel %vm1456, %v4572, 0
      %v4657 = vsel %vm1456, %v4574, 0
      %v4659 = vsel %vm1456, %v4576, 0
      %v4661 = vsel %vm1456, %v4578, 0
      %v4663 = vsel %vm1456, %v4580, 0
      %v4665 = vsel %vm1456, %v4582, 0
      %v4667 = vsel %vm1456, %v4584, 0
      %v4669 = vsel %vm1456, %v4586, 0
      %v4671 = vsel %vm1456, %v4588, 0
      %v4673 = vsel %vm1456, %v4590, 0
      %v4675 = vsel %vm1456, %v4592, 0
      %v4677 = vsel %vm1456, %v4594, 0
      %v4680 = vsel %vm1513, %v4630, 0
      %4682 = vmatpush.bf16.msra.mxu0 0
      %4683 = vmatpush.bf16.msra.mxu0 0
      %4684 = vmatpush.bf16.msra.mxu0 0
      %4685 = vmatpush.bf16.msra.mxu0 %v4680
      %4686 = vmatpush.bf16.msra.mxu0 %v4629
      %4687 = vmatpush.bf16.msra.mxu0 %v4628
      %4688 = vmatpush.bf16.msra.mxu0 %v4627
      %4689 = vmatpush.bf16.msra.mxu0 %v4626
      %4690 = vmatmul.bf16.gmra.mxu0 %v4635
      %v4691 = vpop.f32.mrf.mxu0
      %v4692 = vadd.f32 %v4606, %v4691
      %v4693 = vpop.f32.mrf.mxu0
      %v4694 = vadd.f32 %v4606, %v4693
      %4695 = vmatmul.bf16.gmra.mxu0 %v4637
      %v4696 = vpop.f32.mrf.mxu0
      %v4697 = vadd.f32 %v4606, %v4696
      %v4698 = vpop.f32.mrf.mxu0
      %v4699 = vadd.f32 %v4606, %v4698
      %4700 = vmatmul.bf16.gmra.mxu0 %v4639
      %v4701 = vpop.f32.mrf.mxu0
      %v4702 = vadd.f32 %v4606, %v4701
      %v4703 = vpop.f32.mrf.mxu0
      %v4704 = vadd.f32 %v4606, %v4703
      %4705 = vmatmul.bf16.gmra.mxu0 %v4641
      %v4706 = vpop.f32.mrf.mxu0
      %v4707 = vadd.f32 %v4606, %v4706
      %v4708 = vpop.f32.mrf.mxu0
      %v4709 = vadd.f32 %v4606, %v4708
      %4710 = vmatmul.bf16.gmra.mxu0 %v4643
      %v4711 = vpop.f32.mrf.mxu0
      %v4712 = vadd.f32 %v4606, %v4711
      %v4713 = vpop.f32.mrf.mxu0
      %v4714 = vadd.f32 %v4606, %v4713
      %4715 = vmatmul.bf16.gmra.mxu0 %v4645
      %v4716 = vpop.f32.mrf.mxu0
      %v4717 = vadd.f32 %v4606, %v4716
      %v4718 = vpop.f32.mrf.mxu0
      %v4719 = vadd.f32 %v4606, %v4718
      %4720 = vmatmul.bf16.gmra.mxu0 %v4647
      %v4721 = vpop.f32.mrf.mxu0
      %v4722 = vadd.f32 %v4606, %v4721
      %v4723 = vpop.f32.mrf.mxu0
      %v4724 = vadd.f32 %v4606, %v4723
      %4725 = vmatmul.bf16.gmra.mxu0 %v4649
      %v4726 = vpop.f32.mrf.mxu0
      %v4727 = vadd.f32 %v4606, %v4726
      %v4728 = vpop.f32.mrf.mxu0
      %v4729 = vadd.f32 %v4606, %v4728
      %4730 = vmatmul.bf16.gmra.mxu0 %v4651
      %v4731 = vpop.f32.mrf.mxu0
      %v4732 = vadd.f32 %v4606, %v4731
      %v4733 = vpop.f32.mrf.mxu0
      %v4734 = vadd.f32 %v4606, %v4733
      %4735 = vmatmul.bf16.gmra.mxu0 %v4653
      %v4736 = vpop.f32.mrf.mxu0
      %v4737 = vadd.f32 %v4606, %v4736
      %v4738 = vpop.f32.mrf.mxu0
      %v4739 = vadd.f32 %v4606, %v4738
      %4740 = vmatmul.bf16.gmra.mxu0 %v4655
      %v4741 = vpop.f32.mrf.mxu0
      %v4742 = vadd.f32 %v4606, %v4741
      %v4743 = vpop.f32.mrf.mxu0
      %v4744 = vadd.f32 %v4606, %v4743
      %4745 = vmatmul.bf16.gmra.mxu0 %v4657
      %v4746 = vpop.f32.mrf.mxu0
      %v4747 = vadd.f32 %v4606, %v4746
      %v4748 = vpop.f32.mrf.mxu0
      %v4749 = vadd.f32 %v4606, %v4748
      %4750 = vmatmul.bf16.gmra.mxu0 %v4659
      %v4751 = vpop.f32.mrf.mxu0
      %v4752 = vadd.f32 %v4606, %v4751
      %v4753 = vpop.f32.mrf.mxu0
      %v4754 = vadd.f32 %v4606, %v4753
      %4755 = vmatmul.bf16.gmra.mxu0 %v4661
      %v4756 = vpop.f32.mrf.mxu0
      %v4757 = vadd.f32 %v4606, %v4756
      %v4758 = vpop.f32.mrf.mxu0
      %v4759 = vadd.f32 %v4606, %v4758
      %4760 = vmatmul.bf16.gmra.mxu0 %v4663
      %v4761 = vpop.f32.mrf.mxu0
      %v4762 = vadd.f32 %v4606, %v4761
      %v4763 = vpop.f32.mrf.mxu0
      %v4764 = vadd.f32 %v4606, %v4763
      %4765 = vmatmul.bf16.gmra.mxu0 %v4665
      %v4766 = vpop.f32.mrf.mxu0
      %v4767 = vadd.f32 %v4606, %v4766
      %v4768 = vpop.f32.mrf.mxu0
      %v4769 = vadd.f32 %v4606, %v4768
      %4770 = vmatmul.bf16.gmra.mxu0 %v4667
      %v4771 = vpop.f32.mrf.mxu0
      %v4772 = vadd.f32 %v4606, %v4771
      %v4773 = vpop.f32.mrf.mxu0
      %v4774 = vadd.f32 %v4606, %v4773
      %4775 = vmatmul.bf16.gmra.mxu0 %v4669
      %v4776 = vpop.f32.mrf.mxu0
      %v4777 = vadd.f32 %v4606, %v4776
      %v4778 = vpop.f32.mrf.mxu0
      %v4779 = vadd.f32 %v4606, %v4778
      %4780 = vmatmul.bf16.gmra.mxu0 %v4671
      %v4781 = vpop.f32.mrf.mxu0
      %v4782 = vadd.f32 %v4606, %v4781
      %v4783 = vpop.f32.mrf.mxu0
      %v4784 = vadd.f32 %v4606, %v4783
      %4785 = vmatmul.bf16.gmra.mxu0 %v4673
      %v4786 = vpop.f32.mrf.mxu0
      %v4787 = vadd.f32 %v4606, %v4786
      %v4788 = vpop.f32.mrf.mxu0
      %v4789 = vadd.f32 %v4606, %v4788
      %4790 = vmatmul.bf16.gmra.mxu0 %v4675
      %v4791 = vpop.f32.mrf.mxu0
      %v4792 = vadd.f32 %v4606, %v4791
      %v4793 = vpop.f32.mrf.mxu0
      %4794 = vmatmul.bf16.gmra.mxu0 %v4677
      %v4795 = vpop.f32.mrf.mxu0
      %v4796 = vpop.f32.mrf.mxu0
      %4797 = vdwg.mxu0
      %v4798 = vmax.f32 %v4692, 0.0
      %v4799 = vmax.f32 %v4694, 0.0
      %v4800 = vmax.f32 %v4697, 0.0
      %v4801 = vmax.f32 %v4699, 0.0
      %v4802 = vmax.f32 %v4702, 0.0
      %v4803 = vmax.f32 %v4704, 0.0
      %v4804 = vmax.f32 %v4707, 0.0
      %v4805 = vmax.f32 %v4709, 0.0
      %v4806 = vmax.f32 %v4712, 0.0
      %v4807 = vmax.f32 %v4714, 0.0
      %v4808 = vmax.f32 %v4717, 0.0
      %v4809 = vmax.f32 %v4719, 0.0
      %v4810 = vmax.f32 %v4722, 0.0
      %v4811 = vmax.f32 %v4724, 0.0
      %v4812 = vmax.f32 %v4727, 0.0
      %v4813 = vmax.f32 %v4729, 0.0
      %v4814 = vmax.f32 %v4732, 0.0
      %v4815 = vmax.f32 %v4734, 0.0
      %v4816 = vmax.f32 %v4737, 0.0
      %v4817 = vmax.f32 %v4739, 0.0
      %v4818 = vmax.f32 %v4742, 0.0
      %v4819 = vmax.f32 %v4744, 0.0
      %v4820 = vmax.f32 %v4747, 0.0
      %v4821 = vmax.f32 %v4749, 0.0
      %v4822 = vmax.f32 %v4752, 0.0
      %v4823 = vmax.f32 %v4754, 0.0
      %v4824 = vmax.f32 %v4757, 0.0
      %v4825 = vmax.f32 %v4759, 0.0
      %v4826 = vmax.f32 %v4762, 0.0
      %v4827 = vmax.f32 %v4764, 0.0
      %v4828 = vmax.f32 %v4767, 0.0
      %v4829 = vmax.f32 %v4769, 0.0
      %v4830 = vmax.f32 %v4772, 0.0
      %v4831 = vmax.f32 %v4774, 0.0
      %v4832 = vmax.f32 %v4777, 0.0
      %v4833 = vmax.f32 %v4779, 0.0
      %v4834 = vmax.f32 %v4782, 0.0
      %v4835 = vmax.f32 %v4784, 0.0
      %v4836 = vmax.f32 %v4787, 0.0
      %v4837 = vmax.f32 %v4789, 0.0
      %v4838 = vmax.f32 %v4792, 0.0
      %s4839 = ssub.s32 1, %s377
      %s4840 = ssub.s32 17, %s377
      %s4841 = smul.u32 %s4839, 32
      %v4842 = vstv %s4841
      %vm4843 = vcmp.ge.s32.totalorder %v1666, %v4842
      %vm4844 = vcmp.ge.s32.totalorder %v1667, %v4842
      %vm4845 = vcmp.ge.s32.totalorder %v1668, %v4842
      %vm4846 = vcmp.ge.s32.totalorder %v1669, %v4842
      %vm4847 = vcmp.ge.s32.totalorder %v1670, %v4842
      %vm4848 = vcmp.ge.s32.totalorder %v1671, %v4842
      %vm4849 = vcmp.ge.s32.totalorder %v1672, %v4842
      %vm4850 = vcmp.ge.s32.totalorder %v1673, %v4842
      %vm4851 = vcmp.ge.s32.totalorder %v1674, %v4842
      %vm4852 = vcmp.ge.s32.totalorder %v1675, %v4842
      %vm4853 = vcmp.ge.s32.totalorder %v1676, %v4842
      %vm4854 = vcmp.ge.s32.totalorder %v1677, %v4842
      %vm4855 = vcmp.ge.s32.totalorder %v1678, %v4842
      %vm4856 = vcmp.ge.s32.totalorder %v1679, %v4842
      %vm4857 = vcmp.ge.s32.totalorder %v1680, %v4842
      %vm4858 = vcmp.ge.s32.totalorder %v1681, %v4842
      %vm4859 = vcmp.ge.s32.totalorder %v1682, %v4842
      %vm4860 = vcmp.ge.s32.totalorder %v1683, %v4842
      %vm4861 = vcmp.ge.s32.totalorder %v1684, %v4842
      %vm4862 = vcmp.ge.s32.totalorder %v1685, %v4842
      %vm4863 = vcmp.ge.s32.totalorder %v1686, %v4842
      %vm4864 = vcmp.ge.s32.totalorder %v1687, %v4842
      %vm4865 = vcmp.ge.s32.totalorder %v1688, %v4842
      %vm4866 = vcmp.ge.s32.totalorder %v1689, %v4842
      %vm4867 = vcmp.ge.s32.totalorder %v1690, %v4842
      %vm4868 = vcmp.ge.s32.totalorder %v1691, %v4842
      %vm4869 = vcmp.ge.s32.totalorder %v1692, %v4842
      %vm4870 = vcmp.ge.s32.totalorder %v1693, %v4842
      %vm4871 = vcmp.ge.s32.totalorder %v1694, %v4842
      %vm4872 = vcmp.ge.s32.totalorder %v1695, %v4842
      %vm4873 = vcmp.ge.s32.totalorder %v1696, %v4842
      %vm4874 = vcmp.ge.s32.totalorder %v1697, %v4842
      %vm4875 = vcmp.ge.s32.totalorder %v1698, %v4842
      %vm4876 = vcmp.ge.s32.totalorder %v1699, %v4842
      %vm4877 = vcmp.ge.s32.totalorder %v1700, %v4842
      %vm4878 = vcmp.ge.s32.totalorder %v1701, %v4842
      %vm4879 = vcmp.ge.s32.totalorder %v1702, %v4842
      %vm4880 = vcmp.ge.s32.totalorder %v1703, %v4842
      %vm4881 = vcmp.ge.s32.totalorder %v1704, %v4842
      %vm4882 = vcmp.ge.s32.totalorder %v1705, %v4842
      %vm4883 = vcmp.ge.s32.totalorder %v1706, %v4842
      %s4884 = smul.u32 %s4840, 32
      %v4885 = vstv %s4884
      %vm4886 = vcmp.lt.s32.totalorder %v1666, %v4885
      %vm4887 = vcmp.lt.s32.totalorder %v1667, %v4885
      %vm4888 = vcmp.lt.s32.totalorder %v1668, %v4885
      %vm4889 = vcmp.lt.s32.totalorder %v1669, %v4885
      %vm4890 = vcmp.lt.s32.totalorder %v1670, %v4885
      %vm4891 = vcmp.lt.s32.totalorder %v1671, %v4885
      %vm4892 = vcmp.lt.s32.totalorder %v1672, %v4885
      %vm4893 = vcmp.lt.s32.totalorder %v1673, %v4885
      %vm4894 = vcmp.lt.s32.totalorder %v1674, %v4885
      %vm4895 = vcmp.lt.s32.totalorder %v1675, %v4885
      %vm4896 = vcmp.lt.s32.totalorder %v1676, %v4885
      %vm4897 = vcmp.lt.s32.totalorder %v1677, %v4885
      %vm4898 = vcmp.lt.s32.totalorder %v1678, %v4885
      %vm4899 = vcmp.lt.s32.totalorder %v1679, %v4885
      %vm4900 = vcmp.lt.s32.totalorder %v1680, %v4885
      %vm4901 = vcmp.lt.s32.totalorder %v1681, %v4885
      %vm4902 = vcmp.lt.s32.totalorder %v1682, %v4885
      %vm4903 = vcmp.lt.s32.totalorder %v1683, %v4885
      %vm4904 = vcmp.lt.s32.totalorder %v1684, %v4885
      %vm4905 = vcmp.lt.s32.totalorder %v1685, %v4885
      %vm4906 = vcmp.lt.s32.totalorder %v1686, %v4885
      %vm4907 = vcmp.lt.s32.totalorder %v1687, %v4885
      %vm4908 = vcmp.lt.s32.totalorder %v1688, %v4885
      %vm4909 = vcmp.lt.s32.totalorder %v1689, %v4885
      %vm4910 = vcmp.lt.s32.totalorder %v1690, %v4885
      %vm4911 = vcmp.lt.s32.totalorder %v1691, %v4885
      %vm4912 = vcmp.lt.s32.totalorder %v1692, %v4885
      %vm4913 = vcmp.lt.s32.totalorder %v1693, %v4885
      %vm4914 = vcmp.lt.s32.totalorder %v1694, %v4885
      %vm4915 = vcmp.lt.s32.totalorder %v1695, %v4885
      %vm4916 = vcmp.lt.s32.totalorder %v1696, %v4885
      %vm4917 = vcmp.lt.s32.totalorder %v1697, %v4885
      %vm4918 = vcmp.lt.s32.totalorder %v1698, %v4885
      %vm4919 = vcmp.lt.s32.totalorder %v1699, %v4885
      %vm4920 = vcmp.lt.s32.totalorder %v1700, %v4885
      %vm4921 = vcmp.lt.s32.totalorder %v1701, %v4885
      %vm4922 = vcmp.lt.s32.totalorder %v1702, %v4885
      %vm4923 = vcmp.lt.s32.totalorder %v1703, %v4885
      %vm4924 = vcmp.lt.s32.totalorder %v1704, %v4885
      %vm4925 = vcmp.lt.s32.totalorder %v1705, %v4885
      %vm4926 = vcmp.lt.s32.totalorder %v1706, %v4885
      %vm4927 = vmand %vm4843, %vm4886
      %vm4928 = vmand %vm4844, %vm4887
      %vm4929 = vmand %vm4845, %vm4888
      %vm4930 = vmand %vm4846, %vm4889
      %vm4931 = vmand %vm4847, %vm4890
      %vm4932 = vmand %vm4848, %vm4891
      %vm4933 = vmand %vm4849, %vm4892
      %vm4934 = vmand %vm4850, %vm4893
      %vm4935 = vmand %vm4851, %vm4894
      %vm4936 = vmand %vm4852, %vm4895
      %vm4937 = vmand %vm4853, %vm4896
      %vm4938 = vmand %vm4854, %vm4897
      %vm4939 = vmand %vm4855, %vm4898
      %vm4940 = vmand %vm4856, %vm4899
      %vm4941 = vmand %vm4857, %vm4900
      %vm4942 = vmand %vm4858, %vm4901
      %vm4943 = vmand %vm4859, %vm4902
      %vm4944 = vmand %vm4860, %vm4903
      %vm4945 = vmand %vm4861, %vm4904
      %vm4946 = vmand %vm4862, %vm4905
      %vm4947 = vmand %vm4863, %vm4906
      %vm4948 = vmand %vm4864, %vm4907
      %vm4949 = vmand %vm4865, %vm4908
      %vm4950 = vmand %vm4866, %vm4909
      %vm4951 = vmand %vm4867, %vm4910
      %vm4952 = vmand %vm4868, %vm4911
      %vm4953 = vmand %vm4869, %vm4912
      %vm4954 = vmand %vm4870, %vm4913
      %vm4955 = vmand %vm4871, %vm4914
      %vm4956 = vmand %vm4872, %vm4915
      %vm4957 = vmand %vm4873, %vm4916
      %vm4958 = vmand %vm4874, %vm4917
      %vm4959 = vmand %vm4875, %vm4918
      %vm4960 = vmand %vm4876, %vm4919
      %vm4961 = vmand %vm4877, %vm4920
      %vm4962 = vmand %vm4878, %vm4921
      %vm4963 = vmand %vm4879, %vm4922
      %vm4964 = vmand %vm4880, %vm4923
      %vm4965 = vmand %vm4881, %vm4924
      %vm4966 = vmand %vm4882, %vm4925
      %vm4967 = vmand %vm4883, %vm4926
      %v4968 = vsel %vm4927, %v4798, 0.0
      %v4969 = vsel %vm4928, %v4799, 0.0
      %v4970 = vsel %vm4929, %v4800, 0.0
      %v4971 = vsel %vm4930, %v4801, 0.0
      %v4972 = vsel %vm4931, %v4802, 0.0
      %v4973 = vsel %vm4932, %v4803, 0.0
      %v4974 = vsel %vm4933, %v4804, 0.0
      %v4975 = vsel %vm4934, %v4805, 0.0
      %v4976 = vsel %vm4935, %v4806, 0.0
      %v4977 = vsel %vm4936, %v4807, 0.0
      %v4978 = vsel %vm4937, %v4808, 0.0
      %v4979 = vsel %vm4938, %v4809, 0.0
      %v4980 = vsel %vm4939, %v4810, 0.0
      %v4981 = vsel %vm4940, %v4811, 0.0
      %v4982 = vsel %vm4941, %v4812, 0.0
      %v4983 = vsel %vm4942, %v4813, 0.0
      %v4984 = vsel %vm4943, %v4814, 0.0
      %v4985 = vsel %vm4944, %v4815, 0.0
      %v4986 = vsel %vm4945, %v4816, 0.0
      %v4987 = vsel %vm4946, %v4817, 0.0
      %v4988 = vsel %vm4947, %v4818, 0.0
      %v4989 = vsel %vm4948, %v4819, 0.0
      %v4990 = vsel %vm4949, %v4820, 0.0
      %v4991 = vsel %vm4950, %v4821, 0.0
      %v4992 = vsel %vm4951, %v4822, 0.0
      %v4993 = vsel %vm4952, %v4823, 0.0
      %v4994 = vsel %vm4953, %v4824, 0.0
      %v4995 = vsel %vm4954, %v4825, 0.0
      %v4996 = vsel %vm4955, %v4826, 0.0
      %v4997 = vsel %vm4956, %v4827, 0.0
      %v4998 = vsel %vm4957, %v4828, 0.0
      %v4999 = vsel %vm4958, %v4829, 0.0
      %v5000 = vsel %vm4959, %v4830, 0.0
      %v5001 = vsel %vm4960, %v4831, 0.0
      %v5002 = vsel %vm4961, %v4832, 0.0
      %v5003 = vsel %vm4962, %v4833, 0.0
      %v5004 = vsel %vm4963, %v4834, 0.0
      %v5005 = vsel %vm4964, %v4835, 0.0
      %v5006 = vsel %vm4965, %v4836, 0.0
      %v5007 = vsel %vm4966, %v4837, 0.0
      %v5008 = vsel %vm4967, %v4838, 0.0
      %vm5009 = vcmp.ge.s32.totalorder %v1666, 9
      %vm5010 = vcmp.ge.s32.totalorder %v1667, 9
      %vm5011 = vcmp.ge.s32.totalorder %v1668, 9
      %vm5012 = vcmp.ge.s32.totalorder %v1669, 9
      %vm5013 = vcmp.lt.s32.totalorder %v1666, 25
      %vm5014 = vcmp.lt.s32.totalorder %v1667, 25
      %vm5015 = vcmp.lt.s32.totalorder %v1668, 25
      %vm5016 = vcmp.lt.s32.totalorder %v1669, 25
      %vm5017 = vmand %vm5009, %vm5013
      %vm5018 = vmand %vm5010, %vm5014
      %vm5019 = vmand %vm5011, %vm5015
      %vm5020 = vmand %vm5012, %vm5016
      %v5021 = vsel %vm5017, %v4968, 0.0
      %v5022 = vsel %vm5018, %v4969, 0.0
      %v5023 = vsel %vm5019, %v4970, 0.0
      %v5024 = vsel %vm5020, %v4971, 0.0
      %v5025 = vsel %vm5017, %v4972, 0.0
      %v5026 = vsel %vm5018, %v4973, 0.0
      %v5027 = vsel %vm5019, %v4974, 0.0
      %v5028 = vsel %vm5020, %v4975, 0.0
      %v5029 = vsel %vm5017, %v4976, 0.0
      %v5030 = vsel %vm5018, %v4977, 0.0
      %v5031 = vsel %vm5019, %v4978, 0.0
      %v5032 = vsel %vm5020, %v4979, 0.0
      %v5033 = vsel %vm5017, %v4980, 0.0
      %v5034 = vsel %vm5018, %v4981, 0.0
      %v5035 = vsel %vm5019, %v4982, 0.0
      %v5036 = vsel %vm5020, %v4983, 0.0
      %v5037 = vsel %vm5017, %v4984, 0.0
      %v5038 = vsel %vm5018, %v4985, 0.0
      %v5039 = vsel %vm5019, %v4986, 0.0
      %v5040 = vsel %vm5020, %v4987, 0.0
      %v5041 = vsel %vm5017, %v4988, 0.0
      %v5042 = vsel %vm5018, %v4989, 0.0
      %v5043 = vsel %vm5019, %v4990, 0.0
      %v5044 = vsel %vm5020, %v4991, 0.0
      %v5045 = vsel %vm5017, %v4992, 0.0
      %v5046 = vsel %vm5018, %v4993, 0.0
      %v5047 = vsel %vm5019, %v4994, 0.0
      %v5048 = vsel %vm5020, %v4995, 0.0
      %v5049 = vsel %vm5017, %v4996, 0.0
      %v5050 = vsel %vm5018, %v4997, 0.0
      %v5051 = vsel %vm5019, %v4998, 0.0
      %v5052 = vsel %vm5020, %v4999, 0.0
      %v5053 = vsel %vm5017, %v5000, 0.0
      %v5054 = vsel %vm5018, %v5001, 0.0
      %v5055 = vsel %vm5019, %v5002, 0.0
      %v5056 = vsel %vm5020, %v5003, 0.0
      %v5057 = vsel %vm5017, %v5004, 0.0
      %v5058 = vsel %vm5018, %v5005, 0.0
      %v5059 = vsel %vm5019, %v5006, 0.0
      %v5060 = vsel %vm5020, %v5007, 0.0
      %v5061 = vsel %vm5017, %v5008, 0.0
      %v5062 = vpack.c.bf16 %v5021, %v5021
      %v5063 = vpack.c.bf16 %v5022, %v5022
      %v5064 = vpack.c.bf16 %v5023, %v5023
      %v5065 = vpack.c.bf16 %v5024, %v5024
      %v5066 = vpack.c.bf16 %v5025, %v5025
      %v5067 = vpack.c.bf16 %v5026, %v5026
      %v5068 = vpack.c.bf16 %v5027, %v5027
      %v5069 = vpack.c.bf16 %v5028, %v5028
      %v5070 = vpack.c.bf16 %v5029, %v5029
      %v5071 = vpack.c.bf16 %v5030, %v5030
      %v5072 = vpack.c.bf16 %v5031, %v5031
      %v5073 = vpack.c.bf16 %v5032, %v5032
      %v5074 = vpack.c.bf16 %v5033, %v5033
      %v5075 = vpack.c.bf16 %v5034, %v5034
      %v5076 = vpack.c.bf16 %v5035, %v5035
      %v5077 = vpack.c.bf16 %v5036, %v5036
      %v5078 = vpack.c.bf16 %v5037, %v5037
      %v5079 = vpack.c.bf16 %v5038, %v5038
      %v5080 = vpack.c.bf16 %v5039, %v5039
      %v5081 = vpack.c.bf16 %v5040, %v5040
      %v5082 = vpack.c.bf16 %v5041, %v5041
      %v5083 = vpack.c.bf16 %v5042, %v5042
      %v5084 = vpack.c.bf16 %v5043, %v5043
      %v5085 = vpack.c.bf16 %v5044, %v5044
      %v5086 = vpack.c.bf16 %v5045, %v5045
      %v5087 = vpack.c.bf16 %v5046, %v5046
      %v5088 = vpack.c.bf16 %v5047, %v5047
      %v5089 = vpack.c.bf16 %v5048, %v5048
      %v5090 = vpack.c.bf16 %v5049, %v5049
      %v5091 = vpack.c.bf16 %v5050, %v5050
      %v5092 = vpack.c.bf16 %v5051, %v5051
      %v5093 = vpack.c.bf16 %v5052, %v5052
      %v5094 = vpack.c.bf16 %v5053, %v5053
      %v5095 = vpack.c.bf16 %v5054, %v5054
      %v5096 = vpack.c.bf16 %v5055, %v5055
      %v5097 = vpack.c.bf16 %v5056, %v5056
      %v5098 = vpack.c.bf16 %v5057, %v5057
      %v5099 = vpack.c.bf16 %v5058, %v5058
      %v5100 = vpack.c.bf16 %v5059, %v5059
      %v5101 = vpack.c.bf16 %v5060, %v5060
      %v5102 = vpack.c.bf16 %v5061, %v5061
      %v5103 = vld [vmem:[%s6] sm:$0xf]
      %v5104 = vld [vmem:[%s6 + $0x4] sm:$0xf]
      %v5105 = vld [vmem:[%s6 + $0x8] sm:$0xf]
      %v5106 = vld [vmem:[%s6 + $0xc] sm:$0xf]
      %v5107 = vld [vmem:[%s6 + $0x10] sm:$0x3]
      %v5140 = vunpack.c.l.b16 %v5062
      %v5141 = vunpack.c.l.b16 %v5063
      %v5142 = vunpack.c.l.b16 %v5064
      %v5143 = vunpack.c.l.b16 %v5065
      %v5144 = vunpack.c.l.b16 %v5066
      %v5145 = vunpack.c.l.b16 %v5067
      %v5146 = vunpack.c.l.b16 %v5068
      %v5147 = vunpack.c.l.b16 %v5069
      %v5148 = vunpack.c.l.b16 %v5070
      %v5149 = vunpack.c.l.b16 %v5071
      %v5150 = vunpack.c.l.b16 %v5072
      %v5151 = vunpack.c.l.b16 %v5073
      %v5152 = vunpack.c.l.b16 %v5074
      %v5153 = vunpack.c.l.b16 %v5075
      %v5154 = vunpack.c.l.b16 %v5076
      %v5155 = vunpack.c.l.b16 %v5077
      %v5156 = vunpack.c.l.b16 %v5078
      %v5157 = vunpack.c.l.b16 %v5079
      %v5158 = vunpack.c.l.b16 %v5080
      %v5159 = vunpack.c.l.b16 %v5081
      %v5160 = vunpack.c.l.b16 %v5082
      %v5161 = vunpack.c.l.b16 %v5083
      %v5162 = vunpack.c.l.b16 %v5084
      %v5163 = vunpack.c.l.b16 %v5085
      %v5164 = vunpack.c.l.b16 %v5086
      %v5165 = vunpack.c.l.b16 %v5087
      %v5166 = vunpack.c.l.b16 %v5088
      %v5167 = vunpack.c.l.b16 %v5089
      %v5168 = vunpack.c.l.b16 %v5090
      %v5169 = vunpack.c.l.b16 %v5091
      %v5170 = vunpack.c.l.b16 %v5092
      %v5171 = vunpack.c.l.b16 %v5093
      %v5172 = vpack.c.b16 %v5141, %v5140
      %v5173 = vpack.c.b16 %v5143, %v5142
      %v5174 = vpack.c.b16 %v5145, %v5144
      %v5175 = vpack.c.b16 %v5147, %v5146
      %v5176 = vpack.c.b16 %v5149, %v5148
      %v5177 = vpack.c.b16 %v5151, %v5150
      %v5178 = vpack.c.b16 %v5153, %v5152
      %v5179 = vpack.c.b16 %v5155, %v5154
      %v5180 = vpack.c.b16 %v5157, %v5156
      %v5181 = vpack.c.b16 %v5159, %v5158
      %v5182 = vpack.c.b16 %v5161, %v5160
      %v5183 = vpack.c.b16 %v5163, %v5162
      %v5184 = vpack.c.b16 %v5165, %v5164
      %v5185 = vpack.c.b16 %v5167, %v5166
      %v5186 = vpack.c.b16 %v5169, %v5168
      %v5187 = vpack.c.b16 %v5171, %v5170
      %v5189 = vunpack.c.l.b16 %v5094
      %v5190 = vpack.c.b16 %v5189, %v5189
      %v5192 = vshrl.u32 %v5172, 16
      %v5194 = vshll.u32 %v5172, 16
      %v5196 = vrot.slane %v5194, 1
      %v5197 = vor.u32 %v5192, %v5196
      %v5199 = vshll.u32 %v5173, 16
      %v5201 = vrot.slane %v5199, 1
      %v5202 = vsel %vm504, %v5197, %v5201
      %v5203 = vshrl.u32 %v5173, 16
      %v5205 = vor.u32 %v5203, %v5201
      %v5207 = vshll.u32 %v5174, 16
      %v5209 = vrot.slane %v5207, 1
      %v5210 = vsel %vm504, %v5205, %v5209
      %v5211 = vshrl.u32 %v5174, 16
      %v5213 = vor.u32 %v5211, %v5209
      %v5215 = vshll.u32 %v5175, 16
      %v5217 = vrot.slane %v5215, 1
      %v5218 = vsel %vm504, %v5213, %v5217
      %v5219 = vshrl.u32 %v5175, 16
      %v5221 = vor.u32 %v5219, %v5217
      %v5223 = vshll.u32 %v5176, 16
      %v5225 = vrot.slane %v5223, 1
      %v5226 = vsel %vm504, %v5221, %v5225
      %v5227 = vshrl.u32 %v5176, 16
      %v5229 = vor.u32 %v5227, %v5225
      %v5231 = vshll.u32 %v5177, 16
      %v5233 = vrot.slane %v5231, 1
      %v5234 = vsel %vm504, %v5229, %v5233
      %v5235 = vshrl.u32 %v5177, 16
      %v5237 = vor.u32 %v5235, %v5233
      %v5239 = vshll.u32 %v5178, 16
      %v5241 = vrot.slane %v5239, 1
      %v5242 = vsel %vm504, %v5237, %v5241
      %v5243 = vshrl.u32 %v5178, 16
      %v5245 = vor.u32 %v5243, %v5241
      %v5247 = vshll.u32 %v5179, 16
      %v5249 = vrot.slane %v5247, 1
      %v5250 = vsel %vm504, %v5245, %v5249
      %v5251 = vshrl.u32 %v5179, 16
      %v5253 = vor.u32 %v5251, %v5249
      %v5255 = vshll.u32 %v5180, 16
      %v5257 = vrot.slane %v5255, 1
      %v5258 = vsel %vm504, %v5253, %v5257
      %v5259 = vshrl.u32 %v5180, 16
      %v5261 = vor.u32 %v5259, %v5257
      %v5263 = vshll.u32 %v5181, 16
      %v5265 = vrot.slane %v5263, 1
      %v5266 = vsel %vm504, %v5261, %v5265
      %v5267 = vshrl.u32 %v5181, 16
      %v5269 = vor.u32 %v5267, %v5265
      %v5271 = vshll.u32 %v5182, 16
      %v5273 = vrot.slane %v5271, 1
      %v5274 = vsel %vm504, %v5269, %v5273
      %v5275 = vshrl.u32 %v5182, 16
      %v5277 = vor.u32 %v5275, %v5273
      %v5279 = vshll.u32 %v5183, 16
      %v5281 = vrot.slane %v5279, 1
      %v5282 = vsel %vm504, %v5277, %v5281
      %v5283 = vshrl.u32 %v5183, 16
      %v5285 = vor.u32 %v5283, %v5281
      %v5287 = vshll.u32 %v5184, 16
      %v5289 = vrot.slane %v5287, 1
      %v5290 = vsel %vm504, %v5285, %v5289
      %v5291 = vshrl.u32 %v5184, 16
      %v5293 = vor.u32 %v5291, %v5289
      %v5295 = vshll.u32 %v5185, 16
      %v5297 = vrot.slane %v5295, 1
      %v5298 = vsel %vm504, %v5293, %v5297
      %v5299 = vshrl.u32 %v5185, 16
      %v5301 = vor.u32 %v5299, %v5297
      %v5303 = vshll.u32 %v5186, 16
      %v5305 = vrot.slane %v5303, 1
      %v5306 = vsel %vm504, %v5301, %v5305
      %v5307 = vshrl.u32 %v5186, 16
      %v5309 = vor.u32 %v5307, %v5305
      %v5311 = vshll.u32 %v5187, 16
      %v5313 = vrot.slane %v5311, 1
      %v5314 = vsel %vm504, %v5309, %v5313
      %v5315 = vshrl.u32 %v5187, 16
      %v5317 = vor.u32 %v5315, %v5313
      %v5319 = vshll.u32 %v5190, 16
      %v5321 = vrot.slane %v5319, 1
      %v5322 = vsel %vm504, %v5317, %v5321
      %5323 = vrot.lane.b32.xlu0 %v5202, 4
      %v5324 = vpop.permute.xlu0 %5323
      %5325 = vrot.lane.b32.xlu0 %v5210, 4
      %v5326 = vpop.permute.xlu0 %5325
      %5327 = vrot.lane.b32.xlu0 %v5218, 4
      %v5328 = vpop.permute.xlu0 %5327
      %5329 = vrot.lane.b32.xlu0 %v5226, 4
      %v5330 = vpop.permute.xlu0 %5329
      %5331 = vrot.lane.b32.xlu0 %v5234, 4
      %v5332 = vpop.permute.xlu0 %5331
      %5333 = vrot.lane.b32.xlu0 %v5242, 4
      %v5334 = vpop.permute.xlu0 %5333
      %5335 = vrot.lane.b32.xlu0 %v5250, 4
      %v5336 = vpop.permute.xlu0 %5335
      %5337 = vrot.lane.b32.xlu0 %v5258, 4
      %v5338 = vpop.permute.xlu0 %5337
      %5339 = vrot.lane.b32.xlu0 %v5266, 4
      %v5340 = vpop.permute.xlu0 %5339
      %5341 = vrot.lane.b32.xlu0 %v5274, 4
      %v5342 = vpop.permute.xlu0 %5341
      %5343 = vrot.lane.b32.xlu0 %v5282, 4
      %v5344 = vpop.permute.xlu0 %5343
      %5345 = vrot.lane.b32.xlu0 %v5290, 4
      %v5346 = vpop.permute.xlu0 %5345
      %5347 = vrot.lane.b32.xlu0 %v5298, 4
      %v5348 = vpop.permute.xlu0 %5347
      %5349 = vrot.lane.b32.xlu0 %v5306, 4
      %v5350 = vpop.permute.xlu0 %5349
      %5351 = vrot.lane.b32.xlu0 %v5314, 4
      %v5352 = vpop.permute.xlu0 %5351
      %5353 = vrot.lane.b32.xlu0 %v5322, 4
      %v5354 = vpop.permute.xlu0 %5353
      %v5355 = vrot.slane %v5172, 1
      %v5356 = vrot.slane %v5173, 1
      %v5357 = vsel %vm687, %v5355, %v5356
      %v5358 = vrot.slane %v5174, 1
      %v5359 = vsel %vm687, %v5356, %v5358
      %v5360 = vrot.slane %v5175, 1
      %v5361 = vsel %vm687, %v5358, %v5360
      %v5362 = vrot.slane %v5176, 1
      %v5363 = vsel %vm687, %v5360, %v5362
      %v5364 = vrot.slane %v5177, 1
      %v5365 = vsel %vm687, %v5362, %v5364
      %v5366 = vrot.slane %v5178, 1
      %v5367 = vsel %vm687, %v5364, %v5366
      %v5368 = vrot.slane %v5179, 1
      %v5369 = vsel %vm687, %v5366, %v5368
      %v5370 = vrot.slane %v5180, 1
      %v5371 = vsel %vm687, %v5368, %v5370
      %v5372 = vrot.slane %v5181, 1
      %v5373 = vsel %vm687, %v5370, %v5372
      %v5374 = vrot.slane %v5182, 1
      %v5375 = vsel %vm687, %v5372, %v5374
      %v5376 = vrot.slane %v5183, 1
      %v5377 = vsel %vm687, %v5374, %v5376
      %v5378 = vrot.slane %v5184, 1
      %v5379 = vsel %vm687, %v5376, %v5378
      %v5380 = vrot.slane %v5185, 1
      %v5381 = vsel %vm687, %v5378, %v5380
      %v5382 = vrot.slane %v5186, 1
      %v5383 = vsel %vm687, %v5380, %v5382
      %v5384 = vrot.slane %v5187, 1
      %v5385 = vsel %vm687, %v5382, %v5384
      %v5386 = vrot.slane %v5190, 1
      %v5387 = vsel %vm687, %v5384, %v5386
      %5388 = vrot.lane.b32.xlu0 %v5357, 8
      %v5389 = vpop.permute.xlu0 %5388
      %5390 = vrot.lane.b32.xlu0 %v5359, 8
      %v5391 = vpop.permute.xlu0 %5390
      %5392 = vrot.lane.b32.xlu0 %v5361, 8
      %v5393 = vpop.permute.xlu0 %5392
      %5394 = vrot.lane.b32.xlu0 %v5363, 8
      %v5395 = vpop.permute.xlu0 %5394
      %5396 = vrot.lane.b32.xlu0 %v5365, 8
      %v5397 = vpop.permute.xlu0 %5396
      %5398 = vrot.lane.b32.xlu0 %v5367, 8
      %v5399 = vpop.permute.xlu0 %5398
      %5400 = vrot.lane.b32.xlu0 %v5369, 8
      %v5401 = vpop.permute.xlu0 %5400
      %5402 = vrot.lane.b32.xlu0 %v5371, 8
      %v5403 = vpop.permute.xlu0 %5402
      %5404 = vrot.lane.b32.xlu0 %v5373, 8
      %v5405 = vpop.permute.xlu0 %5404
      %5406 = vrot.lane.b32.xlu0 %v5375, 8
      %v5407 = vpop.permute.xlu0 %5406
      %5408 = vrot.lane.b32.xlu0 %v5377, 8
      %v5409 = vpop.permute.xlu0 %5408
      %5410 = vrot.lane.b32.xlu0 %v5379, 8
      %v5411 = vpop.permute.xlu0 %5410
      %5412 = vrot.lane.b32.xlu0 %v5381, 8
      %v5413 = vpop.permute.xlu0 %5412
      %5414 = vrot.lane.b32.xlu0 %v5383, 8
      %v5415 = vpop.permute.xlu0 %5414
      %5416 = vrot.lane.b32.xlu0 %v5385, 8
      %v5417 = vpop.permute.xlu0 %5416
      %5418 = vrot.lane.b32.xlu0 %v5387, 8
      %v5419 = vpop.permute.xlu0 %5418
      %v5423 = vunpack.c.l.b16 %v5095
      %v5424 = vunpack.c.l.b16 %v5096
      %v5425 = vunpack.c.l.b16 %v5097
      %v5426 = vpack.c.b16 %v5423, %v5189
      %v5427 = vpack.c.b16 %v5425, %v5424
      %5428 = vrot.lane.b32.xlu0 %v5174, 12
      %v5429 = vpop.permute.xlu0 %5428
      %5430 = vrot.lane.b32.xlu0 %v5175, 12
      %v5431 = vpop.permute.xlu0 %5430
      %5432 = vrot.lane.b32.xlu0 %v5176, 12
      %v5433 = vpop.permute.xlu0 %5432
      %5434 = vrot.lane.b32.xlu0 %v5177, 12
      %v5435 = vpop.permute.xlu0 %5434
      %5436 = vrot.lane.b32.xlu0 %v5178, 12
      %v5437 = vpop.permute.xlu0 %5436
      %5438 = vrot.lane.b32.xlu0 %v5179, 12
      %v5439 = vpop.permute.xlu0 %5438
      %5440 = vrot.lane.b32.xlu0 %v5180, 12
      %v5441 = vpop.permute.xlu0 %5440
      %5442 = vrot.lane.b32.xlu0 %v5181, 12
      %v5443 = vpop.permute.xlu0 %5442
      %5444 = vrot.lane.b32.xlu0 %v5182, 12
      %v5445 = vpop.permute.xlu0 %5444
      %5446 = vrot.lane.b32.xlu0 %v5183, 12
      %v5447 = vpop.permute.xlu0 %5446
      %5448 = vrot.lane.b32.xlu0 %v5184, 12
      %v5449 = vpop.permute.xlu0 %5448
      %5450 = vrot.lane.b32.xlu0 %v5185, 12
      %v5451 = vpop.permute.xlu0 %5450
      %5452 = vrot.lane.b32.xlu0 %v5186, 12
      %v5453 = vpop.permute.xlu0 %5452
      %5454 = vrot.lane.b32.xlu0 %v5187, 12
      %v5455 = vpop.permute.xlu0 %5454
      %5456 = vrot.lane.b32.xlu0 %v5426, 12
      %v5457 = vpop.permute.xlu0 %5456
      %5458 = vrot.lane.b32.xlu0 %v5427, 12
      %v5459 = vpop.permute.xlu0 %5458
      %v5461 = vunpack.c.l.b16 %v5098
      %v5462 = vpack.c.b16 %v5461, %v5461
      %v5464 = vshll.u32 %v5426, 16
      %v5466 = vrot.slane %v5464, 1
      %v5467 = vsel %vm504, %v5317, %v5466
      %v5468 = vshrl.u32 %v5426, 16
      %v5470 = vor.u32 %v5468, %v5466
      %v5472 = vshll.u32 %v5427, 16
      %v5474 = vrot.slane %v5472, 1
      %v5475 = vsel %vm504, %v5470, %v5474
      %v5476 = vshrl.u32 %v5427, 16
      %v5478 = vor.u32 %v5476, %v5474
      %v5480 = vshll.u32 %v5462, 16
      %v5482 = vrot.slane %v5480, 1
      %v5483 = vsel %vm504, %v5478, %v5482
      %5484 = vrot.lane.b32.xlu0 %v5218, 16
      %v5485 = vpop.permute.xlu0 %5484
      %5486 = vrot.lane.b32.xlu0 %v5226, 16
      %v5487 = vpop.permute.xlu0 %5486
      %5488 = vrot.lane.b32.xlu0 %v5234, 16
      %v5489 = vpop.permute.xlu0 %5488
      %5490 = vrot.lane.b32.xlu0 %v5242, 16
      %v5491 = vpop.permute.xlu0 %5490
      %5492 = vrot.lane.b32.xlu0 %v5250, 16
      %v5493 = vpop.permute.xlu0 %5492
      %5494 = vrot.lane.b32.xlu0 %v5258, 16
      %v5495 = vpop.permute.xlu0 %5494
      %5496 = vrot.lane.b32.xlu0 %v5266, 16
      %v5497 = vpop.permute.xlu0 %5496
      %5498 = vrot.lane.b32.xlu0 %v5274, 16
      %v5499 = vpop.permute.xlu0 %5498
      %5500 = vrot.lane.b32.xlu0 %v5282, 16
      %v5501 = vpop.permute.xlu0 %5500
      %5502 = vrot.lane.b32.xlu0 %v5290, 16
      %v5503 = vpop.permute.xlu0 %5502
      %5504 = vrot.lane.b32.xlu0 %v5298, 16
      %v5505 = vpop.permute.xlu0 %5504
      %5506 = vrot.lane.b32.xlu0 %v5306, 16
      %v5507 = vpop.permute.xlu0 %5506
      %5508 = vrot.lane.b32.xlu0 %v5314, 16
      %v5509 = vpop.permute.xlu0 %5508
      %5510 = vrot.lane.b32.xlu0 %v5467, 16
      %v5511 = vpop.permute.xlu0 %5510
      %5512 = vrot.lane.b32.xlu0 %v5475, 16
      %v5513 = vpop.permute.xlu0 %5512
      %5514 = vrot.lane.b32.xlu0 %v5483, 16
      %v5515 = vpop.permute.xlu0 %5514
      %v5516 = vrot.slane %v5426, 1
      %v5517 = vsel %vm687, %v5384, %v5516
      %v5518 = vrot.slane %v5427, 1
      %v5519 = vsel %vm687, %v5516, %v5518
      %v5520 = vrot.slane %v5462, 1
      %v5521 = vsel %vm687, %v5518, %v5520
      %5522 = vrot.lane.b32.xlu0 %v5361, 20
      %v5523 = vpop.permute.xlu0 %5522
      %5524 = vrot.lane.b32.xlu0 %v5363, 20
      %v5525 = vpop.permute.xlu0 %5524
      %5526 = vrot.lane.b32.xlu0 %v5365, 20
      %v5527 = vpop.permute.xlu0 %5526
      %5528 = vrot.lane.b32.xlu0 %v5367, 20
      %v5529 = vpop.permute.xlu0 %5528
      %5530 = vrot.lane.b32.xlu0 %v5369, 20
      %v5531 = vpop.permute.xlu0 %5530
      %5532 = vrot.lane.b32.xlu0 %v5371, 20
      %v5533 = vpop.permute.xlu0 %5532
      %5534 = vrot.lane.b32.xlu0 %v5373, 20
      %v5535 = vpop.permute.xlu0 %5534
      %5536 = vrot.lane.b32.xlu0 %v5375, 20
      %v5537 = vpop.permute.xlu0 %5536
      %5538 = vrot.lane.b32.xlu0 %v5377, 20
      %v5539 = vpop.permute.xlu0 %5538
      %5540 = vrot.lane.b32.xlu0 %v5379, 20
      %v5541 = vpop.permute.xlu0 %5540
      %5542 = vrot.lane.b32.xlu0 %v5381, 20
      %v5543 = vpop.permute.xlu0 %5542
      %5544 = vrot.lane.b32.xlu0 %v5383, 20
      %v5545 = vpop.permute.xlu0 %5544
      %5546 = vrot.lane.b32.xlu0 %v5385, 20
      %v5547 = vpop.permute.xlu0 %5546
      %5548 = vrot.lane.b32.xlu0 %v5517, 20
      %v5549 = vpop.permute.xlu0 %5548
      %5550 = vrot.lane.b32.xlu0 %v5519, 20
      %v5551 = vpop.permute.xlu0 %5550
      %5552 = vrot.lane.b32.xlu0 %v5521, 20
      %v5553 = vpop.permute.xlu0 %5552
      %v5557 = vunpack.c.l.b16 %v5099
      %v5558 = vunpack.c.l.b16 %v5100
      %v5559 = vunpack.c.l.b16 %v5101
      %v5560 = vpack.c.b16 %v5557, %v5461
      %v5561 = vpack.c.b16 %v5559, %v5558
      %5562 = vrot.lane.b32.xlu0 %v5176, 24
      %v5563 = vpop.permute.xlu0 %5562
      %5564 = vrot.lane.b32.xlu0 %v5177, 24
      %v5565 = vpop.permute.xlu0 %5564
      %5566 = vrot.lane.b32.xlu0 %v5178, 24
      %v5567 = vpop.permute.xlu0 %5566
      %5568 = vrot.lane.b32.xlu0 %v5179, 24
      %v5569 = vpop.permute.xlu0 %5568
      %5570 = vrot.lane.b32.xlu0 %v5180, 24
      %v5571 = vpop.permute.xlu0 %5570
      %5572 = vrot.lane.b32.xlu0 %v5181, 24
      %v5573 = vpop.permute.xlu0 %5572
      %5574 = vrot.lane.b32.xlu0 %v5182, 24
      %v5575 = vpop.permute.xlu0 %5574
      %5576 = vrot.lane.b32.xlu0 %v5183, 24
      %v5577 = vpop.permute.xlu0 %5576
      %5578 = vrot.lane.b32.xlu0 %v5184, 24
      %v5579 = vpop.permute.xlu0 %5578
      %5580 = vrot.lane.b32.xlu0 %v5185, 24
      %v5581 = vpop.permute.xlu0 %5580
      %5582 = vrot.lane.b32.xlu0 %v5186, 24
      %v5583 = vpop.permute.xlu0 %5582
      %5584 = vrot.lane.b32.xlu0 %v5187, 24
      %v5585 = vpop.permute.xlu0 %5584
      %5586 = vrot.lane.b32.xlu0 %v5426, 24
      %v5587 = vpop.permute.xlu0 %5586
      %5588 = vrot.lane.b32.xlu0 %v5427, 24
      %v5589 = vpop.permute.xlu0 %5588
      %5590 = vrot.lane.b32.xlu0 %v5560, 24
      %v5591 = vpop.permute.xlu0 %5590
      %5592 = vrot.lane.b32.xlu0 %v5561, 24
      %v5593 = vpop.permute.xlu0 %5592
      %v5595 = vunpack.c.l.b16 %v5102
      %v5596 = vpack.c.b16 %v5595, %v5595
      %v5598 = vshll.u32 %v5560, 16
      %v5600 = vrot.slane %v5598, 1
      %v5601 = vsel %vm504, %v5478, %v5600
      %v5602 = vshrl.u32 %v5560, 16
      %v5604 = vor.u32 %v5602, %v5600
      %v5606 = vshll.u32 %v5561, 16
      %v5608 = vrot.slane %v5606, 1
      %v5609 = vsel %vm504, %v5604, %v5608
      %v5610 = vshrl.u32 %v5561, 16
      %v5612 = vor.u32 %v5610, %v5608
      %v5614 = vshll.u32 %v5596, 16
      %v5616 = vrot.slane %v5614, 1
      %v5617 = vsel %vm504, %v5612, %v5616
      %5618 = vrot.lane.b32.xlu0 %v5234, 28
      %v5619 = vpop.permute.xlu0 %5618
      %5620 = vrot.lane.b32.xlu0 %v5242, 28
      %v5621 = vpop.permute.xlu0 %5620
      %5622 = vrot.lane.b32.xlu0 %v5250, 28
      %v5623 = vpop.permute.xlu0 %5622
      %5624 = vrot.lane.b32.xlu0 %v5258, 28
      %v5625 = vpop.permute.xlu0 %5624
      %5626 = vrot.lane.b32.xlu0 %v5266, 28
      %v5627 = vpop.permute.xlu0 %5626
      %5628 = vrot.lane.b32.xlu0 %v5274, 28
      %v5629 = vpop.permute.xlu0 %5628
      %5630 = vrot.lane.b32.xlu0 %v5282, 28
      %v5631 = vpop.permute.xlu0 %5630
      %5632 = vrot.lane.b32.xlu0 %v5290, 28
      %v5633 = vpop.permute.xlu0 %5632
      %5634 = vrot.lane.b32.xlu0 %v5298, 28
      %v5635 = vpop.permute.xlu0 %5634
      %5636 = vrot.lane.b32.xlu0 %v5306, 28
      %v5637 = vpop.permute.xlu0 %5636
      %5638 = vrot.lane.b32.xlu0 %v5314, 28
      %v5639 = vpop.permute.xlu0 %5638
      %5640 = vrot.lane.b32.xlu0 %v5467, 28
      %v5641 = vpop.permute.xlu0 %5640
      %5642 = vrot.lane.b32.xlu0 %v5475, 28
      %v5643 = vpop.permute.xlu0 %5642
      %5644 = vrot.lane.b32.xlu0 %v5601, 28
      %v5645 = vpop.permute.xlu0 %5644
      %5646 = vrot.lane.b32.xlu0 %v5609, 28
      %v5647 = vpop.permute.xlu0 %5646
      %5648 = vrot.lane.b32.xlu0 %v5617, 28
      %v5649 = vpop.permute.xlu0 %5648
      %v5650 = vrot.slane %v5560, 1
      %v5651 = vsel %vm687, %v5518, %v5650
      %v5652 = vrot.slane %v5561, 1
      %v5653 = vsel %vm687, %v5650, %v5652
      %v5654 = vrot.slane %v5596, 1
      %v5655 = vsel %vm687, %v5652, %v5654
      %5656 = vrot.lane.b32.xlu0 %v5365, 32
      %v5657 = vpop.permute.xlu0 %5656
      %5658 = vrot.lane.b32.xlu0 %v5367, 32
      %v5659 = vpop.permute.xlu0 %5658
      %5660 = vrot.lane.b32.xlu0 %v5369, 32
      %v5661 = vpop.permute.xlu0 %5660
      %5662 = vrot.lane.b32.xlu0 %v5371, 32
      %v5663 = vpop.permute.xlu0 %5662
      %5664 = vrot.lane.b32.xlu0 %v5373, 32
      %v5665 = vpop.permute.xlu0 %5664
      %5666 = vrot.lane.b32.xlu0 %v5375, 32
      %v5667 = vpop.permute.xlu0 %5666
      %5668 = vrot.lane.b32.xlu0 %v5377, 32
      %v5669 = vpop.permute.xlu0 %5668
      %5670 = vrot.lane.b32.xlu0 %v5379, 32
      %v5671 = vpop.permute.xlu0 %5670
      %5672 = vrot.lane.b32.xlu0 %v5381, 32
      %v5673 = vpop.permute.xlu0 %5672
      %5674 = vrot.lane.b32.xlu0 %v5383, 32
      %v5675 = vpop.permute.xlu0 %5674
      %5676 = vrot.lane.b32.xlu0 %v5385, 32
      %v5677 = vpop.permute.xlu0 %5676
      %5678 = vrot.lane.b32.xlu0 %v5517, 32
      %v5679 = vpop.permute.xlu0 %5678
      %5680 = vrot.lane.b32.xlu0 %v5519, 32
      %v5681 = vpop.permute.xlu0 %5680
      %5682 = vrot.lane.b32.xlu0 %v5651, 32
      %v5683 = vpop.permute.xlu0 %5682
      %5684 = vrot.lane.b32.xlu0 %v5653, 32
      %v5685 = vpop.permute.xlu0 %5684
      %5686 = vrot.lane.b32.xlu0 %v5655, 32
      %v5687 = vpop.permute.xlu0 %5686
      %v5689 = vsel %vm3564, %v5172, %v5324
      %v5691 = vsel %vm3564, %v5173, %v5326
      %v5693 = vsel %vm3564, %v5174, %v5328
      %v5695 = vsel %vm3564, %v5175, %v5330
      %v5697 = vsel %vm3564, %v5176, %v5332
      %v5699 = vsel %vm3564, %v5177, %v5334
      %v5701 = vsel %vm3564, %v5178, %v5336
      %v5703 = vsel %vm3564, %v5179, %v5338
      %v5705 = vsel %vm3564, %v5180, %v5340
      %v5707 = vsel %vm3564, %v5181, %v5342
      %v5709 = vsel %vm3564, %v5182, %v5344
      %v5711 = vsel %vm3564, %v5183, %v5346
      %v5713 = vsel %vm3564, %v5184, %v5348
      %v5715 = vsel %vm3564, %v5185, %v5350
      %v5717 = vsel %vm3564, %v5186, %v5352
      %v5719 = vsel %vm3564, %v5187, %v5354
      %v5721 = vsel %vm1045, %v5689, %v5389
      %v5723 = vsel %vm1045, %v5691, %v5391
      %v5725 = vsel %vm1045, %v5693, %v5393
      %v5727 = vsel %vm1045, %v5695, %v5395
      %v5729 = vsel %vm1045, %v5697, %v5397
      %v5731 = vsel %vm1045, %v5699, %v5399
      %v5733 = vsel %vm1045, %v5701, %v5401
      %v5735 = vsel %vm1045, %v5703, %v5403
      %v5737 = vsel %vm1045, %v5705, %v5405
      %v5739 = vsel %vm1045, %v5707, %v5407
      %v5741 = vsel %vm1045, %v5709, %v5409
      %v5743 = vsel %vm1045, %v5711, %v5411
      %v5745 = vsel %vm1045, %v5713, %v5413
      %v5747 = vsel %vm1045, %v5715, %v5415
      %v5749 = vsel %vm1045, %v5717, %v5417
      %v5751 = vsel %vm1045, %v5719, %v5419
      %v5753 = vsel %vm3653, %v5721, %v5429
      %v5755 = vsel %vm3653, %v5723, %v5431
      %v5757 = vsel %vm3653, %v5725, %v5433
      %v5759 = vsel %vm3653, %v5727, %v5435
      %v5761 = vsel %vm3653, %v5729, %v5437
      %v5763 = vsel %vm3653, %v5731, %v5439
      %v5765 = vsel %vm3653, %v5733, %v5441
      %v5767 = vsel %vm3653, %v5735, %v5443
      %v5769 = vsel %vm3653, %v5737, %v5445
      %v5771 = vsel %vm3653, %v5739, %v5447
      %v5773 = vsel %vm3653, %v5741, %v5449
      %v5775 = vsel %vm3653, %v5743, %v5451
      %v5777 = vsel %vm3653, %v5745, %v5453
      %v5779 = vsel %vm3653, %v5747, %v5455
      %v5781 = vsel %vm3653, %v5749, %v5457
      %v5783 = vsel %vm3653, %v5751, %v5459
      %v5785 = vsel %vm1090, %v5753, %v5485
      %v5787 = vsel %vm1090, %v5755, %v5487
      %v5789 = vsel %vm1090, %v5757, %v5489
      %v5791 = vsel %vm1090, %v5759, %v5491
      %v5793 = vsel %vm1090, %v5761, %v5493
      %v5795 = vsel %vm1090, %v5763, %v5495
      %v5797 = vsel %vm1090, %v5765, %v5497
      %v5799 = vsel %vm1090, %v5767, %v5499
      %v5801 = vsel %vm1090, %v5769, %v5501
      %v5803 = vsel %vm1090, %v5771, %v5503
      %v5805 = vsel %vm1090, %v5773, %v5505
      %v5807 = vsel %vm1090, %v5775, %v5507
      %v5809 = vsel %vm1090, %v5777, %v5509
      %v5811 = vsel %vm1090, %v5779, %v5511
      %v5813 = vsel %vm1090, %v5781, %v5513
      %v5815 = vsel %vm1090, %v5783, %v5515
      %v5817 = vsel %vm3742, %v5785, %v5523
      %v5819 = vsel %vm3742, %v5787, %v5525
      %v5821 = vsel %vm3742, %v5789, %v5527
      %v5823 = vsel %vm3742, %v5791, %v5529
      %v5825 = vsel %vm3742, %v5793, %v5531
      %v5827 = vsel %vm3742, %v5795, %v5533
      %v5829 = vsel %vm3742, %v5797, %v5535
      %v5831 = vsel %vm3742, %v5799, %v5537
      %v5833 = vsel %vm3742, %v5801, %v5539
      %v5835 = vsel %vm3742, %v5803, %v5541
      %v5837 = vsel %vm3742, %v5805, %v5543
      %v5839 = vsel %vm3742, %v5807, %v5545
      %v5841 = vsel %vm3742, %v5809, %v5547
      %v5843 = vsel %vm3742, %v5811, %v5549
      %v5845 = vsel %vm3742, %v5813, %v5551
      %v5847 = vsel %vm3742, %v5815, %v5553
      %v5849 = vsel %vm1135, %v5817, %v5563
      %v5851 = vsel %vm1135, %v5819, %v5565
      %v5853 = vsel %vm1135, %v5821, %v5567
      %v5855 = vsel %vm1135, %v5823, %v5569
      %v5857 = vsel %vm1135, %v5825, %v5571
      %v5859 = vsel %vm1135, %v5827, %v5573
      %v5861 = vsel %vm1135, %v5829, %v5575
      %v5863 = vsel %vm1135, %v5831, %v5577
      %v5865 = vsel %vm1135, %v5833, %v5579
      %v5867 = vsel %vm1135, %v5835, %v5581
      %v5869 = vsel %vm1135, %v5837, %v5583
      %v5871 = vsel %vm1135, %v5839, %v5585
      %v5873 = vsel %vm1135, %v5841, %v5587
      %v5875 = vsel %vm1135, %v5843, %v5589
      %v5877 = vsel %vm1135, %v5845, %v5591
      %v5879 = vsel %vm1135, %v5847, %v5593
      %v5881 = vsel %vm3831, %v5849, %v5619
      %v5883 = vsel %vm3831, %v5851, %v5621
      %v5885 = vsel %vm3831, %v5853, %v5623
      %v5887 = vsel %vm3831, %v5855, %v5625
      %v5889 = vsel %vm3831, %v5857, %v5627
      %v5891 = vsel %vm3831, %v5859, %v5629
      %v5893 = vsel %vm3831, %v5861, %v5631
      %v5895 = vsel %vm3831, %v5863, %v5633
      %v5897 = vsel %vm3831, %v5865, %v5635
      %v5899 = vsel %vm3831, %v5867, %v5637
      %v5901 = vsel %vm3831, %v5869, %v5639
      %v5903 = vsel %vm3831, %v5871, %v5641
      %v5905 = vsel %vm3831, %v5873, %v5643
      %v5907 = vsel %vm3831, %v5875, %v5645
      %v5909 = vsel %vm3831, %v5877, %v5647
      %v5911 = vsel %vm3831, %v5879, %v5649
      %v5913 = vsel %vm1178, %v5881, %v5657
      %v5915 = vsel %vm1178, %v5883, %v5659
      %v5917 = vsel %vm1178, %v5885, %v5661
      %v5919 = vsel %vm1178, %v5887, %v5663
      %v5921 = vsel %vm1178, %v5889, %v5665
      %v5923 = vsel %vm1178, %v5891, %v5667
      %v5925 = vsel %vm1178, %v5893, %v5669
      %v5927 = vsel %vm1178, %v5895, %v5671
      %v5929 = vsel %vm1178, %v5897, %v5673
      %v5931 = vsel %vm1178, %v5899, %v5675
      %v5933 = vsel %vm1178, %v5901, %v5677
      %v5935 = vsel %vm1178, %v5903, %v5679
      %v5937 = vsel %vm1178, %v5905, %v5681
      %v5939 = vsel %vm1178, %v5907, %v5683
      %v5941 = vsel %vm1178, %v5909, %v5685
      %v5943 = vsel %vm1178, %v5911, %v5687
      %v5944 = vld [vmem:[%s7] sm:$0x1]
      %v5946 = vperm.slane %v5944, 0
      %v5953 = vunpack.c.l.b16 %v5103
      %v5954 = vunpack.c.l.b16 %v5104
      %v5955 = vunpack.c.l.b16 %v5105
      %v5956 = vunpack.c.l.b16 %v5106
      %v5957 = vunpack.c.l.b16 %v5107
      %v5958 = vpack.c.b16 %v5954, %v5953
      %v5959 = vpack.c.b16 %v5956, %v5955
      %v5960 = vpack.c.b16 %v5957, %v5957
      %v5963 = vsel %vm3920, %v5913, 0
      %v5965 = vsel %vm3920, %v5915, 0
      %v5967 = vsel %vm3920, %v5917, 0
      %v5969 = vsel %vm3920, %v5919, 0
      %v5971 = vsel %vm3920, %v5921, 0
      %v5973 = vsel %vm3920, %v5923, 0
      %v5975 = vsel %vm3920, %v5925, 0
      %v5977 = vsel %vm3920, %v5927, 0
      %v5979 = vsel %vm3920, %v5929, 0
      %v5981 = vsel %vm3920, %v5931, 0
      %v5983 = vsel %vm3920, %v5933, 0
      %v5985 = vsel %vm3920, %v5935, 0
      %v5987 = vsel %vm3920, %v5937, 0
      %v5989 = vsel %vm3920, %v5939, 0
      %v5991 = vsel %vm3920, %v5941, 0
      %v5993 = vsel %vm3920, %v5943, 0
      %vm5995 = vcmask 1041408
      %v5997 = vsel %vm5995, %v5960, 0
      %5999 = vmatpush.bf16.msra.mxu0 0
      %6000 = vmatpush.bf16.msra.mxu0 0
      %6001 = vmatpush.bf16.msra.mxu0 0
      %6002 = vmatpush.bf16.msra.mxu0 0
      %6003 = vmatpush.bf16.msra.mxu0 0
      %6004 = vmatpush.bf16.msra.mxu0 %v5997
      %6005 = vmatpush.bf16.msra.mxu0 %v5959
      %6006 = vmatpush.bf16.msra.mxu0 %v5958
      %6007 = vmatmul.bf16.gmra.mxu0 %v5963
      %v6008 = vpop.f32.mrf.mxu0
      %v6009 = vpop.f32.mrf.mxu0
      %v6010 = vadd.f32 %v5946, %v6009
      %6011 = vmatmul.bf16.gmra.mxu0 %v5965
      %v6012 = vpop.f32.mrf.mxu0
      %v6013 = vadd.f32 %v5946, %v6012
      %v6014 = vpop.f32.mrf.mxu0
      %6015 = vmatmul.bf16.gmra.mxu0 %v5967
      %v6016 = vpop.f32.mrf.mxu0
      %v6017 = vpop.f32.mrf.mxu0
      %v6018 = vadd.f32 %v5946, %v6017
      %6019 = vmatmul.bf16.gmra.mxu0 %v5969
      %v6020 = vpop.f32.mrf.mxu0
      %v6021 = vadd.f32 %v5946, %v6020
      %v6022 = vpop.f32.mrf.mxu0
      %6023 = vmatmul.bf16.gmra.mxu0 %v5971
      %v6024 = vpop.f32.mrf.mxu0
      %v6025 = vpop.f32.mrf.mxu0
      %v6026 = vadd.f32 %v5946, %v6025
      %6027 = vmatmul.bf16.gmra.mxu0 %v5973
      %v6028 = vpop.f32.mrf.mxu0
      %v6029 = vadd.f32 %v5946, %v6028
      %v6030 = vpop.f32.mrf.mxu0
      %6031 = vmatmul.bf16.gmra.mxu0 %v5975
      %v6032 = vpop.f32.mrf.mxu0
      %v6033 = vpop.f32.mrf.mxu0
      %v6034 = vadd.f32 %v5946, %v6033
      %6035 = vmatmul.bf16.gmra.mxu0 %v5977
      %v6036 = vpop.f32.mrf.mxu0
      %v6037 = vadd.f32 %v5946, %v6036
      %v6038 = vpop.f32.mrf.mxu0
      %6039 = vmatmul.bf16.gmra.mxu0 %v5979
      %v6040 = vpop.f32.mrf.mxu0
      %v6041 = vpop.f32.mrf.mxu0
      %v6042 = vadd.f32 %v5946, %v6041
      %6043 = vmatmul.bf16.gmra.mxu0 %v5981
      %v6044 = vpop.f32.mrf.mxu0
      %v6045 = vadd.f32 %v5946, %v6044
      %v6046 = vpop.f32.mrf.mxu0
      %6047 = vmatmul.bf16.gmra.mxu0 %v5983
      %v6048 = vpop.f32.mrf.mxu0
      %v6049 = vpop.f32.mrf.mxu0
      %v6050 = vadd.f32 %v5946, %v6049
      %6051 = vmatmul.bf16.gmra.mxu0 %v5985
      %v6052 = vpop.f32.mrf.mxu0
      %v6053 = vadd.f32 %v5946, %v6052
      %v6054 = vpop.f32.mrf.mxu0
      %6055 = vmatmul.bf16.gmra.mxu0 %v5987
      %v6056 = vpop.f32.mrf.mxu0
      %v6057 = vpop.f32.mrf.mxu0
      %v6058 = vadd.f32 %v5946, %v6057
      %6059 = vmatmul.bf16.gmra.mxu0 %v5989
      %v6060 = vpop.f32.mrf.mxu0
      %v6061 = vadd.f32 %v5946, %v6060
      %v6062 = vpop.f32.mrf.mxu0
      %6063 = vmatmul.bf16.gmra.mxu0 %v5991
      %v6064 = vpop.f32.mrf.mxu0
      %v6065 = vpop.f32.mrf.mxu0
      %v6066 = vadd.f32 %v5946, %v6065
      %6067 = vmatmul.bf16.gmra.mxu0 %v5993
      %v6068 = vpop.f32.mrf.mxu0
      %v6069 = vadd.f32 %v5946, %v6068
      %v6070 = vpop.f32.mrf.mxu0
      %6071 = vdwg.mxu0
      %v6072 = vmax.f32 %v6010, 0.0
      %v6073 = vmax.f32 %v6013, 0.0
      %v6074 = vmax.f32 %v6018, 0.0
      %v6075 = vmax.f32 %v6021, 0.0
      %v6076 = vmax.f32 %v6026, 0.0
      %v6077 = vmax.f32 %v6029, 0.0
      %v6078 = vmax.f32 %v6034, 0.0
      %v6079 = vmax.f32 %v6037, 0.0
      %v6080 = vmax.f32 %v6042, 0.0
      %v6081 = vmax.f32 %v6045, 0.0
      %v6082 = vmax.f32 %v6050, 0.0
      %v6083 = vmax.f32 %v6053, 0.0
      %v6084 = vmax.f32 %v6058, 0.0
      %v6085 = vmax.f32 %v6061, 0.0
      %v6086 = vmax.f32 %v6066, 0.0
      %v6087 = vmax.f32 %v6069, 0.0
      %6088 = vst.msk [vmem:[%s375] sm:$0xff] %vm3564, %v6072
      %6089 = vst.msk [vmem:[%s375 + $0x8] sm:$0xff] %vm3564, %v6073
      %6090 = vst.msk [vmem:[%s375 + $0x10] sm:$0xff] %vm3564, %v6074
      %6091 = vst.msk [vmem:[%s375 + $0x18] sm:$0xff] %vm3564, %v6075
      %6092 = vst.msk [vmem:[%s375 + $0x20] sm:$0xff] %vm3564, %v6076
      %6093 = vst.msk [vmem:[%s375 + $0x28] sm:$0xff] %vm3564, %v6077
      %6094 = vst.msk [vmem:[%s375 + $0x30] sm:$0xff] %vm3564, %v6078
      %6095 = vst.msk [vmem:[%s375 + $0x38] sm:$0xff] %vm3564, %v6079
      %6096 = vst.msk [vmem:[%s375 + $0x40] sm:$0xff] %vm3564, %v6080
      %6097 = vst.msk [vmem:[%s375 + $0x48] sm:$0xff] %vm3564, %v6081
      %6098 = vst.msk [vmem:[%s375 + $0x50] sm:$0xff] %vm3564, %v6082
      %6099 = vst.msk [vmem:[%s375 + $0x58] sm:$0xff] %vm3564, %v6083
      %6100 = vst.msk [vmem:[%s375 + $0x60] sm:$0xff] %vm3564, %v6084
      %6101 = vst.msk [vmem:[%s375 + $0x68] sm:$0xff] %vm3564, %v6085
      %6102 = vst.msk [vmem:[%s375 + $0x70] sm:$0xff] %vm3564, %v6086
      %6103 = vst.msk [vmem:[%s375 + $0x78] sm:$0xff] %vm3564, %v6087
      %p6104 = scmp.lt.s32.totalorder %s23, 1
      %s6105 = scalar_select %p6104, %s23, 1
      %p6106 = scmp.lt.s32.totalorder %s24, 1
      %s6107 = scalar_select %p6106, %s24, 1
      %s6108 = smul.addr %s6107, 16
      %s6109 = smul.addr %s6105, 32
      %s6110 = sadd.s32 %s6108, %s6109
      %s6111 = smul.addr %s6110, 8
      %s6112 = scalar_lea.vmem %s8, %s6111
      // Predicated region
      $region53: #{tpu_custom_call.1} parent=51 // pred_check
        %p6113 = pneg %p233
      $region54: #{tpu_custom_call.1} parent=51 // pred_check_branch
        %6115 = sbr.rel (%p6113) target = $region56
      $region55: #{tpu_custom_call.1} parent=51 // pred_region
        _
      $region56: #{tpu_custom_call.1} parent=51 // pred_fallthru
        _
    $region52: #{tpu_custom_call.1} parent=5 // pred_fallthru
      _
    %p6116 = scmp.le.s32.totalorder 2, %s14
    // Predicated region
    $region57: #{tpu_custom_call.1} parent=5 // pred_check
      %p6117 = pneg %p6116
    $region58: #{tpu_custom_call.1} parent=5 // pred_check_branch
      %6119 = sbr.rel (%p6117) target = $region60
    $region59: #{tpu_custom_call.1} parent=5 // pred_region
      %s6120 = ssub.s32 %s14, 2
      // Predicated region
      $region61: #{tpu_custom_call.1} parent=59 // pred_check
        %p6121 = pneg %p239
      $region62: #{tpu_custom_call.1} parent=59 // pred_check_branch
        %6123 = sbr.rel (%p6121) target = $region64
      $region63: #{tpu_custom_call.1} parent=59 // pred_region
        %p6124 = scmp.lt.s32.totalorder %s25, 1
        %s6125 = scalar_select %p6124, %s25, 1
        %p6126 = scmp.lt.s32.totalorder %s26, 1
        %s6127 = scalar_select %p6126, %s26, 1
        %s6128 = smul.addr %s6127, 16
        %s6129 = smul.addr %s6125, 32
        %s6130 = sadd.s32 %s6128, %s6129
        %s6131 = smul.addr %s6130, 8
        %s6132 = scalar_lea.vmem %s8, %s6131
      $region64: #{tpu_custom_call.1} parent=59 // pred_fallthru
        _
    $region60: #{tpu_custom_call.1} parent=5 // pred_fallthru
      _
  $region6: #{tpu_custom_call.1} parent=0 // loop_footer
    %s18 = sadd.s32 1, %s14
  $region7: #{tpu_custom_call.1} parent=0 // loop_footer_branch
    %13 = sbr.rel target = $region3
  $region8: #{tpu_custom_call.1} parent=0 // loop_exit
    _

</llo_original>
